<compile_context>
chip_gen: v7x
topology: tpu7x:2x2x1
jax: 0.10.0
libtpu: 0.0.40
codegen_flags: <defaults>
</compile_context>

<pallas_src>
import functools

import jax
import jax.numpy as jnp
from jax.experimental import pallas as pl
from jax.experimental.pallas import tpu as pltpu

FEAT_C = 512        # style feature channels (matches torch.rand(B, 512, 1, 1))
DEC_ROWS = 8        # decoder output rows padded 3 -> 8 (sublane-aligned MXU M)
ADAIN_EPS = 1e-5    # standard AdaIN variance epsilon
_LANE = 128


# ---------------------------------------------------------------------------
# Fused Pallas kernel
# ---------------------------------------------------------------------------
def _fused_kernel(img_ref, smean_ref, sstd_ref,
                  enc_w_ref, enc_b_ref, dec_w_ref, dec_b_ref,
                  out_ref, sum_ref, sumsq_ref,
                  *, alpha, eps, inv_n, inv_nm1, n):
    """grid = (B, 2, T). Pass 0: accumulate feature stats. Pass 1: apply + decode."""
    p = pl.program_id(1)   # pass index (0 = stats, 1 = apply)
    t = pl.program_id(2)   # HW tile index

    # Reset per-batch statistics at the start of pass 0.
    @pl.when((p == 0) & (t == 0))
    def _():
        sum_ref[...] = jnp.zeros_like(sum_ref)
        sumsq_ref[...] = jnp.zeros_like(sumsq_ref)

    x = img_ref[0]                                   # (3, THW), HW on lanes

    # Encoder 1x1 conv (Cin=3) as 3 broadcast-FMAs on the VPU + ReLU.
    feat = (enc_w_ref[0] * x[0:1, :]
            + enc_w_ref[1] * x[1:2, :]
            + enc_w_ref[2] * x[2:3, :]
            + enc_b_ref[...])                        # (512, THW)
    feat = jnp.maximum(feat, 0.0)

    @pl.when(p == 0)
    def _():
        sum_ref[...] += jnp.sum(feat, axis=1, keepdims=True)        # (512, 1)
        sumsq_ref[...] += jnp.sum(feat * feat, axis=1, keepdims=True)
        # Deterministic placeholder; fully overwritten by pass 1.
        out_ref[...] = jnp.zeros_like(out_ref)

    @pl.when(p == 1)
    def _():
        c_mean = sum_ref[...] * inv_n                                # (512, 1)
        # Single-pass unbiased variance: (sumsq - n*mean^2) / (n - 1).
        c_var = (sumsq_ref[...] - n * c_mean * c_mean) * inv_nm1
        inv_std = jax.lax.rsqrt(jnp.maximum(c_var, 0.0) + eps)
        scale = sstd_ref[0] * inv_std                                # (512, 1)
        shift = smean_ref[0] - c_mean * scale                        # (512, 1)
        # Fold the alpha blend into one per-channel affine:
        #   (1-a)*f + a*(f*scale + shift) = f*(1 + a*(scale-1)) + a*shift
        comb_scale = 1.0 + alpha * (scale - 1.0)
        comb_shift = alpha * shift
        blended = feat * comb_scale + comb_shift                     # (512, THW)
        # Decoder 1x1 conv on the MXU: (8, 512) @ (512, THW).
        y = jnp.dot(dec_w_ref[...], blended,
                    preferred_element_type=jnp.float32) + dec_b_ref[...]
        out_ref[0] = y[0:3, :].astype(out_ref.dtype)


def _pick_hw_tile(hw, cap):
    """Largest multiple of 128 that divides hw and is <= cap (else full hw)."""
    if hw <= cap:
        return hw
    t = (cap // _LANE) * _LANE
    while t >= _LANE:
        if hw % t == 0:
            return t
        t -= _LANE
    # TODO(synk): pad HW host-side when no lane-aligned divisor exists.
    return hw


def fused_style_transfer(img3d, style_mean, style_std,
                         enc_w_cols, enc_b, dec_w, dec_b,
                         *, alpha, hw_tile_cap=2048):
    """img3d: (B, 3, HW) f32. style stats: (B, 512). Returns (B, 3, HW) f32."""
    B, C, HW = img3d.shape
    assert C == 3
    thw = _pick_hw_tile(HW, hw_tile_cap)
    n_tiles = HW // thw

    smean = style_mean.reshape(B, FEAT_C, 1).astype(jnp.float32)
    sstd = style_std.reshape(B, FEAT_C, 1).astype(jnp.float32)

    n = float(HW)
    kernel = functools.partial(
        _fused_kernel, alpha=float(alpha), eps=ADAIN_EPS,
        inv_n=1.0 / n, inv_nm1=1.0 / max(n - 1.0, 1.0), n=n)

    cost = pl.CostEstimate(
        flops=int(B * HW * FEAT_C * 36),
        transcendentals=int(B * n_tiles * FEAT_C),
        bytes_accessed=int(4 * (3 * B * 3 * HW + 2 * B * FEAT_C
                                + (4 + DEC_ROWS) * FEAT_C + DEC_ROWS)))

    return pl.pallas_call(
        kernel,
        out_shape=jax.ShapeDtypeStruct((B, 3, HW), jnp.float32),
        grid=(B, 2, n_tiles),
        in_specs=[
            pl.BlockSpec((1, 3, thw), lambda b, p, t: (b, 0, t)),      # image tile
            pl.BlockSpec((1, FEAT_C, 1), lambda b, p, t: (b, 0, 0)),   # style mean
            pl.BlockSpec((1, FEAT_C, 1), lambda b, p, t: (b, 0, 0)),   # style std
            pl.BlockSpec((3, FEAT_C, 1), lambda b, p, t: (0, 0, 0)),   # enc W cols
            pl.BlockSpec((FEAT_C, 1), lambda b, p, t: (0, 0)),         # enc bias
            pl.BlockSpec((DEC_ROWS, FEAT_C), lambda b, p, t: (0, 0)),  # dec W (padded)
            pl.BlockSpec((DEC_ROWS, 1), lambda b, p, t: (0, 0)),       # dec bias
        ],
        out_specs=pl.BlockSpec((1, 3, thw), lambda b, p, t: (b, 0, t)),
        scratch_shapes=[pltpu.VMEM((FEAT_C, 1), jnp.float32),   # per-channel sum
                        pltpu.VMEM((FEAT_C, 1), jnp.float32)],  # per-channel sumsq
        compiler_params=pltpu.CompilerParams(
            dimension_semantics=("parallel", "arbitrary", "arbitrary"),
            vmem_limit_bytes=32 * 1024 * 1024),
        cost_estimate=cost,
    )(img3d, smean, sstd, enc_w_cols, enc_b, dec_w, dec_b)


# ---------------------------------------------------------------------------
# Module wrapper
# ---------------------------------------------------------------------------
class ColorDistortion:
    """JAX/Pallas port of ColorDistortion (use_adain=True, preserve_mode=False)."""

    def __init__(self, img_size, s=1, use_adain=True, alpha=0.5,
                 adain_preserve_mode=False, adain_size=128, param_seed=42,
                 hw_tile_cap=2048):
        assert use_adain, "only the AdaIN (StyleTransfer) branch is implemented"
        self.img_size = img_size
        self.alpha = alpha
        self.adain_preserve_mode = adain_preserve_mode
        self.adain_size = adain_size
        self.hw_tile_cap = hw_tile_cap

        # Deterministic synthetic encoder / decoder weights (see TODO above).
        kw = jax.random.split(jax.random.PRNGKey(param_seed), 4)
        enc_w = jax.random.normal(kw[0], (FEAT_C, 3), jnp.float32) / jnp.sqrt(3.0)
        # (3, 512, 1): one (512,1) column per input channel -> clean sublane loads.
        self.enc_w_cols = jnp.transpose(enc_w).reshape(3, FEAT_C, 1)
        self.enc_b = (jax.random.normal(kw[1], (FEAT_C,), jnp.float32)
                      * 0.01).reshape(FEAT_C, 1)
        dec_w = (jax.random.normal(kw[2], (3, FEAT_C), jnp.float32)
                 / jnp.sqrt(float(FEAT_C)))
        dec_b = jax.random.normal(kw[3], (3,), jnp.float32) * 0.01
        # Pad decoder output rows 3 -> 8 so the MXU M dim is sublane aligned.
        self.dec_w = jnp.zeros((DEC_ROWS, FEAT_C), jnp.float32).at[:3].set(dec_w)
        self.dec_b = jnp.zeros((DEC_ROWS, 1), jnp.float32).at[:3, 0].set(dec_b)

    def __call__(self, img, rng_key):
        """img: (B, 3, H, W) float32 NCHW. rng_key: PRNG for random style stats."""
        B, C_in, H, W = img.shape
        assert C_in == 3

        # Random per-image style statistics: torch.rand(B, 512, 1, 1) equivalent.
        k_mean, k_std = jax.random.split(rng_key)
        style_mean = jax.random.uniform(k_mean, (B, FEAT_C), jnp.float32)
        style_std = jax.random.uniform(k_std, (B, FEAT_C), jnp.float32)

        # NCHW -> (B, 3, H*W): pure reshape (no transpose); HW lands on lanes.
        x = img.reshape(B, 3, H * W).astype(jnp.float32)
        out = fused_style_transfer(
            x, style_mean, style_std,
            self.enc_w_cols, self.enc_b, self.dec_w, self.dec_b,
            alpha=self.alpha, hw_tile_cap=self.hw_tile_cap)
        return out.reshape(B, 3, H, W)


# ---------------------------------------------------------------------------
if __name__ == "__main__":
    key = jax.random.PRNGKey(0)
    k_img, k_style = jax.random.split(key)

    B, H, W = 2, 16, 16
    img = jax.random.uniform(k_img, (B, 3, H, W), jnp.float32)

    module = ColorDistortion(img_size=H, use_adain=True, alpha=0.5)
    out = module(img, k_style)
    out = jax.block_until_ready(out)

    assert out.shape == (B, 3, H, W), out.shape
    assert out.dtype == jnp.float32
    assert bool(jnp.all(jnp.isfinite(out)))

    print("KERNEL_OK")
</pallas_src>

<mosaic_0001>
module attributes {stable_mosaic.version = 11 : i64} {
  func.func @_fused_kernel(%arg0: i32, %arg1: i32, %arg2: i32, %arg3: memref<1x3x256xf32, #tpu.memory_space<vmem>>, %arg4: memref<1x512x1xf32, #tpu.memory_space<vmem>>, %arg5: memref<1x512x1xf32, #tpu.memory_space<vmem>>, %arg6: memref<3x512x1xf32, #tpu.memory_space<vmem>>, %arg7: memref<512x1xf32, #tpu.memory_space<vmem>>, %arg8: memref<8x512xf32, #tpu.memory_space<vmem>>, %arg9: memref<8x1xf32, #tpu.memory_space<vmem>>, %arg10: memref<1x3x256xf32, #tpu.memory_space<vmem>>, %arg11: memref<512x1xf32, #tpu.memory_space<vmem>>, %arg12: memref<512x1xf32, #tpu.memory_space<vmem>>) attributes {dimension_semantics = [#tpu.dimension_semantics<parallel>, #tpu.dimension_semantics<arbitrary>, #tpu.dimension_semantics<arbitrary>], iteration_bounds = array<i64: 2, 2, 1>, scalar_prefetch = 0 : i64, scratch_operands = 2 : i64, tpu.core_type = #tpu.core_type<tc>, window_params = [{transform_indices = @transform_0, window_bounds = array<i64: 1, 3, 256>}, {transform_indices = @transform_1, window_bounds = array<i64: 1, 512, 1>}, {transform_indices = @transform_2, window_bounds = array<i64: 1, 512, 1>}, {pipeline_mode = #tpu.pipeline_mode<synchronous>, transform_indices = @transform_3, window_bounds = array<i64: 3, 512, 1>}, {pipeline_mode = #tpu.pipeline_mode<synchronous>, transform_indices = @transform_4, window_bounds = array<i64: 512, 1>}, {pipeline_mode = #tpu.pipeline_mode<synchronous>, transform_indices = @transform_5, window_bounds = array<i64: 8, 512>}, {pipeline_mode = #tpu.pipeline_mode<synchronous>, transform_indices = @transform_6, window_bounds = array<i64: 8, 1>}, {transform_indices = @transform_7, window_bounds = array<i64: 1, 3, 256>}]} {
    %c0_i32 = arith.constant 0 : i32
    %0 = arith.cmpi eq, %arg1, %c0_i32 : i32
    %c0_i32_0 = arith.constant 0 : i32
    %1 = arith.cmpi eq, %arg2, %c0_i32_0 : i32
    %2 = arith.andi %0, %1 : i1
    %3 = arith.extui %2 : i1 to i32
    %c0_i32_1 = arith.constant 0 : i32
    %4 = arith.cmpi ne, %3, %c0_i32_1 : i32
    scf.if %4 {
      %cst_16 = arith.constant 0.000000e+00 : f32
      %38 = vector.broadcast %cst_16 : f32 to vector<512x1xf32>
      %c0_17 = arith.constant 0 : index
      %c0_18 = arith.constant 0 : index
      %39 = vector.load %arg11[%c0_17, %c0_18] : memref<512x1xf32, #tpu.memory_space<vmem>>, vector<512x1xf32>
      tpu.vector_store %arg11[%c0_17, %c0_18], %38 {strides = array<i32>} : memref<512x1xf32, #tpu.memory_space<vmem>>, vector<512x1xf32>,
      %cst_19 = arith.constant 0.000000e+00 : f32
      %40 = vector.broadcast %cst_19 : f32 to vector<512x1xf32>
      %c0_20 = arith.constant 0 : index
      %c0_21 = arith.constant 0 : index
      %41 = vector.load %arg12[%c0_20, %c0_21] : memref<512x1xf32, #tpu.memory_space<vmem>>, vector<512x1xf32>
      tpu.vector_store %arg12[%c0_20, %c0_21], %40 {strides = array<i32>} : memref<512x1xf32, #tpu.memory_space<vmem>>, vector<512x1xf32>,
    } else {
    }
    %c0 = arith.constant 0 : index
    %c0_2 = arith.constant 0 : index
    %c0_3 = arith.constant 0 : index
    %5 = vector.load %arg3[%c0, %c0_2, %c0_3] : memref<1x3x256xf32, #tpu.memory_space<vmem>>, vector<1x3x256xf32>
    %6 = vector.shape_cast %5 : vector<1x3x256xf32> to vector<3x256xf32>
    %c0_4 = arith.constant 0 : index
    %c0_5 = arith.constant 0 : index
    %c0_6 = arith.constant 0 : index
    %7 = vector.load %arg6[%c0_4, %c0_5, %c0_6] : memref<3x512x1xf32, #tpu.memory_space<vmem>>, vector<1x512x1xf32>
    %8 = vector.shape_cast %7 : vector<1x512x1xf32> to vector<512x1xf32>
    %9 = vector.extract_strided_slice %6 {offsets = [0, 0], sizes = [1, 256], strides = [1, 1]} : vector<3x256xf32> to vector<1x256xf32>
    %10 = vector.broadcast %8 : vector<512x1xf32> to vector<512x256xf32>
    %11 = vector.broadcast %9 : vector<1x256xf32> to vector<512x256xf32>
    %12 = arith.mulf %10, %11 : vector<512x256xf32>
    %c1 = arith.constant 1 : index
    %c0_7 = arith.constant 0 : index
    %c0_8 = arith.constant 0 : index
    %13 = vector.load %arg6[%c1, %c0_7, %c0_8] : memref<3x512x1xf32, #tpu.memory_space<vmem>>, vector<1x512x1xf32>
    %14 = vector.shape_cast %13 : vector<1x512x1xf32> to vector<512x1xf32>
    %15 = vector.extract_strided_slice %6 {offsets = [1, 0], sizes = [1, 256], strides = [1, 1]} : vector<3x256xf32> to vector<1x256xf32>
    %16 = vector.broadcast %14 : vector<512x1xf32> to vector<512x256xf32>
    %17 = vector.broadcast %15 : vector<1x256xf32> to vector<512x256xf32>
    %18 = arith.mulf %16, %17 : vector<512x256xf32>
    %19 = arith.addf %12, %18 : vector<512x256xf32>
    %c2 = arith.constant 2 : index
    %c0_9 = arith.constant 0 : index
    %c0_10 = arith.constant 0 : index
    %20 = vector.load %arg6[%c2, %c0_9, %c0_10] : memref<3x512x1xf32, #tpu.memory_space<vmem>>, vector<1x512x1xf32>
    %21 = vector.shape_cast %20 : vector<1x512x1xf32> to vector<512x1xf32>
    %22 = vector.extract_strided_slice %6 {offsets = [2, 0], sizes = [1, 256], strides = [1, 1]} : vector<3x256xf32> to vector<1x256xf32>
    %23 = vector.broadcast %21 : vector<512x1xf32> to vector<512x256xf32>
    %24 = vector.broadcast %22 : vector<1x256xf32> to vector<512x256xf32>
    %25 = arith.mulf %23, %24 : vector<512x256xf32>
    %26 = arith.addf %19, %25 : vector<512x256xf32>
    %c0_11 = arith.constant 0 : index
    %c0_12 = arith.constant 0 : index
    %27 = vector.load %arg7[%c0_11, %c0_12] : memref<512x1xf32, #tpu.memory_space<vmem>>, vector<512x1xf32>
    %28 = vector.broadcast %27 : vector<512x1xf32> to vector<512x256xf32>
    %29 = arith.addf %26, %28 : vector<512x256xf32>
    %cst = arith.constant 0.000000e+00 : f32
    %30 = vector.broadcast %cst : f32 to vector<512x256xf32>
    %31 = arith.maximumf %29, %30 : vector<512x256xf32>
    %c0_i32_13 = arith.constant 0 : i32
    %32 = arith.cmpi eq, %arg1, %c0_i32_13 : i32
    %33 = arith.extui %32 : i1 to i32
    %c0_i32_14 = arith.constant 0 : i32
    %34 = arith.cmpi ne, %33, %c0_i32_14 : i32
    scf.if %34 {
      %c0_16 = arith.constant 0 : index
      %c0_17 = arith.constant 0 : index
      %38 = vector.load %arg11[%c0_16, %c0_17] : memref<512x1xf32, #tpu.memory_space<vmem>>, vector<512x1xf32>
      %cst_18 = arith.constant dense<0.000000e+00> : vector<512xf32>
      %39 = vector.multi_reduction <add>, %31, %cst_18 [1] : vector<512x256xf32> to vector<512xf32>
      %40 = vector.shape_cast %39 : vector<512xf32> to vector<512x1xf32>
      %41 = arith.addf %38, %40 : vector<512x1xf32>
      %c0_19 = arith.constant 0 : index
      %c0_20 = arith.constant 0 : index
      %42 = vector.load %arg11[%c0_19, %c0_20] : memref<512x1xf32, #tpu.memory_space<vmem>>, vector<512x1xf32>
      tpu.vector_store %arg11[%c0_19, %c0_20], %41 {strides = array<i32>} : memref<512x1xf32, #tpu.memory_space<vmem>>, vector<512x1xf32>,
      %c0_21 = arith.constant 0 : index
      %c0_22 = arith.constant 0 : index
      %43 = vector.load %arg12[%c0_21, %c0_22] : memref<512x1xf32, #tpu.memory_space<vmem>>, vector<512x1xf32>
      %44 = arith.mulf %31, %31 : vector<512x256xf32>
      %cst_23 = arith.constant dense<0.000000e+00> : vector<512xf32>
      %45 = vector.multi_reduction <add>, %44, %cst_23 [1] : vector<512x256xf32> to vector<512xf32>
      %46 = vector.shape_cast %45 : vector<512xf32> to vector<512x1xf32>
      %47 = arith.addf %43, %46 : vector<512x1xf32>
      %c0_24 = arith.constant 0 : index
      %c0_25 = arith.constant 0 : index
      %48 = vector.load %arg12[%c0_24, %c0_25] : memref<512x1xf32, #tpu.memory_space<vmem>>, vector<512x1xf32>
      tpu.vector_store %arg12[%c0_24, %c0_25], %47 {strides = array<i32>} : memref<512x1xf32, #tpu.memory_space<vmem>>, vector<512x1xf32>,
      %cst_26 = arith.constant 0.000000e+00 : f32
      %49 = vector.broadcast %cst_26 : f32 to vector<1x3x256xf32>
      %c0_27 = arith.constant 0 : index
      %c0_28 = arith.constant 0 : index
      %c0_29 = arith.constant 0 : index
      %50 = vector.load %arg10[%c0_27, %c0_28, %c0_29] : memref<1x3x256xf32, #tpu.memory_space<vmem>>, vector<1x3x256xf32>
      tpu.vector_store %arg10[%c0_27, %c0_28, %c0_29], %49 {strides = array<i32>} : memref<1x3x256xf32, #tpu.memory_space<vmem>>, vector<1x3x256xf32>,
    } else {
    }
    %c1_i32 = arith.constant 1 : i32
    %35 = arith.cmpi eq, %arg1, %c1_i32 : i32
    %36 = arith.extui %35 : i1 to i32
    %c0_i32_15 = arith.constant 0 : i32
    %37 = arith.cmpi ne, %36, %c0_i32_15 : i32
    scf.if %37 {
      %c0_16 = arith.constant 0 : index
      %c0_17 = arith.constant 0 : index
      %38 = vector.load %arg11[%c0_16, %c0_17] : memref<512x1xf32, #tpu.memory_space<vmem>>, vector<512x1xf32>
      %cst_18 = arith.constant 3.906250e-03 : f32
      %39 = vector.broadcast %cst_18 : f32 to vector<512x1xf32>
      %40 = arith.mulf %38, %39 : vector<512x1xf32>
      %c0_19 = arith.constant 0 : index
      %c0_20 = arith.constant 0 : index
      %41 = vector.load %arg12[%c0_19, %c0_20] : memref<512x1xf32, #tpu.memory_space<vmem>>, vector<512x1xf32>
      %cst_21 = arith.constant 2.560000e+02 : f32
      %42 = vector.broadcast %cst_21 : f32 to vector<512x1xf32>
      %43 = arith.mulf %42, %40 : vector<512x1xf32>
      %44 = arith.mulf %43, %40 : vector<512x1xf32>
      %45 = arith.subf %41, %44 : vector<512x1xf32>
      %cst_22 = arith.constant 0.00392156886 : f32
      %46 = vector.broadcast %cst_22 : f32 to vector<512x1xf32>
      %47 = arith.mulf %45, %46 : vector<512x1xf32>
      %cst_23 = arith.constant 0.000000e+00 : f32
      %48 = vector.broadcast %cst_23 : f32 to vector<512x1xf32>
      %49 = arith.maximumf %47, %48 : vector<512x1xf32>
      %cst_24 = arith.constant 9.99999974E-6 : f32
      %50 = vector.broadcast %cst_24 : f32 to vector<512x1xf32>
      %51 = arith.addf %49, %50 : vector<512x1xf32>
      %52 = math.rsqrt %51 : vector<512x1xf32>
      %c0_25 = arith.constant 0 : index
      %c0_26 = arith.constant 0 : index
      %c0_27 = arith.constant 0 : index
      %53 = vector.load %arg5[%c0_25, %c0_26, %c0_27] : memref<1x512x1xf32, #tpu.memory_space<vmem>>, vector<1x512x1xf32>
      %54 = vector.shape_cast %53 : vector<1x512x1xf32> to vector<512x1xf32>
      %55 = arith.mulf %54, %52 : vector<512x1xf32>
      %c0_28 = arith.constant 0 : index
      %c0_29 = arith.constant 0 : index
      %c0_30 = arith.constant 0 : index
      %56 = vector.load %arg4[%c0_28, %c0_29, %c0_30] : memref<1x512x1xf32, #tpu.memory_space<vmem>>, vector<1x512x1xf32>
      %57 = vector.shape_cast %56 : vector<1x512x1xf32> to vector<512x1xf32>
      %58 = arith.mulf %40, %55 : vector<512x1xf32>
      %59 = arith.subf %57, %58 : vector<512x1xf32>
      %cst_31 = arith.constant 1.000000e+00 : f32
      %60 = vector.broadcast %cst_31 : f32 to vector<512x1xf32>
      %61 = arith.subf %55, %60 : vector<512x1xf32>
      %cst_32 = arith.constant 5.000000e-01 : f32
      %62 = vector.broadcast %cst_32 : f32 to vector<512x1xf32>
      %63 = arith.mulf %62, %61 : vector<512x1xf32>
      %cst_33 = arith.constant 1.000000e+00 : f32
      %64 = vector.broadcast %cst_33 : f32 to vector<512x1xf32>
      %65 = arith.addf %64, %63 : vector<512x1xf32>
      %cst_34 = arith.constant 5.000000e-01 : f32
      %66 = vector.broadcast %cst_34 : f32 to vector<512x1xf32>
      %67 = arith.mulf %66, %59 : vector<512x1xf32>
      %68 = vector.broadcast %65 : vector<512x1xf32> to vector<512x256xf32>
      %69 = arith.mulf %31, %68 : vector<512x256xf32>
      %70 = vector.broadcast %67 : vector<512x1xf32> to vector<512x256xf32>
      %71 = arith.addf %69, %70 : vector<512x256xf32>
      %c0_35 = arith.constant 0 : index
      %c0_36 = arith.constant 0 : index
      %72 = vector.load %arg8[%c0_35, %c0_36] : memref<8x512xf32, #tpu.memory_space<vmem>>, vector<8x512xf32>
      %cst_37 = arith.constant dense<0.000000e+00> : vector<8x256xf32>
      %73 = tpu.matmul %72, %71, %cst_37 {dimension_numbers = #tpu.dot_dimension_numbers<[1], [0], [0], [1], [0, 0, 1, 1], [], []>} : vector<8x512xf32>, vector<512x256xf32>, vector<8x256xf32> -> vector<8x256xf32>
      %c0_38 = arith.constant 0 : index
      %c0_39 = arith.constant 0 : index
      %74 = vector.load %arg9[%c0_38, %c0_39] : memref<8x1xf32, #tpu.memory_space<vmem>>, vector<8x1xf32>
      %75 = vector.broadcast %74 : vector<8x1xf32> to vector<8x256xf32>
      %76 = arith.addf %73, %75 : vector<8x256xf32>
      %77 = vector.extract_strided_slice %76 {offsets = [0, 0], sizes = [3, 256], strides = [1, 1]} : vector<8x256xf32> to vector<3x256xf32>
      %c0_40 = arith.constant 0 : index
      %c0_41 = arith.constant 0 : index
      %c0_42 = arith.constant 0 : index
      %78 = vector.load %arg10[%c0_40, %c0_41, %c0_42] : memref<1x3x256xf32, #tpu.memory_space<vmem>>, vector<1x3x256xf32>
      %79 = vector.shape_cast %78 : vector<1x3x256xf32> to vector<3x256xf32>
      %80 = vector.shape_cast %77 : vector<3x256xf32> to vector<1x3x256xf32>
      tpu.vector_store %arg10[%c0_40, %c0_41, %c0_42], %80 {strides = array<i32>} : memref<1x3x256xf32, #tpu.memory_space<vmem>>, vector<1x3x256xf32>,
    } else {
    }
    return
  }
  func.func @transform_0(%arg0: i32, %arg1: i32, %arg2: i32) -> (i32, i32, i32) {
    %c0_i32 = arith.constant 0 : i32
    %c0_i32_0 = arith.constant 0 : i32
    return %arg0, %c0_i32, %arg2 : i32, i32, i32
  }
  func.func @transform_1(%arg0: i32, %arg1: i32, %arg2: i32) -> (i32, i32, i32) {
    %c0_i32 = arith.constant 0 : i32
    %c0_i32_0 = arith.constant 0 : i32
    %c0_i32_1 = arith.constant 0 : i32
    return %arg0, %c0_i32, %c0_i32_0 : i32, i32, i32
  }
  func.func @transform_2(%arg0: i32, %arg1: i32, %arg2: i32) -> (i32, i32, i32) {
    %c0_i32 = arith.constant 0 : i32
    %c0_i32_0 = arith.constant 0 : i32
    %c0_i32_1 = arith.constant 0 : i32
    return %arg0, %c0_i32, %c0_i32_0 : i32, i32, i32
  }
  func.func @transform_3(%arg0: i32, %arg1: i32, %arg2: i32) -> (i32, i32, i32) {
    %c0_i32 = arith.constant 0 : i32
    %c0_i32_0 = arith.constant 0 : i32
    %c0_i32_1 = arith.constant 0 : i32
    %c0_i32_2 = arith.constant 0 : i32
    return %c0_i32, %c0_i32_0, %c0_i32_1 : i32, i32, i32
  }
  func.func @transform_4(%arg0: i32, %arg1: i32, %arg2: i32) -> (i32, i32) {
    %c0_i32 = arith.constant 0 : i32
    %c0_i32_0 = arith.constant 0 : i32
    %c0_i32_1 = arith.constant 0 : i32
    return %c0_i32, %c0_i32_0 : i32, i32
  }
  func.func @transform_5(%arg0: i32, %arg1: i32, %arg2: i32) -> (i32, i32) {
    %c0_i32 = arith.constant 0 : i32
    %c0_i32_0 = arith.constant 0 : i32
    %c0_i32_1 = arith.constant 0 : i32
    return %c0_i32, %c0_i32_0 : i32, i32
  }
  func.func @transform_6(%arg0: i32, %arg1: i32, %arg2: i32) -> (i32, i32) {
    %c0_i32 = arith.constant 0 : i32
    %c0_i32_0 = arith.constant 0 : i32
    %c0_i32_1 = arith.constant 0 : i32
    return %c0_i32, %c0_i32_0 : i32, i32
  }
  func.func @transform_7(%arg0: i32, %arg1: i32, %arg2: i32) -> (i32, i32, i32) {
    %c0_i32 = arith.constant 0 : i32
    %c0_i32_0 = arith.constant 0 : i32
    return %arg0, %c0_i32, %arg2 : i32, i32, i32
  }
}

</mosaic_0001>

<llo_original>
// kernel: tpu_custom_call.1
$region0: #{tpu_custom_call.1}
  #allocation0 [shape = 'u32[]', space=smem, size = 0x4, offset = 0x4, fixed_abs, tag = 'smem constant byte address 0x4 - core index']
  #allocation1 [shape = 'u32[144,128]{1,0:T(1,128)}', space=vmem, size = 0x12000, scoped, tag = 'internal scratch']
  #allocation2 [shape = 'f32[512,1]{1,0:T(8,128)}', space=vmem, size = 0x40000, scoped, tag = 'scratch operand']
  #allocation3 [shape = 'f32[512,1]{1,0:T(8,128)}', space=vmem, size = 0x40000, scoped, tag = 'scratch operand']
  %s0 = inlined_call_operand.vmem [shape: f32[2,3,256], index: 0, kind: input, shape index: {}]
  %s1 = inlined_call_operand.vmem [shape: f32[2,512,1], index: 1, kind: input, shape index: {}]
  %s2 = inlined_call_operand.vmem [shape: f32[2,512,1], index: 2, kind: input, shape index: {}]
  %s3 = inlined_call_operand.vmem [shape: f32[3,512,1], index: 3, kind: input, shape index: {}]
  %s4 = inlined_call_operand.vmem [shape: f32[512,1], index: 4, kind: input, shape index: {}]
  %s5 = inlined_call_operand.vmem [shape: f32[8,512], index: 5, kind: input, shape index: {}]
  %s6 = inlined_call_operand.vmem [shape: f32[8,1], index: 6, kind: input, shape index: {}]
  %s7 = inlined_call_operand.vmem [shape: f32[2,3,256], index: 7, kind: output, shape index: {}]
  %s8 = sld [smem:[#allocation0]]
  $region73: #{tpu_custom_call.1} parent=0
    _
  %s10 = ssub.s32 1, %s8
  %s11 = scalar_select 0, %s10, %s8
  loop: start=0, step=1, limit=6
  $region2: #{tpu_custom_call.1} parent=0 // loop_pre_header
    _
  $region3: #{tpu_custom_call.1} parent=0 // loop_header
    %s13 = sphi 0, %s17
    %p14 = scmp.ge.s32.totalorder %s13, 6
    %s20 = sphi 0, %s39
    %s21 = sphi 0, %s35
    %s22 = sphi 0, %s31
    %s23 = sphi 0, %s20
    %s24 = sphi 0, %s21
    %s25 = sphi 0, %s22
    %s26 = sphi 0, %s23
    %s27 = sphi 0, %s24
    %s28 = sphi 0, %s25
    %s44 = sphi 0, %s46
    %s47 = sphi 0, %s44
    %s48 = sphi 0, %s47
    %s64 = sphi 0, %s48
    %s70 = sphi 0, %s72
    %s73 = sphi 0, %s70
    %s74 = sphi 0, %s73
    %s90 = sphi 0, %s74
    %s96 = sphi 0, %s98
    %s99 = sphi 0, %s96
    %s100 = sphi 0, %s99
    %s116 = sphi 0, %s100
    %s120 = sphi 0, %s120
    %s122 = sphi 0, %s120
    %s123 = sphi 0, %s122
    %s137 = sphi 0, %s123
    %s141 = sphi 0, %s141
    %s143 = sphi 0, %s141
    %s144 = sphi 0, %s143
    %s158 = sphi 0, %s144
    %s162 = sphi 0, %s162
    %s164 = sphi 0, %s162
    %s165 = sphi 0, %s164
    %s179 = sphi 0, %s165
    %s183 = sphi 0, %s183
    %s185 = sphi 0, %s183
    %s186 = sphi 0, %s185
    %s200 = sphi 0, %s186
    %s208 = sphi 0, %s210
    %s211 = sphi 0, %s208
    %s212 = sphi 0, %s211
    %s228 = sphi 0, %s212
  $region4: #{tpu_custom_call.1} parent=0 // loop_header_branch
    %16 = sbr.rel (%p14) target = $region8
  $region5: #{tpu_custom_call.1} parent=0 // loop_body
    %s18 = ssub.s32 %s13, 1
    %s19 = ssub.s32 %s13, 2
    %s29 = sadd.s32 1, %s22
    %p30 = scmp.ge.s32.totalorder %s29, 1
    %s31 = scalar_select %p30, 0, %s29
    %s32 = sadd.s32 1, %s21
    %s33 = scalar_select %p30, %s32, %s21
    %p34 = scmp.ge.s32.totalorder %s33, 2
    %s35 = scalar_select %p34, 0, %s33
    %s36 = sadd.s32 1, %s20
    %s37 = scalar_select %p34, %s36, %s20
    %p38 = scmp.ge.s32.totalorder %s37, 2
    %s39 = scalar_select %p38, 0, %s37
    %s40 = ssub.s32 %s20, %s39
    %s41 = ssub.s32 %s22, %s31
    %s42 = sor.u32 %s40, %s41
    %p43 = scmp.eq.s32.totalorder %s42, 0
    %s45 = sadd.s32 %s44, 1
    %s46 = scalar_select %p43, %s44, %s45
    %p49 = pneg %p43
    %p50 = scmp.eq.s32.totalorder %s13, 3
    %p51 = por %p49, %p50
    %p52 = scmp.ne.s32.totalorder %s44, %s47
    %p53 = scmp.eq.s32.totalorder %s13, 0
    %p54 = por %p52, %p53
    %p55 = scmp.ne.s32.totalorder %s44, %s47
    %p56 = scmp.eq.s32.totalorder %s18, 3
    %p57 = por %p55, %p56
    %p58 = scmp.ne.s32.totalorder %s47, %s48
    %p59 = scmp.eq.s32.totalorder %s18, 0
    %p60 = por %p58, %p59
    %p61 = scmp.ne.s32.totalorder %s47, %s48
    %p62 = scmp.eq.s32.totalorder %s19, 3
    %p63 = por %p61, %p62
    %p65 = scmp.ne.s32.totalorder %s48, %s64
    %p66 = scmp.eq.s32.totalorder %s19, 0
    %p67 = por %p65, %p66
    %s68 = ssub.s32 %s20, %s39
    %p69 = scmp.eq.s32.totalorder %s68, 0
    %s71 = sadd.s32 %s70, 1
    %s72 = scalar_select %p69, %s70, %s71
    %p75 = pneg %p69
    %p76 = scmp.eq.s32.totalorder %s13, 3
    %p77 = por %p75, %p76
    %p78 = scmp.ne.s32.totalorder %s70, %s73
    %p79 = scmp.eq.s32.totalorder %s13, 0
    %p80 = por %p78, %p79
    %p81 = scmp.ne.s32.totalorder %s70, %s73
    %p82 = scmp.eq.s32.totalorder %s18, 3
    %p83 = por %p81, %p82
    %p84 = scmp.ne.s32.totalorder %s73, %s74
    %p85 = scmp.eq.s32.totalorder %s18, 0
    %p86 = por %p84, %p85
    %p87 = scmp.ne.s32.totalorder %s73, %s74
    %p88 = scmp.eq.s32.totalorder %s19, 3
    %p89 = por %p87, %p88
    %p91 = scmp.ne.s32.totalorder %s74, %s90
    %p92 = scmp.eq.s32.totalorder %s19, 0
    %p93 = por %p91, %p92
    %s94 = ssub.s32 %s20, %s39
    %p95 = scmp.eq.s32.totalorder %s94, 0
    %s97 = sadd.s32 %s96, 1
    %s98 = scalar_select %p95, %s96, %s97
    %p101 = pneg %p95
    %p102 = scmp.eq.s32.totalorder %s13, 3
    %p103 = por %p101, %p102
    %p104 = scmp.ne.s32.totalorder %s96, %s99
    %p105 = scmp.eq.s32.totalorder %s13, 0
    %p106 = por %p104, %p105
    %p107 = scmp.ne.s32.totalorder %s96, %s99
    %p108 = scmp.eq.s32.totalorder %s18, 3
    %p109 = por %p107, %p108
    %p110 = scmp.ne.s32.totalorder %s99, %s100
    %p111 = scmp.eq.s32.totalorder %s18, 0
    %p112 = por %p110, %p111
    %p113 = scmp.ne.s32.totalorder %s99, %s100
    %p114 = scmp.eq.s32.totalorder %s19, 3
    %p115 = por %p113, %p114
    %p117 = scmp.ne.s32.totalorder %s100, %s116
    %p118 = scmp.eq.s32.totalorder %s19, 0
    %p119 = por %p117, %p118
    %s121 = sadd.s32 %s120, 1
    %p124 = scmp.eq.s32.totalorder %s13, 3
    %p125 = scmp.ne.s32.totalorder %s120, %s122
    %p126 = scmp.eq.s32.totalorder %s13, 0
    %p127 = por %p125, %p126
    %p128 = scmp.ne.s32.totalorder %s120, %s122
    %p129 = scmp.eq.s32.totalorder %s18, 3
    %p130 = por %p128, %p129
    %p131 = scmp.ne.s32.totalorder %s122, %s123
    %p132 = scmp.eq.s32.totalorder %s18, 0
    %p133 = por %p131, %p132
    %p134 = scmp.ne.s32.totalorder %s122, %s123
    %p135 = scmp.eq.s32.totalorder %s19, 3
    %p136 = por %p134, %p135
    %p138 = scmp.ne.s32.totalorder %s123, %s137
    %p139 = scmp.eq.s32.totalorder %s19, 0
    %p140 = por %p138, %p139
    %s142 = sadd.s32 %s141, 1
    %p145 = scmp.eq.s32.totalorder %s13, 3
    %p146 = scmp.ne.s32.totalorder %s141, %s143
    %p147 = scmp.eq.s32.totalorder %s13, 0
    %p148 = por %p146, %p147
    %p149 = scmp.ne.s32.totalorder %s141, %s143
    %p150 = scmp.eq.s32.totalorder %s18, 3
    %p151 = por %p149, %p150
    %p152 = scmp.ne.s32.totalorder %s143, %s144
    %p153 = scmp.eq.s32.totalorder %s18, 0
    %p154 = por %p152, %p153
    %p155 = scmp.ne.s32.totalorder %s143, %s144
    %p156 = scmp.eq.s32.totalorder %s19, 3
    %p157 = por %p155, %p156
    %p159 = scmp.ne.s32.totalorder %s144, %s158
    %p160 = scmp.eq.s32.totalorder %s19, 0
    %p161 = por %p159, %p160
    %s163 = sadd.s32 %s162, 1
    %p166 = scmp.eq.s32.totalorder %s13, 3
    %p167 = scmp.ne.s32.totalorder %s162, %s164
    %p168 = scmp.eq.s32.totalorder %s13, 0
    %p169 = por %p167, %p168
    %p170 = scmp.ne.s32.totalorder %s162, %s164
    %p171 = scmp.eq.s32.totalorder %s18, 3
    %p172 = por %p170, %p171
    %p173 = scmp.ne.s32.totalorder %s164, %s165
    %p174 = scmp.eq.s32.totalorder %s18, 0
    %p175 = por %p173, %p174
    %p176 = scmp.ne.s32.totalorder %s164, %s165
    %p177 = scmp.eq.s32.totalorder %s19, 3
    %p178 = por %p176, %p177
    %p180 = scmp.ne.s32.totalorder %s165, %s179
    %p181 = scmp.eq.s32.totalorder %s19, 0
    %p182 = por %p180, %p181
    %s184 = sadd.s32 %s183, 1
    %p187 = scmp.eq.s32.totalorder %s13, 3
    %p188 = scmp.ne.s32.totalorder %s183, %s185
    %p189 = scmp.eq.s32.totalorder %s13, 0
    %p190 = por %p188, %p189
    %p191 = scmp.ne.s32.totalorder %s183, %s185
    %p192 = scmp.eq.s32.totalorder %s18, 3
    %p193 = por %p191, %p192
    %p194 = scmp.ne.s32.totalorder %s185, %s186
    %p195 = scmp.eq.s32.totalorder %s18, 0
    %p196 = por %p194, %p195
    %p197 = scmp.ne.s32.totalorder %s185, %s186
    %p198 = scmp.eq.s32.totalorder %s19, 3
    %p199 = por %p197, %p198
    %p201 = scmp.ne.s32.totalorder %s186, %s200
    %p202 = scmp.eq.s32.totalorder %s19, 0
    %p203 = por %p201, %p202
    %s204 = ssub.s32 %s20, %s39
    %s205 = ssub.s32 %s22, %s31
    %s206 = sor.u32 %s204, %s205
    %p207 = scmp.eq.s32.totalorder %s206, 0
    %s209 = sadd.s32 %s208, 1
    %s210 = scalar_select %p207, %s208, %s209
    %p213 = pneg %p207
    %p214 = scmp.eq.s32.totalorder %s13, 3
    %p215 = por %p213, %p214
    %p216 = scmp.ne.s32.totalorder %s208, %s211
    %p217 = scmp.eq.s32.totalorder %s13, 0
    %p218 = por %p216, %p217
    %p219 = scmp.ne.s32.totalorder %s208, %s211
    %p220 = scmp.eq.s32.totalorder %s18, 3
    %p221 = por %p219, %p220
    %p222 = scmp.ne.s32.totalorder %s211, %s212
    %p223 = scmp.eq.s32.totalorder %s18, 0
    %p224 = por %p222, %p223
    %p225 = scmp.ne.s32.totalorder %s211, %s212
    %p226 = scmp.eq.s32.totalorder %s19, 3
    %p227 = por %p225, %p226
    %p229 = scmp.ne.s32.totalorder %s212, %s228
    %p230 = scmp.eq.s32.totalorder %s19, 0
    %p231 = por %p229, %p230
    %p232 = scmp.le.s32.totalorder 1, %s13
    %p233 = scmp.lt.s32.totalorder %s13, 5
    %p234 = pnand %p232, %p233
    %p235 = pneg %p234
    // Predicated region
    $region9: #{tpu_custom_call.1} parent=5 // pred_check
      _
    $region10: #{tpu_custom_call.1} parent=5 // pred_check_branch
      %237 = sbr.rel (%p234) target = $region12
    $region11: #{tpu_custom_call.1} parent=5 // pred_region
      %s238 = ssub.s32 %s13, 1
      // Predicated region
      $region13: #{tpu_custom_call.1} parent=11 // pred_check
        %p239 = pneg %p133
      $region14: #{tpu_custom_call.1} parent=11 // pred_check_branch
        %241 = sbr.rel (%p239) target = $region16
      $region15: #{tpu_custom_call.1} parent=11 // pred_region
        _
      $region16: #{tpu_custom_call.1} parent=11 // pred_fallthru
        _
      // Predicated region
      $region17: #{tpu_custom_call.1} parent=11 // pred_check
        %p242 = pneg %p154
      $region18: #{tpu_custom_call.1} parent=11 // pred_check_branch
        %244 = sbr.rel (%p242) target = $region20
      $region19: #{tpu_custom_call.1} parent=11 // pred_region
        _
      $region20: #{tpu_custom_call.1} parent=11 // pred_fallthru
        _
      // Predicated region
      $region21: #{tpu_custom_call.1} parent=11 // pred_check
        %p245 = pneg %p175
      $region22: #{tpu_custom_call.1} parent=11 // pred_check_branch
        %247 = sbr.rel (%p245) target = $region24
      $region23: #{tpu_custom_call.1} parent=11 // pred_region
        _
      $region24: #{tpu_custom_call.1} parent=11 // pred_fallthru
        _
      // Predicated region
      $region25: #{tpu_custom_call.1} parent=11 // pred_check
        %p248 = pneg %p196
      $region26: #{tpu_custom_call.1} parent=11 // pred_check_branch
        %250 = sbr.rel (%p248) target = $region28
      $region27: #{tpu_custom_call.1} parent=11 // pred_region
        _
      $region28: #{tpu_custom_call.1} parent=11 // pred_fallthru
        _
    $region12: #{tpu_custom_call.1} parent=5 // pred_fallthru
      _
    %p251 = scmp.lt.s32.totalorder %s13, 4
    // Predicated region
    $region29: #{tpu_custom_call.1} parent=5 // pred_check
      %p252 = pneg %p251
    $region30: #{tpu_custom_call.1} parent=5 // pred_check_branch
      %254 = sbr.rel (%p252) target = $region32
    $region31: #{tpu_custom_call.1} parent=5 // pred_region
      // Predicated region
      $region33: #{tpu_custom_call.1} parent=31 // pred_check
        %p255 = pneg %p54
      $region34: #{tpu_custom_call.1} parent=31 // pred_check_branch
        %257 = sbr.rel (%p255) target = $region36
      $region35: #{tpu_custom_call.1} parent=31 // pred_region
        %s258 = smul.u32 2, %s22
        %p259 = scmp.lt.s32.totalorder %s20, 1
        %s260 = scalar_select %p259, %s20, 1
        %p261 = scmp.lt.s32.totalorder %s258, 1
        %s262 = scalar_select %p261, %s258, 1
        %s263 = smul.addr %s260, 2
        %s264 = sadd.s32 %s262, %s263
        %s265 = smul.addr %s264, 4
        %s266 = scalar_lea.vmem %s0, %s265
        %s267 = smul.u32 2, %s22
      $region36: #{tpu_custom_call.1} parent=31 // pred_fallthru
        _
      // Predicated region
      $region37: #{tpu_custom_call.1} parent=31 // pred_check
        %p268 = pneg %p80
      $region38: #{tpu_custom_call.1} parent=31 // pred_check_branch
        %270 = sbr.rel (%p268) target = $region40
      $region39: #{tpu_custom_call.1} parent=31 // pred_region
        %p271 = scmp.lt.s32.totalorder %s20, 1
        %s272 = scalar_select %p271, %s20, 1
        %s273 = smul.addr %s272, 64
        %s274 = smul.addr %s273, 8
        %s275 = scalar_lea.vmem %s1, %s274
      $region40: #{tpu_custom_call.1} parent=31 // pred_fallthru
        _
      // Predicated region
      $region41: #{tpu_custom_call.1} parent=31 // pred_check
        %p276 = pneg %p106
      $region42: #{tpu_custom_call.1} parent=31 // pred_check_branch
        %278 = sbr.rel (%p276) target = $region44
      $region43: #{tpu_custom_call.1} parent=31 // pred_region
        %p279 = scmp.lt.s32.totalorder %s20, 1
        %s280 = scalar_select %p279, %s20, 1
        %s281 = smul.addr %s280, 64
        %s282 = smul.addr %s281, 8
        %s283 = scalar_lea.vmem %s2, %s282
      $region44: #{tpu_custom_call.1} parent=31 // pred_fallthru
        _
    $region32: #{tpu_custom_call.1} parent=5 // pred_fallthru
      _
    %p284 = scmp.le.s32.totalorder 1, %s13
    %p285 = scmp.lt.s32.totalorder %s13, 5
    %p286 = pnand %p284, %p285
    %p287 = pneg %p286
    // Predicated region
    $region45: #{tpu_custom_call.1} parent=5 // pred_check
      _
    $region46: #{tpu_custom_call.1} parent=5 // pred_check_branch
      %289 = sbr.rel (%p286) target = $region48
    $region47: #{tpu_custom_call.1} parent=5 // pred_region
      %s290 = ssub.s32 %s13, 1
      %s291 = smul.u32 2, %s25
      %p292 = scmp.lt.s32.totalorder %s23, 1
      %s293 = scalar_select %p292, %s23, 1
      %p294 = scmp.lt.s32.totalorder %s291, 1
      %s295 = scalar_select %p294, %s291, 1
      %s296 = smul.addr %s293, 2
      %s297 = sadd.s32 %s295, %s296
      %s298 = smul.addr %s297, 4
      %s299 = scalar_lea.vmem %s0, %s298
      %p300 = pneg %p60
      %p301 = pneg %p57
      %p302 = scmp.lt.s32.totalorder %s23, 1
      %s303 = scalar_select %p302, %s23, 1
      %s304 = smul.addr %s303, 64
      %s305 = smul.addr %s304, 8
      %s306 = scalar_lea.vmem %s1, %s305
      %p307 = pneg %p86
      %p308 = pneg %p83
      %p309 = scmp.lt.s32.totalorder %s23, 1
      %s310 = scalar_select %p309, %s23, 1
      %s311 = smul.addr %s310, 64
      %s312 = smul.addr %s311, 8
      %s313 = scalar_lea.vmem %s2, %s312
      %p314 = pneg %p112
      %p315 = pneg %p109
      %p316 = pneg %p133
      %p317 = pneg %p130
      %p318 = pneg %p154
      %p319 = pneg %p151
      %p320 = pneg %p175
      %p321 = pneg %p172
      %p322 = pneg %p196
      %p323 = pneg %p193
      %p324 = pneg %p224
      %p325 = pneg %p221
      %s326 = smul.u32 2, %s25
      %p327 = scmp.lt.s32.totalorder %s23, 1
      %s328 = scalar_select %p327, %s23, 1
      %p329 = scmp.lt.s32.totalorder %s326, 1
      %s330 = scalar_select %p329, %s326, 1
      %s331 = smul.addr %s328, 2
      %s332 = sadd.s32 %s330, %s331
      %s333 = smul.addr %s332, 4
      %s334 = scalar_lea.vmem %s7, %s333
      %s335 = smul.u32 2, %s25
      %p336 = scmp.lt.s32.totalorder %s23, 1
      %s337 = scalar_select %p336, %s23, 1
      %p338 = scmp.lt.s32.totalorder %s335, 1
      %s339 = scalar_select %p338, %s335, 1
      %s340 = smul.addr %s337, 2
      %s341 = sadd.s32 %s339, %s340
      %s342 = smul.addr %s341, 4
      %s343 = scalar_lea.vmem %s0, %s342
      %s344 = smul.u32 2, %s25
      %p345 = scmp.lt.s32.totalorder %s23, 1
      %s346 = scalar_select %p345, %s23, 1
      %s347 = smul.addr %s346, 64
      %s348 = smul.addr %s347, 8
      %s349 = scalar_lea.vmem %s1, %s348
      %p350 = scmp.lt.s32.totalorder %s23, 1
      %s351 = scalar_select %p350, %s23, 1
      %s352 = smul.addr %s351, 64
      %s353 = smul.addr %s352, 8
      %s354 = scalar_lea.vmem %s2, %s353
      %s355 = smul.u32 2, %s25
      %p356 = scmp.lt.s32.totalorder %s23, 1
      %s357 = scalar_select %p356, %s23, 1
      %p358 = scmp.lt.s32.totalorder %s355, 1
      %s359 = scalar_select %p358, %s355, 1
      %s360 = smul.addr %s357, 2
      %s361 = sadd.s32 %s359, %s360
      %s362 = smul.addr %s361, 4
      %s363 = scalar_lea.vmem %s7, %s362
      %s364 = smul.u32 2, %s25
      %p365 = scmp.eq.s32.totalorder %s24, 0
      %p366 = scmp.eq.s32.totalorder %s25, 0
      %p367 = pnand %p365, %p366
      %p368 = pneg %p367
      // Predicated region
      $region49: #{tpu_custom_call.1} parent=47 // pred_check
        _
      $region50: #{tpu_custom_call.1} parent=47 // pred_check_branch
        %370 = sbr.rel (%p367) target = $region52
      $region51: #{tpu_custom_call.1} parent=47 // pred_region
        %vm371 = vcmask 7168
        %372 = vst.msk [vmem:[#allocation2] sm:$0xff] %vm371, 0.0
        %373 = vst.msk [vmem:[#allocation2 + $0x8] sm:$0xff] %vm371, 0.0
        %374 = vst.msk [vmem:[#allocation2 + $0x10] sm:$0xff] %vm371, 0.0
        %375 = vst.msk [vmem:[#allocation2 + $0x18] sm:$0xff] %vm371, 0.0
        %376 = vst.msk [vmem:[#allocation2 + $0x20] sm:$0xff] %vm371, 0.0
        %377 = vst.msk [vmem:[#allocation2 + $0x28] sm:$0xff] %vm371, 0.0
        %378 = vst.msk [vmem:[#allocation2 + $0x30] sm:$0xff] %vm371, 0.0
        %379 = vst.msk [vmem:[#allocation2 + $0x38] sm:$0xff] %vm371, 0.0
        %380 = vst.msk [vmem:[#allocation2 + $0x40] sm:$0xff] %vm371, 0.0
        %381 = vst.msk [vmem:[#allocation2 + $0x48] sm:$0xff] %vm371, 0.0
        %382 = vst.msk [vmem:[#allocation2 + $0x50] sm:$0xff] %vm371, 0.0
        %383 = vst.msk [vmem:[#allocation2 + $0x58] sm:$0xff] %vm371, 0.0
        %384 = vst.msk [vmem:[#allocation2 + $0x60] sm:$0xff] %vm371, 0.0
        %385 = vst.msk [vmem:[#allocation2 + $0x68] sm:$0xff] %vm371, 0.0
        %386 = vst.msk [vmem:[#allocation2 + $0x70] sm:$0xff] %vm371, 0.0
        %387 = vst.msk [vmem:[#allocation2 + $0x78] sm:$0xff] %vm371, 0.0
        %388 = vst.msk [vmem:[#allocation2 + $0x80] sm:$0xff] %vm371, 0.0
        %389 = vst.msk [vmem:[#allocation2 + $0x88] sm:$0xff] %vm371, 0.0
        %390 = vst.msk [vmem:[#allocation2 + $0x90] sm:$0xff] %vm371, 0.0
        %391 = vst.msk [vmem:[#allocation2 + $0x98] sm:$0xff] %vm371, 0.0
        %392 = vst.msk [vmem:[#allocation2 + $0xa0] sm:$0xff] %vm371, 0.0
        %393 = vst.msk [vmem:[#allocation2 + $0xa8] sm:$0xff] %vm371, 0.0
        %394 = vst.msk [vmem:[#allocation2 + $0xb0] sm:$0xff] %vm371, 0.0
        %395 = vst.msk [vmem:[#allocation2 + $0xb8] sm:$0xff] %vm371, 0.0
        %396 = vst.msk [vmem:[#allocation2 + $0xc0] sm:$0xff] %vm371, 0.0
        %397 = vst.msk [vmem:[#allocation2 + $0xc8] sm:$0xff] %vm371, 0.0
        %398 = vst.msk [vmem:[#allocation2 + $0xd0] sm:$0xff] %vm371, 0.0
        %399 = vst.msk [vmem:[#allocation2 + $0xd8] sm:$0xff] %vm371, 0.0
        %400 = vst.msk [vmem:[#allocation2 + $0xe0] sm:$0xff] %vm371, 0.0
        %401 = vst.msk [vmem:[#allocation2 + $0xe8] sm:$0xff] %vm371, 0.0
        %402 = vst.msk [vmem:[#allocation2 + $0xf0] sm:$0xff] %vm371, 0.0
        %403 = vst.msk [vmem:[#allocation2 + $0xf8] sm:$0xff] %vm371, 0.0
        %404 = vst.msk [vmem:[#allocation2 + $0x100] sm:$0xff] %vm371, 0.0
        %405 = vst.msk [vmem:[#allocation2 + $0x108] sm:$0xff] %vm371, 0.0
        %406 = vst.msk [vmem:[#allocation2 + $0x110] sm:$0xff] %vm371, 0.0
        %407 = vst.msk [vmem:[#allocation2 + $0x118] sm:$0xff] %vm371, 0.0
        %408 = vst.msk [vmem:[#allocation2 + $0x120] sm:$0xff] %vm371, 0.0
        %409 = vst.msk [vmem:[#allocation2 + $0x128] sm:$0xff] %vm371, 0.0
        %410 = vst.msk [vmem:[#allocation2 + $0x130] sm:$0xff] %vm371, 0.0
        %411 = vst.msk [vmem:[#allocation2 + $0x138] sm:$0xff] %vm371, 0.0
        %412 = vst.msk [vmem:[#allocation2 + $0x140] sm:$0xff] %vm371, 0.0
        %413 = vst.msk [vmem:[#allocation2 + $0x148] sm:$0xff] %vm371, 0.0
        %414 = vst.msk [vmem:[#allocation2 + $0x150] sm:$0xff] %vm371, 0.0
        %415 = vst.msk [vmem:[#allocation2 + $0x158] sm:$0xff] %vm371, 0.0
        %416 = vst.msk [vmem:[#allocation2 + $0x160] sm:$0xff] %vm371, 0.0
        %417 = vst.msk [vmem:[#allocation2 + $0x168] sm:$0xff] %vm371, 0.0
        %418 = vst.msk [vmem:[#allocation2 + $0x170] sm:$0xff] %vm371, 0.0
        %419 = vst.msk [vmem:[#allocation2 + $0x178] sm:$0xff] %vm371, 0.0
        %420 = vst.msk [vmem:[#allocation2 + $0x180] sm:$0xff] %vm371, 0.0
        %421 = vst.msk [vmem:[#allocation2 + $0x188] sm:$0xff] %vm371, 0.0
        %422 = vst.msk [vmem:[#allocation2 + $0x190] sm:$0xff] %vm371, 0.0
        %423 = vst.msk [vmem:[#allocation2 + $0x198] sm:$0xff] %vm371, 0.0
        %424 = vst.msk [vmem:[#allocation2 + $0x1a0] sm:$0xff] %vm371, 0.0
        %425 = vst.msk [vmem:[#allocation2 + $0x1a8] sm:$0xff] %vm371, 0.0
        %426 = vst.msk [vmem:[#allocation2 + $0x1b0] sm:$0xff] %vm371, 0.0
        %427 = vst.msk [vmem:[#allocation2 + $0x1b8] sm:$0xff] %vm371, 0.0
        %428 = vst.msk [vmem:[#allocation2 + $0x1c0] sm:$0xff] %vm371, 0.0
        %429 = vst.msk [vmem:[#allocation2 + $0x1c8] sm:$0xff] %vm371, 0.0
        %430 = vst.msk [vmem:[#allocation2 + $0x1d0] sm:$0xff] %vm371, 0.0
        %431 = vst.msk [vmem:[#allocation2 + $0x1d8] sm:$0xff] %vm371, 0.0
        %432 = vst.msk [vmem:[#allocation2 + $0x1e0] sm:$0xff] %vm371, 0.0
        %433 = vst.msk [vmem:[#allocation2 + $0x1e8] sm:$0xff] %vm371, 0.0
        %434 = vst.msk [vmem:[#allocation2 + $0x1f0] sm:$0xff] %vm371, 0.0
        %435 = vst.msk [vmem:[#allocation2 + $0x1f8] sm:$0xff] %vm371, 0.0
        %436 = vst.msk [vmem:[#allocation3] sm:$0xff] %vm371, 0.0
        %437 = vst.msk [vmem:[#allocation3 + $0x8] sm:$0xff] %vm371, 0.0
        %438 = vst.msk [vmem:[#allocation3 + $0x10] sm:$0xff] %vm371, 0.0
        %439 = vst.msk [vmem:[#allocation3 + $0x18] sm:$0xff] %vm371, 0.0
        %440 = vst.msk [vmem:[#allocation3 + $0x20] sm:$0xff] %vm371, 0.0
        %441 = vst.msk [vmem:[#allocation3 + $0x28] sm:$0xff] %vm371, 0.0
        %442 = vst.msk [vmem:[#allocation3 + $0x30] sm:$0xff] %vm371, 0.0
        %443 = vst.msk [vmem:[#allocation3 + $0x38] sm:$0xff] %vm371, 0.0
        %444 = vst.msk [vmem:[#allocation3 + $0x40] sm:$0xff] %vm371, 0.0
        %445 = vst.msk [vmem:[#allocation3 + $0x48] sm:$0xff] %vm371, 0.0
        %446 = vst.msk [vmem:[#allocation3 + $0x50] sm:$0xff] %vm371, 0.0
        %447 = vst.msk [vmem:[#allocation3 + $0x58] sm:$0xff] %vm371, 0.0
        %448 = vst.msk [vmem:[#allocation3 + $0x60] sm:$0xff] %vm371, 0.0
        %449 = vst.msk [vmem:[#allocation3 + $0x68] sm:$0xff] %vm371, 0.0
        %450 = vst.msk [vmem:[#allocation3 + $0x70] sm:$0xff] %vm371, 0.0
        %451 = vst.msk [vmem:[#allocation3 + $0x78] sm:$0xff] %vm371, 0.0
        %452 = vst.msk [vmem:[#allocation3 + $0x80] sm:$0xff] %vm371, 0.0
        %453 = vst.msk [vmem:[#allocation3 + $0x88] sm:$0xff] %vm371, 0.0
        %454 = vst.msk [vmem:[#allocation3 + $0x90] sm:$0xff] %vm371, 0.0
        %455 = vst.msk [vmem:[#allocation3 + $0x98] sm:$0xff] %vm371, 0.0
        %456 = vst.msk [vmem:[#allocation3 + $0xa0] sm:$0xff] %vm371, 0.0
        %457 = vst.msk [vmem:[#allocation3 + $0xa8] sm:$0xff] %vm371, 0.0
        %458 = vst.msk [vmem:[#allocation3 + $0xb0] sm:$0xff] %vm371, 0.0
        %459 = vst.msk [vmem:[#allocation3 + $0xb8] sm:$0xff] %vm371, 0.0
        %460 = vst.msk [vmem:[#allocation3 + $0xc0] sm:$0xff] %vm371, 0.0
        %461 = vst.msk [vmem:[#allocation3 + $0xc8] sm:$0xff] %vm371, 0.0
        %462 = vst.msk [vmem:[#allocation3 + $0xd0] sm:$0xff] %vm371, 0.0
        %463 = vst.msk [vmem:[#allocation3 + $0xd8] sm:$0xff] %vm371, 0.0
        %464 = vst.msk [vmem:[#allocation3 + $0xe0] sm:$0xff] %vm371, 0.0
        %465 = vst.msk [vmem:[#allocation3 + $0xe8] sm:$0xff] %vm371, 0.0
        %466 = vst.msk [vmem:[#allocation3 + $0xf0] sm:$0xff] %vm371, 0.0
        %467 = vst.msk [vmem:[#allocation3 + $0xf8] sm:$0xff] %vm371, 0.0
        %468 = vst.msk [vmem:[#allocation3 + $0x100] sm:$0xff] %vm371, 0.0
        %469 = vst.msk [vmem:[#allocation3 + $0x108] sm:$0xff] %vm371, 0.0
        %470 = vst.msk [vmem:[#allocation3 + $0x110] sm:$0xff] %vm371, 0.0
        %471 = vst.msk [vmem:[#allocation3 + $0x118] sm:$0xff] %vm371, 0.0
        %472 = vst.msk [vmem:[#allocation3 + $0x120] sm:$0xff] %vm371, 0.0
        %473 = vst.msk [vmem:[#allocation3 + $0x128] sm:$0xff] %vm371, 0.0
        %474 = vst.msk [vmem:[#allocation3 + $0x130] sm:$0xff] %vm371, 0.0
        %475 = vst.msk [vmem:[#allocation3 + $0x138] sm:$0xff] %vm371, 0.0
        %476 = vst.msk [vmem:[#allocation3 + $0x140] sm:$0xff] %vm371, 0.0
        %477 = vst.msk [vmem:[#allocation3 + $0x148] sm:$0xff] %vm371, 0.0
        %478 = vst.msk [vmem:[#allocation3 + $0x150] sm:$0xff] %vm371, 0.0
        %479 = vst.msk [vmem:[#allocation3 + $0x158] sm:$0xff] %vm371, 0.0
        %480 = vst.msk [vmem:[#allocation3 + $0x160] sm:$0xff] %vm371, 0.0
        %481 = vst.msk [vmem:[#allocation3 + $0x168] sm:$0xff] %vm371, 0.0
        %482 = vst.msk [vmem:[#allocation3 + $0x170] sm:$0xff] %vm371, 0.0
        %483 = vst.msk [vmem:[#allocation3 + $0x178] sm:$0xff] %vm371, 0.0
        %484 = vst.msk [vmem:[#allocation3 + $0x180] sm:$0xff] %vm371, 0.0
        %485 = vst.msk [vmem:[#allocation3 + $0x188] sm:$0xff] %vm371, 0.0
        %486 = vst.msk [vmem:[#allocation3 + $0x190] sm:$0xff] %vm371, 0.0
        %487 = vst.msk [vmem:[#allocation3 + $0x198] sm:$0xff] %vm371, 0.0
        %488 = vst.msk [vmem:[#allocation3 + $0x1a0] sm:$0xff] %vm371, 0.0
        %489 = vst.msk [vmem:[#allocation3 + $0x1a8] sm:$0xff] %vm371, 0.0
        %490 = vst.msk [vmem:[#allocation3 + $0x1b0] sm:$0xff] %vm371, 0.0
        %491 = vst.msk [vmem:[#allocation3 + $0x1b8] sm:$0xff] %vm371, 0.0
        %492 = vst.msk [vmem:[#allocation3 + $0x1c0] sm:$0xff] %vm371, 0.0
        %493 = vst.msk [vmem:[#allocation3 + $0x1c8] sm:$0xff] %vm371, 0.0
        %494 = vst.msk [vmem:[#allocation3 + $0x1d0] sm:$0xff] %vm371, 0.0
        %495 = vst.msk [vmem:[#allocation3 + $0x1d8] sm:$0xff] %vm371, 0.0
        %496 = vst.msk [vmem:[#allocation3 + $0x1e0] sm:$0xff] %vm371, 0.0
        %497 = vst.msk [vmem:[#allocation3 + $0x1e8] sm:$0xff] %vm371, 0.0
        %498 = vst.msk [vmem:[#allocation3 + $0x1f0] sm:$0xff] %vm371, 0.0
        %499 = vst.msk [vmem:[#allocation3 + $0x1f8] sm:$0xff] %vm371, 0.0
      $region52: #{tpu_custom_call.1} parent=47 // pred_fallthru
        _
      %v500 = vld [vmem:[%s343] sm:$0x77]
      %v501 = vld [vmem:[%s3] sm:$0xff]
      %v502 = vld [vmem:[%s3 + $0x8] sm:$0xff]
      %v503 = vld [vmem:[%s3 + $0x10] sm:$0xff]
      %v504 = vld [vmem:[%s3 + $0x18] sm:$0xff]
      %v505 = vld [vmem:[%s3 + $0x20] sm:$0xff]
      %v506 = vld [vmem:[%s3 + $0x28] sm:$0xff]
      %v507 = vld [vmem:[%s3 + $0x30] sm:$0xff]
      %v508 = vld [vmem:[%s3 + $0x38] sm:$0xff]
      %v509 = vld [vmem:[%s3 + $0x40] sm:$0xff]
      %v510 = vld [vmem:[%s3 + $0x48] sm:$0xff]
      %v511 = vld [vmem:[%s3 + $0x50] sm:$0xff]
      %v512 = vld [vmem:[%s3 + $0x58] sm:$0xff]
      %v513 = vld [vmem:[%s3 + $0x60] sm:$0xff]
      %v514 = vld [vmem:[%s3 + $0x68] sm:$0xff]
      %v515 = vld [vmem:[%s3 + $0x70] sm:$0xff]
      %v516 = vld [vmem:[%s3 + $0x78] sm:$0xff]
      %v517 = vld [vmem:[%s3 + $0x80] sm:$0xff]
      %v518 = vld [vmem:[%s3 + $0x88] sm:$0xff]
      %v519 = vld [vmem:[%s3 + $0x90] sm:$0xff]
      %v520 = vld [vmem:[%s3 + $0x98] sm:$0xff]
      %v521 = vld [vmem:[%s3 + $0xa0] sm:$0xff]
      %v522 = vld [vmem:[%s3 + $0xa8] sm:$0xff]
      %v523 = vld [vmem:[%s3 + $0xb0] sm:$0xff]
      %v524 = vld [vmem:[%s3 + $0xb8] sm:$0xff]
      %v525 = vld [vmem:[%s3 + $0xc0] sm:$0xff]
      %v526 = vld [vmem:[%s3 + $0xc8] sm:$0xff]
      %v527 = vld [vmem:[%s3 + $0xd0] sm:$0xff]
      %v528 = vld [vmem:[%s3 + $0xd8] sm:$0xff]
      %v529 = vld [vmem:[%s3 + $0xe0] sm:$0xff]
      %v530 = vld [vmem:[%s3 + $0xe8] sm:$0xff]
      %v531 = vld [vmem:[%s3 + $0xf0] sm:$0xff]
      %v532 = vld [vmem:[%s3 + $0xf8] sm:$0xff]
      %v533 = vld [vmem:[%s3 + $0x100] sm:$0xff]
      %v534 = vld [vmem:[%s3 + $0x108] sm:$0xff]
      %v535 = vld [vmem:[%s3 + $0x110] sm:$0xff]
      %v536 = vld [vmem:[%s3 + $0x118] sm:$0xff]
      %v537 = vld [vmem:[%s3 + $0x120] sm:$0xff]
      %v538 = vld [vmem:[%s3 + $0x128] sm:$0xff]
      %v539 = vld [vmem:[%s3 + $0x130] sm:$0xff]
      %v540 = vld [vmem:[%s3 + $0x138] sm:$0xff]
      %v541 = vld [vmem:[%s3 + $0x140] sm:$0xff]
      %v542 = vld [vmem:[%s3 + $0x148] sm:$0xff]
      %v543 = vld [vmem:[%s3 + $0x150] sm:$0xff]
      %v544 = vld [vmem:[%s3 + $0x158] sm:$0xff]
      %v545 = vld [vmem:[%s3 + $0x160] sm:$0xff]
      %v546 = vld [vmem:[%s3 + $0x168] sm:$0xff]
      %v547 = vld [vmem:[%s3 + $0x170] sm:$0xff]
      %v548 = vld [vmem:[%s3 + $0x178] sm:$0xff]
      %v549 = vld [vmem:[%s3 + $0x180] sm:$0xff]
      %v550 = vld [vmem:[%s3 + $0x188] sm:$0xff]
      %v551 = vld [vmem:[%s3 + $0x190] sm:$0xff]
      %v552 = vld [vmem:[%s3 + $0x198] sm:$0xff]
      %v553 = vld [vmem:[%s3 + $0x1a0] sm:$0xff]
      %v554 = vld [vmem:[%s3 + $0x1a8] sm:$0xff]
      %v555 = vld [vmem:[%s3 + $0x1b0] sm:$0xff]
      %v556 = vld [vmem:[%s3 + $0x1b8] sm:$0xff]
      %v557 = vld [vmem:[%s3 + $0x1c0] sm:$0xff]
      %v558 = vld [vmem:[%s3 + $0x1c8] sm:$0xff]
      %v559 = vld [vmem:[%s3 + $0x1d0] sm:$0xff]
      %v560 = vld [vmem:[%s3 + $0x1d8] sm:$0xff]
      %v561 = vld [vmem:[%s3 + $0x1e0] sm:$0xff]
      %v562 = vld [vmem:[%s3 + $0x1e8] sm:$0xff]
      %v563 = vld [vmem:[%s3 + $0x1f0] sm:$0xff]
      %v564 = vld [vmem:[%s3 + $0x1f8] sm:$0xff]
      %566 = vset.pattern.permute.xlu0 0
      %567 = vperm.xlu0 %566, %v501
      %v568 = vpop.permute.xlu0 %567
      %571 = vset.pattern.permute.xlu0 0
      %572 = vperm.xlu0 %571, %v502
      %v573 = vpop.permute.xlu0 %572
      %576 = vset.pattern.permute.xlu0 0
      %577 = vperm.xlu0 %576, %v503
      %v578 = vpop.permute.xlu0 %577
      %581 = vset.pattern.permute.xlu0 0
      %582 = vperm.xlu0 %581, %v504
      %v583 = vpop.permute.xlu0 %582
      %586 = vset.pattern.permute.xlu0 0
      %587 = vperm.xlu0 %586, %v505
      %v588 = vpop.permute.xlu0 %587
      %591 = vset.pattern.permute.xlu0 0
      %592 = vperm.xlu0 %591, %v506
      %v593 = vpop.permute.xlu0 %592
      %596 = vset.pattern.permute.xlu0 0
      %597 = vperm.xlu0 %596, %v507
      %v598 = vpop.permute.xlu0 %597
      %601 = vset.pattern.permute.xlu0 0
      %602 = vperm.xlu0 %601, %v508
      %v603 = vpop.permute.xlu0 %602
      %606 = vset.pattern.permute.xlu0 0
      %607 = vperm.xlu0 %606, %v509
      %v608 = vpop.permute.xlu0 %607
      %611 = vset.pattern.permute.xlu0 0
      %612 = vperm.xlu0 %611, %v510
      %v613 = vpop.permute.xlu0 %612
      %616 = vset.pattern.permute.xlu0 0
      %617 = vperm.xlu0 %616, %v511
      %v618 = vpop.permute.xlu0 %617
      %621 = vset.pattern.permute.xlu0 0
      %622 = vperm.xlu0 %621, %v512
      %v623 = vpop.permute.xlu0 %622
      %626 = vset.pattern.permute.xlu0 0
      %627 = vperm.xlu0 %626, %v513
      %v628 = vpop.permute.xlu0 %627
      %631 = vset.pattern.permute.xlu0 0
      %632 = vperm.xlu0 %631, %v514
      %v633 = vpop.permute.xlu0 %632
      %636 = vset.pattern.permute.xlu0 0
      %637 = vperm.xlu0 %636, %v515
      %v638 = vpop.permute.xlu0 %637
      %641 = vset.pattern.permute.xlu0 0
      %642 = vperm.xlu0 %641, %v516
      %v643 = vpop.permute.xlu0 %642
      %646 = vset.pattern.permute.xlu0 0
      %647 = vperm.xlu0 %646, %v517
      %v648 = vpop.permute.xlu0 %647
      %651 = vset.pattern.permute.xlu0 0
      %652 = vperm.xlu0 %651, %v518
      %v653 = vpop.permute.xlu0 %652
      %656 = vset.pattern.permute.xlu0 0
      %657 = vperm.xlu0 %656, %v519
      %v658 = vpop.permute.xlu0 %657
      %661 = vset.pattern.permute.xlu0 0
      %662 = vperm.xlu0 %661, %v520
      %v663 = vpop.permute.xlu0 %662
      %666 = vset.pattern.permute.xlu0 0
      %667 = vperm.xlu0 %666, %v521
      %v668 = vpop.permute.xlu0 %667
      %671 = vset.pattern.permute.xlu0 0
      %672 = vperm.xlu0 %671, %v522
      %v673 = vpop.permute.xlu0 %672
      %676 = vset.pattern.permute.xlu0 0
      %677 = vperm.xlu0 %676, %v523
      %v678 = vpop.permute.xlu0 %677
      %681 = vset.pattern.permute.xlu0 0
      %682 = vperm.xlu0 %681, %v524
      %v683 = vpop.permute.xlu0 %682
      %686 = vset.pattern.permute.xlu0 0
      %687 = vperm.xlu0 %686, %v525
      %v688 = vpop.permute.xlu0 %687
      %691 = vset.pattern.permute.xlu0 0
      %692 = vperm.xlu0 %691, %v526
      %v693 = vpop.permute.xlu0 %692
      %696 = vset.pattern.permute.xlu0 0
      %697 = vperm.xlu0 %696, %v527
      %v698 = vpop.permute.xlu0 %697
      %701 = vset.pattern.permute.xlu0 0
      %702 = vperm.xlu0 %701, %v528
      %v703 = vpop.permute.xlu0 %702
      %706 = vset.pattern.permute.xlu0 0
      %707 = vperm.xlu0 %706, %v529
      %v708 = vpop.permute.xlu0 %707
      %711 = vset.pattern.permute.xlu0 0
      %712 = vperm.xlu0 %711, %v530
      %v713 = vpop.permute.xlu0 %712
      %716 = vset.pattern.permute.xlu0 0
      %717 = vperm.xlu0 %716, %v531
      %v718 = vpop.permute.xlu0 %717
      %721 = vset.pattern.permute.xlu0 0
      %722 = vperm.xlu0 %721, %v532
      %v723 = vpop.permute.xlu0 %722
      %726 = vset.pattern.permute.xlu0 0
      %727 = vperm.xlu0 %726, %v533
      %v728 = vpop.permute.xlu0 %727
      %731 = vset.pattern.permute.xlu0 0
      %732 = vperm.xlu0 %731, %v534
      %v733 = vpop.permute.xlu0 %732
      %736 = vset.pattern.permute.xlu0 0
      %737 = vperm.xlu0 %736, %v535
      %v738 = vpop.permute.xlu0 %737
      %741 = vset.pattern.permute.xlu0 0
      %742 = vperm.xlu0 %741, %v536
      %v743 = vpop.permute.xlu0 %742
      %746 = vset.pattern.permute.xlu0 0
      %747 = vperm.xlu0 %746, %v537
      %v748 = vpop.permute.xlu0 %747
      %751 = vset.pattern.permute.xlu0 0
      %752 = vperm.xlu0 %751, %v538
      %v753 = vpop.permute.xlu0 %752
      %756 = vset.pattern.permute.xlu0 0
      %757 = vperm.xlu0 %756, %v539
      %v758 = vpop.permute.xlu0 %757
      %761 = vset.pattern.permute.xlu0 0
      %762 = vperm.xlu0 %761, %v540
      %v763 = vpop.permute.xlu0 %762
      %766 = vset.pattern.permute.xlu0 0
      %767 = vperm.xlu0 %766, %v541
      %v768 = vpop.permute.xlu0 %767
      %771 = vset.pattern.permute.xlu0 0
      %772 = vperm.xlu0 %771, %v542
      %v773 = vpop.permute.xlu0 %772
      %776 = vset.pattern.permute.xlu0 0
      %777 = vperm.xlu0 %776, %v543
      %v778 = vpop.permute.xlu0 %777
      %781 = vset.pattern.permute.xlu0 0
      %782 = vperm.xlu0 %781, %v544
      %v783 = vpop.permute.xlu0 %782
      %786 = vset.pattern.permute.xlu0 0
      %787 = vperm.xlu0 %786, %v545
      %v788 = vpop.permute.xlu0 %787
      %791 = vset.pattern.permute.xlu0 0
      %792 = vperm.xlu0 %791, %v546
      %v793 = vpop.permute.xlu0 %792
      %796 = vset.pattern.permute.xlu0 0
      %797 = vperm.xlu0 %796, %v547
      %v798 = vpop.permute.xlu0 %797
      %801 = vset.pattern.permute.xlu0 0
      %802 = vperm.xlu0 %801, %v548
      %v803 = vpop.permute.xlu0 %802
      %806 = vset.pattern.permute.xlu0 0
      %807 = vperm.xlu0 %806, %v549
      %v808 = vpop.permute.xlu0 %807
      %811 = vset.pattern.permute.xlu0 0
      %812 = vperm.xlu0 %811, %v550
      %v813 = vpop.permute.xlu0 %812
      %816 = vset.pattern.permute.xlu0 0
      %817 = vperm.xlu0 %816, %v551
      %v818 = vpop.permute.xlu0 %817
      %821 = vset.pattern.permute.xlu0 0
      %822 = vperm.xlu0 %821, %v552
      %v823 = vpop.permute.xlu0 %822
      %826 = vset.pattern.permute.xlu0 0
      %827 = vperm.xlu0 %826, %v553
      %v828 = vpop.permute.xlu0 %827
      %831 = vset.pattern.permute.xlu0 0
      %832 = vperm.xlu0 %831, %v554
      %v833 = vpop.permute.xlu0 %832
      %836 = vset.pattern.permute.xlu0 0
      %837 = vperm.xlu0 %836, %v555
      %v838 = vpop.permute.xlu0 %837
      %841 = vset.pattern.permute.xlu0 0
      %842 = vperm.xlu0 %841, %v556
      %v843 = vpop.permute.xlu0 %842
      %846 = vset.pattern.permute.xlu0 0
      %847 = vperm.xlu0 %846, %v557
      %v848 = vpop.permute.xlu0 %847
      %851 = vset.pattern.permute.xlu0 0
      %852 = vperm.xlu0 %851, %v558
      %v853 = vpop.permute.xlu0 %852
      %856 = vset.pattern.permute.xlu0 0
      %857 = vperm.xlu0 %856, %v559
      %v858 = vpop.permute.xlu0 %857
      %861 = vset.pattern.permute.xlu0 0
      %862 = vperm.xlu0 %861, %v560
      %v863 = vpop.permute.xlu0 %862
      %866 = vset.pattern.permute.xlu0 0
      %867 = vperm.xlu0 %866, %v561
      %v868 = vpop.permute.xlu0 %867
      %871 = vset.pattern.permute.xlu0 0
      %872 = vperm.xlu0 %871, %v562
      %v873 = vpop.permute.xlu0 %872
      %876 = vset.pattern.permute.xlu0 0
      %877 = vperm.xlu0 %876, %v563
      %v878 = vpop.permute.xlu0 %877
      %881 = vset.pattern.permute.xlu0 0
      %882 = vperm.xlu0 %881, %v564
      %v883 = vpop.permute.xlu0 %882
      %v886 = vlaneseq
      %v887 = vshrl.u32 %v886, 7
      %v888 = vsub.s32 0, %v887
      %v889 = vrot.slane %v500, %v888
      %v890 = vlaneseq
      %v891 = vshrl.u32 %v890, 7
      %v892 = vsub.s32 4, %v891
      %v893 = vrot.slane %v500, %v892
      %v896 = vlaneseq
      %v897 = vshrl.u32 %v896, 7
      %v898 = vsub.s32 0, %v897
      %v899 = vrot.slane %v889, %v898
      %v900 = vlaneseq
      %v901 = vshrl.u32 %v900, 7
      %v902 = vsub.s32 0, %v901
      %v903 = vrot.slane %v893, %v902
      %v904 = vmul.f32 %v568, %v899
      %v905 = vmul.f32 %v568, %v903
      %v906 = vmul.f32 %v573, %v899
      %v907 = vmul.f32 %v573, %v903
      %v908 = vmul.f32 %v578, %v899
      %v909 = vmul.f32 %v578, %v903
      %v910 = vmul.f32 %v583, %v899
      %v911 = vmul.f32 %v583, %v903
      %v912 = vmul.f32 %v588, %v899
      %v913 = vmul.f32 %v588, %v903
      %v914 = vmul.f32 %v593, %v899
      %v915 = vmul.f32 %v593, %v903
      %v916 = vmul.f32 %v598, %v899
      %v917 = vmul.f32 %v598, %v903
      %v918 = vmul.f32 %v603, %v899
      %v919 = vmul.f32 %v603, %v903
      %v920 = vmul.f32 %v608, %v899
      %v921 = vmul.f32 %v608, %v903
      %v922 = vmul.f32 %v613, %v899
      %v923 = vmul.f32 %v613, %v903
      %v924 = vmul.f32 %v618, %v899
      %v925 = vmul.f32 %v618, %v903
      %v926 = vmul.f32 %v623, %v899
      %v927 = vmul.f32 %v623, %v903
      %v928 = vmul.f32 %v628, %v899
      %v929 = vmul.f32 %v628, %v903
      %v930 = vmul.f32 %v633, %v899
      %v931 = vmul.f32 %v633, %v903
      %v932 = vmul.f32 %v638, %v899
      %v933 = vmul.f32 %v638, %v903
      %v934 = vmul.f32 %v643, %v899
      %v935 = vmul.f32 %v643, %v903
      %v936 = vmul.f32 %v648, %v899
      %v937 = vmul.f32 %v648, %v903
      %v938 = vmul.f32 %v653, %v899
      %v939 = vmul.f32 %v653, %v903
      %v940 = vmul.f32 %v658, %v899
      %v941 = vmul.f32 %v658, %v903
      %v942 = vmul.f32 %v663, %v899
      %v943 = vmul.f32 %v663, %v903
      %v944 = vmul.f32 %v668, %v899
      %v945 = vmul.f32 %v668, %v903
      %v946 = vmul.f32 %v673, %v899
      %v947 = vmul.f32 %v673, %v903
      %v948 = vmul.f32 %v678, %v899
      %v949 = vmul.f32 %v678, %v903
      %v950 = vmul.f32 %v683, %v899
      %v951 = vmul.f32 %v683, %v903
      %v952 = vmul.f32 %v688, %v899
      %v953 = vmul.f32 %v688, %v903
      %v954 = vmul.f32 %v693, %v899
      %v955 = vmul.f32 %v693, %v903
      %v956 = vmul.f32 %v698, %v899
      %v957 = vmul.f32 %v698, %v903
      %v958 = vmul.f32 %v703, %v899
      %v959 = vmul.f32 %v703, %v903
      %v960 = vmul.f32 %v708, %v899
      %v961 = vmul.f32 %v708, %v903
      %v962 = vmul.f32 %v713, %v899
      %v963 = vmul.f32 %v713, %v903
      %v964 = vmul.f32 %v718, %v899
      %v965 = vmul.f32 %v718, %v903
      %v966 = vmul.f32 %v723, %v899
      %v967 = vmul.f32 %v723, %v903
      %v968 = vmul.f32 %v728, %v899
      %v969 = vmul.f32 %v728, %v903
      %v970 = vmul.f32 %v733, %v899
      %v971 = vmul.f32 %v733, %v903
      %v972 = vmul.f32 %v738, %v899
      %v973 = vmul.f32 %v738, %v903
      %v974 = vmul.f32 %v743, %v899
      %v975 = vmul.f32 %v743, %v903
      %v976 = vmul.f32 %v748, %v899
      %v977 = vmul.f32 %v748, %v903
      %v978 = vmul.f32 %v753, %v899
      %v979 = vmul.f32 %v753, %v903
      %v980 = vmul.f32 %v758, %v899
      %v981 = vmul.f32 %v758, %v903
      %v982 = vmul.f32 %v763, %v899
      %v983 = vmul.f32 %v763, %v903
      %v984 = vmul.f32 %v768, %v899
      %v985 = vmul.f32 %v768, %v903
      %v986 = vmul.f32 %v773, %v899
      %v987 = vmul.f32 %v773, %v903
      %v988 = vmul.f32 %v778, %v899
      %v989 = vmul.f32 %v778, %v903
      %v990 = vmul.f32 %v783, %v899
      %v991 = vmul.f32 %v783, %v903
      %v992 = vmul.f32 %v788, %v899
      %v993 = vmul.f32 %v788, %v903
      %v994 = vmul.f32 %v793, %v899
      %v995 = vmul.f32 %v793, %v903
      %v996 = vmul.f32 %v798, %v899
      %v997 = vmul.f32 %v798, %v903
      %v998 = vmul.f32 %v803, %v899
      %v999 = vmul.f32 %v803, %v903
      %v1000 = vmul.f32 %v808, %v899
      %v1001 = vmul.f32 %v808, %v903
      %v1002 = vmul.f32 %v813, %v899
      %v1003 = vmul.f32 %v813, %v903
      %v1004 = vmul.f32 %v818, %v899
      %v1005 = vmul.f32 %v818, %v903
      %v1006 = vmul.f32 %v823, %v899
      %v1007 = vmul.f32 %v823, %v903
      %v1008 = vmul.f32 %v828, %v899
      %v1009 = vmul.f32 %v828, %v903
      %v1010 = vmul.f32 %v833, %v899
      %v1011 = vmul.f32 %v833, %v903
      %v1012 = vmul.f32 %v838, %v899
      %v1013 = vmul.f32 %v838, %v903
      %v1014 = vmul.f32 %v843, %v899
      %v1015 = vmul.f32 %v843, %v903
      %v1016 = vmul.f32 %v848, %v899
      %v1017 = vmul.f32 %v848, %v903
      %v1018 = vmul.f32 %v853, %v899
      %v1019 = vmul.f32 %v853, %v903
      %v1020 = vmul.f32 %v858, %v899
      %v1021 = vmul.f32 %v858, %v903
      %v1022 = vmul.f32 %v863, %v899
      %v1023 = vmul.f32 %v863, %v903
      %v1024 = vmul.f32 %v868, %v899
      %v1025 = vmul.f32 %v868, %v903
      %v1026 = vmul.f32 %v873, %v899
      %v1027 = vmul.f32 %v873, %v903
      %v1028 = vmul.f32 %v878, %v899
      %v1029 = vmul.f32 %v878, %v903
      %v1030 = vmul.f32 %v883, %v899
      %v1031 = vmul.f32 %v883, %v903
      %s1032 = scalar_lea.vmem %s3, 512
      %v1033 = vld [vmem:[%s1032] sm:$0xff]
      %v1034 = vld [vmem:[%s1032 + $0x8] sm:$0xff]
      %v1035 = vld [vmem:[%s1032 + $0x10] sm:$0xff]
      %v1036 = vld [vmem:[%s1032 + $0x18] sm:$0xff]
      %v1037 = vld [vmem:[%s1032 + $0x20] sm:$0xff]
      %v1038 = vld [vmem:[%s1032 + $0x28] sm:$0xff]
      %v1039 = vld [vmem:[%s1032 + $0x30] sm:$0xff]
      %v1040 = vld [vmem:[%s1032 + $0x38] sm:$0xff]
      %v1041 = vld [vmem:[%s1032 + $0x40] sm:$0xff]
      %v1042 = vld [vmem:[%s1032 + $0x48] sm:$0xff]
      %v1043 = vld [vmem:[%s1032 + $0x50] sm:$0xff]
      %v1044 = vld [vmem:[%s1032 + $0x58] sm:$0xff]
      %v1045 = vld [vmem:[%s1032 + $0x60] sm:$0xff]
      %v1046 = vld [vmem:[%s1032 + $0x68] sm:$0xff]
      %v1047 = vld [vmem:[%s1032 + $0x70] sm:$0xff]
      %v1048 = vld [vmem:[%s1032 + $0x78] sm:$0xff]
      %v1049 = vld [vmem:[%s1032 + $0x80] sm:$0xff]
      %v1050 = vld [vmem:[%s1032 + $0x88] sm:$0xff]
      %v1051 = vld [vmem:[%s1032 + $0x90] sm:$0xff]
      %v1052 = vld [vmem:[%s1032 + $0x98] sm:$0xff]
      %v1053 = vld [vmem:[%s1032 + $0xa0] sm:$0xff]
      %v1054 = vld [vmem:[%s1032 + $0xa8] sm:$0xff]
      %v1055 = vld [vmem:[%s1032 + $0xb0] sm:$0xff]
      %v1056 = vld [vmem:[%s1032 + $0xb8] sm:$0xff]
      %v1057 = vld [vmem:[%s1032 + $0xc0] sm:$0xff]
      %v1058 = vld [vmem:[%s1032 + $0xc8] sm:$0xff]
      %v1059 = vld [vmem:[%s1032 + $0xd0] sm:$0xff]
      %v1060 = vld [vmem:[%s1032 + $0xd8] sm:$0xff]
      %v1061 = vld [vmem:[%s1032 + $0xe0] sm:$0xff]
      %v1062 = vld [vmem:[%s1032 + $0xe8] sm:$0xff]
      %v1063 = vld [vmem:[%s1032 + $0xf0] sm:$0xff]
      %v1064 = vld [vmem:[%s1032 + $0xf8] sm:$0xff]
      %v1065 = vld [vmem:[%s1032 + $0x100] sm:$0xff]
      %v1066 = vld [vmem:[%s1032 + $0x108] sm:$0xff]
      %v1067 = vld [vmem:[%s1032 + $0x110] sm:$0xff]
      %v1068 = vld [vmem:[%s1032 + $0x118] sm:$0xff]
      %v1069 = vld [vmem:[%s1032 + $0x120] sm:$0xff]
      %v1070 = vld [vmem:[%s1032 + $0x128] sm:$0xff]
      %v1071 = vld [vmem:[%s1032 + $0x130] sm:$0xff]
      %v1072 = vld [vmem:[%s1032 + $0x138] sm:$0xff]
      %v1073 = vld [vmem:[%s1032 + $0x140] sm:$0xff]
      %v1074 = vld [vmem:[%s1032 + $0x148] sm:$0xff]
      %v1075 = vld [vmem:[%s1032 + $0x150] sm:$0xff]
      %v1076 = vld [vmem:[%s1032 + $0x158] sm:$0xff]
      %v1077 = vld [vmem:[%s1032 + $0x160] sm:$0xff]
      %v1078 = vld [vmem:[%s1032 + $0x168] sm:$0xff]
      %v1079 = vld [vmem:[%s1032 + $0x170] sm:$0xff]
      %v1080 = vld [vmem:[%s1032 + $0x178] sm:$0xff]
      %v1081 = vld [vmem:[%s1032 + $0x180] sm:$0xff]
      %v1082 = vld [vmem:[%s1032 + $0x188] sm:$0xff]
      %v1083 = vld [vmem:[%s1032 + $0x190] sm:$0xff]
      %v1084 = vld [vmem:[%s1032 + $0x198] sm:$0xff]
      %v1085 = vld [vmem:[%s1032 + $0x1a0] sm:$0xff]
      %v1086 = vld [vmem:[%s1032 + $0x1a8] sm:$0xff]
      %v1087 = vld [vmem:[%s1032 + $0x1b0] sm:$0xff]
      %v1088 = vld [vmem:[%s1032 + $0x1b8] sm:$0xff]
      %v1089 = vld [vmem:[%s1032 + $0x1c0] sm:$0xff]
      %v1090 = vld [vmem:[%s1032 + $0x1c8] sm:$0xff]
      %v1091 = vld [vmem:[%s1032 + $0x1d0] sm:$0xff]
      %v1092 = vld [vmem:[%s1032 + $0x1d8] sm:$0xff]
      %v1093 = vld [vmem:[%s1032 + $0x1e0] sm:$0xff]
      %v1094 = vld [vmem:[%s1032 + $0x1e8] sm:$0xff]
      %v1095 = vld [vmem:[%s1032 + $0x1f0] sm:$0xff]
      %v1096 = vld [vmem:[%s1032 + $0x1f8] sm:$0xff]
      %1098 = vset.pattern.permute.xlu0 0
      %1099 = vperm.xlu0 %1098, %v1033
      %v1100 = vpop.permute.xlu0 %1099
      %1103 = vset.pattern.permute.xlu0 0
      %1104 = vperm.xlu0 %1103, %v1034
      %v1105 = vpop.permute.xlu0 %1104
      %1108 = vset.pattern.permute.xlu0 0
      %1109 = vperm.xlu0 %1108, %v1035
      %v1110 = vpop.permute.xlu0 %1109
      %1113 = vset.pattern.permute.xlu0 0
      %1114 = vperm.xlu0 %1113, %v1036
      %v1115 = vpop.permute.xlu0 %1114
      %1118 = vset.pattern.permute.xlu0 0
      %1119 = vperm.xlu0 %1118, %v1037
      %v1120 = vpop.permute.xlu0 %1119
      %1123 = vset.pattern.permute.xlu0 0
      %1124 = vperm.xlu0 %1123, %v1038
      %v1125 = vpop.permute.xlu0 %1124
      %1128 = vset.pattern.permute.xlu0 0
      %1129 = vperm.xlu0 %1128, %v1039
      %v1130 = vpop.permute.xlu0 %1129
      %1133 = vset.pattern.permute.xlu0 0
      %1134 = vperm.xlu0 %1133, %v1040
      %v1135 = vpop.permute.xlu0 %1134
      %1138 = vset.pattern.permute.xlu0 0
      %1139 = vperm.xlu0 %1138, %v1041
      %v1140 = vpop.permute.xlu0 %1139
      %1143 = vset.pattern.permute.xlu0 0
      %1144 = vperm.xlu0 %1143, %v1042
      %v1145 = vpop.permute.xlu0 %1144
      %1148 = vset.pattern.permute.xlu0 0
      %1149 = vperm.xlu0 %1148, %v1043
      %v1150 = vpop.permute.xlu0 %1149
      %1153 = vset.pattern.permute.xlu0 0
      %1154 = vperm.xlu0 %1153, %v1044
      %v1155 = vpop.permute.xlu0 %1154
      %1158 = vset.pattern.permute.xlu0 0
      %1159 = vperm.xlu0 %1158, %v1045
      %v1160 = vpop.permute.xlu0 %1159
      %1163 = vset.pattern.permute.xlu0 0
      %1164 = vperm.xlu0 %1163, %v1046
      %v1165 = vpop.permute.xlu0 %1164
      %1168 = vset.pattern.permute.xlu0 0
      %1169 = vperm.xlu0 %1168, %v1047
      %v1170 = vpop.permute.xlu0 %1169
      %1173 = vset.pattern.permute.xlu0 0
      %1174 = vperm.xlu0 %1173, %v1048
      %v1175 = vpop.permute.xlu0 %1174
      %1178 = vset.pattern.permute.xlu0 0
      %1179 = vperm.xlu0 %1178, %v1049
      %v1180 = vpop.permute.xlu0 %1179
      %1183 = vset.pattern.permute.xlu0 0
      %1184 = vperm.xlu0 %1183, %v1050
      %v1185 = vpop.permute.xlu0 %1184
      %1188 = vset.pattern.permute.xlu0 0
      %1189 = vperm.xlu0 %1188, %v1051
      %v1190 = vpop.permute.xlu0 %1189
      %1193 = vset.pattern.permute.xlu0 0
      %1194 = vperm.xlu0 %1193, %v1052
      %v1195 = vpop.permute.xlu0 %1194
      %1198 = vset.pattern.permute.xlu0 0
      %1199 = vperm.xlu0 %1198, %v1053
      %v1200 = vpop.permute.xlu0 %1199
      %1203 = vset.pattern.permute.xlu0 0
      %1204 = vperm.xlu0 %1203, %v1054
      %v1205 = vpop.permute.xlu0 %1204
      %1208 = vset.pattern.permute.xlu0 0
      %1209 = vperm.xlu0 %1208, %v1055
      %v1210 = vpop.permute.xlu0 %1209
      %1213 = vset.pattern.permute.xlu0 0
      %1214 = vperm.xlu0 %1213, %v1056
      %v1215 = vpop.permute.xlu0 %1214
      %1218 = vset.pattern.permute.xlu0 0
      %1219 = vperm.xlu0 %1218, %v1057
      %v1220 = vpop.permute.xlu0 %1219
      %1223 = vset.pattern.permute.xlu0 0
      %1224 = vperm.xlu0 %1223, %v1058
      %v1225 = vpop.permute.xlu0 %1224
      %1228 = vset.pattern.permute.xlu0 0
      %1229 = vperm.xlu0 %1228, %v1059
      %v1230 = vpop.permute.xlu0 %1229
      %1233 = vset.pattern.permute.xlu0 0
      %1234 = vperm.xlu0 %1233, %v1060
      %v1235 = vpop.permute.xlu0 %1234
      %1238 = vset.pattern.permute.xlu0 0
      %1239 = vperm.xlu0 %1238, %v1061
      %v1240 = vpop.permute.xlu0 %1239
      %1243 = vset.pattern.permute.xlu0 0
      %1244 = vperm.xlu0 %1243, %v1062
      %v1245 = vpop.permute.xlu0 %1244
      %1248 = vset.pattern.permute.xlu0 0
      %1249 = vperm.xlu0 %1248, %v1063
      %v1250 = vpop.permute.xlu0 %1249
      %1253 = vset.pattern.permute.xlu0 0
      %1254 = vperm.xlu0 %1253, %v1064
      %v1255 = vpop.permute.xlu0 %1254
      %1258 = vset.pattern.permute.xlu0 0
      %1259 = vperm.xlu0 %1258, %v1065
      %v1260 = vpop.permute.xlu0 %1259
      %1263 = vset.pattern.permute.xlu0 0
      %1264 = vperm.xlu0 %1263, %v1066
      %v1265 = vpop.permute.xlu0 %1264
      %1268 = vset.pattern.permute.xlu0 0
      %1269 = vperm.xlu0 %1268, %v1067
      %v1270 = vpop.permute.xlu0 %1269
      %1273 = vset.pattern.permute.xlu0 0
      %1274 = vperm.xlu0 %1273, %v1068
      %v1275 = vpop.permute.xlu0 %1274
      %1278 = vset.pattern.permute.xlu0 0
      %1279 = vperm.xlu0 %1278, %v1069
      %v1280 = vpop.permute.xlu0 %1279
      %1283 = vset.pattern.permute.xlu0 0
      %1284 = vperm.xlu0 %1283, %v1070
      %v1285 = vpop.permute.xlu0 %1284
      %1288 = vset.pattern.permute.xlu0 0
      %1289 = vperm.xlu0 %1288, %v1071
      %v1290 = vpop.permute.xlu0 %1289
      %1293 = vset.pattern.permute.xlu0 0
      %1294 = vperm.xlu0 %1293, %v1072
      %v1295 = vpop.permute.xlu0 %1294
      %1298 = vset.pattern.permute.xlu0 0
      %1299 = vperm.xlu0 %1298, %v1073
      %v1300 = vpop.permute.xlu0 %1299
      %1303 = vset.pattern.permute.xlu0 0
      %1304 = vperm.xlu0 %1303, %v1074
      %v1305 = vpop.permute.xlu0 %1304
      %1308 = vset.pattern.permute.xlu0 0
      %1309 = vperm.xlu0 %1308, %v1075
      %v1310 = vpop.permute.xlu0 %1309
      %1313 = vset.pattern.permute.xlu0 0
      %1314 = vperm.xlu0 %1313, %v1076
      %v1315 = vpop.permute.xlu0 %1314
      %1318 = vset.pattern.permute.xlu0 0
      %1319 = vperm.xlu0 %1318, %v1077
      %v1320 = vpop.permute.xlu0 %1319
      %1323 = vset.pattern.permute.xlu0 0
      %1324 = vperm.xlu0 %1323, %v1078
      %v1325 = vpop.permute.xlu0 %1324
      %1328 = vset.pattern.permute.xlu0 0
      %1329 = vperm.xlu0 %1328, %v1079
      %v1330 = vpop.permute.xlu0 %1329
      %1333 = vset.pattern.permute.xlu0 0
      %1334 = vperm.xlu0 %1333, %v1080
      %v1335 = vpop.permute.xlu0 %1334
      %1338 = vset.pattern.permute.xlu0 0
      %1339 = vperm.xlu0 %1338, %v1081
      %v1340 = vpop.permute.xlu0 %1339
      %1343 = vset.pattern.permute.xlu0 0
      %1344 = vperm.xlu0 %1343, %v1082
      %v1345 = vpop.permute.xlu0 %1344
      %1348 = vset.pattern.permute.xlu0 0
      %1349 = vperm.xlu0 %1348, %v1083
      %v1350 = vpop.permute.xlu0 %1349
      %1353 = vset.pattern.permute.xlu0 0
      %1354 = vperm.xlu0 %1353, %v1084
      %v1355 = vpop.permute.xlu0 %1354
      %1358 = vset.pattern.permute.xlu0 0
      %1359 = vperm.xlu0 %1358, %v1085
      %v1360 = vpop.permute.xlu0 %1359
      %1363 = vset.pattern.permute.xlu0 0
      %1364 = vperm.xlu0 %1363, %v1086
      %v1365 = vpop.permute.xlu0 %1364
      %1368 = vset.pattern.permute.xlu0 0
      %1369 = vperm.xlu0 %1368, %v1087
      %v1370 = vpop.permute.xlu0 %1369
      %1373 = vset.pattern.permute.xlu0 0
      %1374 = vperm.xlu0 %1373, %v1088
      %v1375 = vpop.permute.xlu0 %1374
      %1378 = vset.pattern.permute.xlu0 0
      %1379 = vperm.xlu0 %1378, %v1089
      %v1380 = vpop.permute.xlu0 %1379
      %1383 = vset.pattern.permute.xlu0 0
      %1384 = vperm.xlu0 %1383, %v1090
      %v1385 = vpop.permute.xlu0 %1384
      %1388 = vset.pattern.permute.xlu0 0
      %1389 = vperm.xlu0 %1388, %v1091
      %v1390 = vpop.permute.xlu0 %1389
      %1393 = vset.pattern.permute.xlu0 0
      %1394 = vperm.xlu0 %1393, %v1092
      %v1395 = vpop.permute.xlu0 %1394
      %1398 = vset.pattern.permute.xlu0 0
      %1399 = vperm.xlu0 %1398, %v1093
      %v1400 = vpop.permute.xlu0 %1399
      %1403 = vset.pattern.permute.xlu0 0
      %1404 = vperm.xlu0 %1403, %v1094
      %v1405 = vpop.permute.xlu0 %1404
      %1408 = vset.pattern.permute.xlu0 0
      %1409 = vperm.xlu0 %1408, %v1095
      %v1410 = vpop.permute.xlu0 %1409
      %1413 = vset.pattern.permute.xlu0 0
      %1414 = vperm.xlu0 %1413, %v1096
      %v1415 = vpop.permute.xlu0 %1414
      %v1417 = vlaneseq
      %v1418 = vshrl.u32 %v1417, 7
      %v1419 = vsub.s32 1, %v1418
      %v1420 = vrot.slane %v500, %v1419
      %v1421 = vlaneseq
      %v1422 = vshrl.u32 %v1421, 7
      %v1423 = vsub.s32 5, %v1422
      %v1424 = vrot.slane %v500, %v1423
      %v1427 = vlaneseq
      %v1428 = vshrl.u32 %v1427, 7
      %v1429 = vsub.s32 1, %v1428
      %v1430 = vrot.slane %v1420, %v1429
      %v1431 = vlaneseq
      %v1432 = vshrl.u32 %v1431, 7
      %v1433 = vsub.s32 1, %v1432
      %v1434 = vrot.slane %v1424, %v1433
      %v1435 = vmul.f32 %v1100, %v1430
      %v1436 = vmul.f32 %v1100, %v1434
      %v1437 = vmul.f32 %v1105, %v1430
      %v1438 = vmul.f32 %v1105, %v1434
      %v1439 = vmul.f32 %v1110, %v1430
      %v1440 = vmul.f32 %v1110, %v1434
      %v1441 = vmul.f32 %v1115, %v1430
      %v1442 = vmul.f32 %v1115, %v1434
      %v1443 = vmul.f32 %v1120, %v1430
      %v1444 = vmul.f32 %v1120, %v1434
      %v1445 = vmul.f32 %v1125, %v1430
      %v1446 = vmul.f32 %v1125, %v1434
      %v1447 = vmul.f32 %v1130, %v1430
      %v1448 = vmul.f32 %v1130, %v1434
      %v1449 = vmul.f32 %v1135, %v1430
      %v1450 = vmul.f32 %v1135, %v1434
      %v1451 = vmul.f32 %v1140, %v1430
      %v1452 = vmul.f32 %v1140, %v1434
      %v1453 = vmul.f32 %v1145, %v1430
      %v1454 = vmul.f32 %v1145, %v1434
      %v1455 = vmul.f32 %v1150, %v1430
      %v1456 = vmul.f32 %v1150, %v1434
      %v1457 = vmul.f32 %v1155, %v1430
      %v1458 = vmul.f32 %v1155, %v1434
      %v1459 = vmul.f32 %v1160, %v1430
      %v1460 = vmul.f32 %v1160, %v1434
      %v1461 = vmul.f32 %v1165, %v1430
      %v1462 = vmul.f32 %v1165, %v1434
      %v1463 = vmul.f32 %v1170, %v1430
      %v1464 = vmul.f32 %v1170, %v1434
      %v1465 = vmul.f32 %v1175, %v1430
      %v1466 = vmul.f32 %v1175, %v1434
      %v1467 = vmul.f32 %v1180, %v1430
      %v1468 = vmul.f32 %v1180, %v1434
      %v1469 = vmul.f32 %v1185, %v1430
      %v1470 = vmul.f32 %v1185, %v1434
      %v1471 = vmul.f32 %v1190, %v1430
      %v1472 = vmul.f32 %v1190, %v1434
      %v1473 = vmul.f32 %v1195, %v1430
      %v1474 = vmul.f32 %v1195, %v1434
      %v1475 = vmul.f32 %v1200, %v1430
      %v1476 = vmul.f32 %v1200, %v1434
      %v1477 = vmul.f32 %v1205, %v1430
      %v1478 = vmul.f32 %v1205, %v1434
      %v1479 = vmul.f32 %v1210, %v1430
      %v1480 = vmul.f32 %v1210, %v1434
      %v1481 = vmul.f32 %v1215, %v1430
      %v1482 = vmul.f32 %v1215, %v1434
      %v1483 = vmul.f32 %v1220, %v1430
      %v1484 = vmul.f32 %v1220, %v1434
      %v1485 = vmul.f32 %v1225, %v1430
      %v1486 = vmul.f32 %v1225, %v1434
      %v1487 = vmul.f32 %v1230, %v1430
      %v1488 = vmul.f32 %v1230, %v1434
      %v1489 = vmul.f32 %v1235, %v1430
      %v1490 = vmul.f32 %v1235, %v1434
      %v1491 = vmul.f32 %v1240, %v1430
      %v1492 = vmul.f32 %v1240, %v1434
      %v1493 = vmul.f32 %v1245, %v1430
      %v1494 = vmul.f32 %v1245, %v1434
      %v1495 = vmul.f32 %v1250, %v1430
      %v1496 = vmul.f32 %v1250, %v1434
      %v1497 = vmul.f32 %v1255, %v1430
      %v1498 = vmul.f32 %v1255, %v1434
      %v1499 = vmul.f32 %v1260, %v1430
      %v1500 = vmul.f32 %v1260, %v1434
      %v1501 = vmul.f32 %v1265, %v1430
      %v1502 = vmul.f32 %v1265, %v1434
      %v1503 = vmul.f32 %v1270, %v1430
      %v1504 = vmul.f32 %v1270, %v1434
      %v1505 = vmul.f32 %v1275, %v1430
      %v1506 = vmul.f32 %v1275, %v1434
      %v1507 = vmul.f32 %v1280, %v1430
      %v1508 = vmul.f32 %v1280, %v1434
      %v1509 = vmul.f32 %v1285, %v1430
      %v1510 = vmul.f32 %v1285, %v1434
      %v1511 = vmul.f32 %v1290, %v1430
      %v1512 = vmul.f32 %v1290, %v1434
      %v1513 = vmul.f32 %v1295, %v1430
      %v1514 = vmul.f32 %v1295, %v1434
      %v1515 = vmul.f32 %v1300, %v1430
      %v1516 = vmul.f32 %v1300, %v1434
      %v1517 = vmul.f32 %v1305, %v1430
      %v1518 = vmul.f32 %v1305, %v1434
      %v1519 = vmul.f32 %v1310, %v1430
      %v1520 = vmul.f32 %v1310, %v1434
      %v1521 = vmul.f32 %v1315, %v1430
      %v1522 = vmul.f32 %v1315, %v1434
      %v1523 = vmul.f32 %v1320, %v1430
      %v1524 = vmul.f32 %v1320, %v1434
      %v1525 = vmul.f32 %v1325, %v1430
      %v1526 = vmul.f32 %v1325, %v1434
      %v1527 = vmul.f32 %v1330, %v1430
      %v1528 = vmul.f32 %v1330, %v1434
      %v1529 = vmul.f32 %v1335, %v1430
      %v1530 = vmul.f32 %v1335, %v1434
      %v1531 = vmul.f32 %v1340, %v1430
      %v1532 = vmul.f32 %v1340, %v1434
      %v1533 = vmul.f32 %v1345, %v1430
      %v1534 = vmul.f32 %v1345, %v1434
      %v1535 = vmul.f32 %v1350, %v1430
      %v1536 = vmul.f32 %v1350, %v1434
      %v1537 = vmul.f32 %v1355, %v1430
      %v1538 = vmul.f32 %v1355, %v1434
      %v1539 = vmul.f32 %v1360, %v1430
      %v1540 = vmul.f32 %v1360, %v1434
      %v1541 = vmul.f32 %v1365, %v1430
      %v1542 = vmul.f32 %v1365, %v1434
      %v1543 = vmul.f32 %v1370, %v1430
      %v1544 = vmul.f32 %v1370, %v1434
      %v1545 = vmul.f32 %v1375, %v1430
      %v1546 = vmul.f32 %v1375, %v1434
      %v1547 = vmul.f32 %v1380, %v1430
      %v1548 = vmul.f32 %v1380, %v1434
      %v1549 = vmul.f32 %v1385, %v1430
      %v1550 = vmul.f32 %v1385, %v1434
      %v1551 = vmul.f32 %v1390, %v1430
      %v1552 = vmul.f32 %v1390, %v1434
      %v1553 = vmul.f32 %v1395, %v1430
      %v1554 = vmul.f32 %v1395, %v1434
      %v1555 = vmul.f32 %v1400, %v1430
      %v1556 = vmul.f32 %v1400, %v1434
      %v1557 = vmul.f32 %v1405, %v1430
      %v1558 = vmul.f32 %v1405, %v1434
      %v1559 = vmul.f32 %v1410, %v1430
      %v1560 = vmul.f32 %v1410, %v1434
      %v1561 = vmul.f32 %v1415, %v1430
      %v1562 = vmul.f32 %v1415, %v1434
      %v1563 = vadd.f32 %v904, %v1435
      %v1564 = vadd.f32 %v905, %v1436
      %v1565 = vadd.f32 %v906, %v1437
      %v1566 = vadd.f32 %v907, %v1438
      %v1567 = vadd.f32 %v908, %v1439
      %v1568 = vadd.f32 %v909, %v1440
      %v1569 = vadd.f32 %v910, %v1441
      %v1570 = vadd.f32 %v911, %v1442
      %v1571 = vadd.f32 %v912, %v1443
      %v1572 = vadd.f32 %v913, %v1444
      %v1573 = vadd.f32 %v914, %v1445
      %v1574 = vadd.f32 %v915, %v1446
      %v1575 = vadd.f32 %v916, %v1447
      %v1576 = vadd.f32 %v917, %v1448
      %v1577 = vadd.f32 %v918, %v1449
      %v1578 = vadd.f32 %v919, %v1450
      %v1579 = vadd.f32 %v920, %v1451
      %v1580 = vadd.f32 %v921, %v1452
      %v1581 = vadd.f32 %v922, %v1453
      %v1582 = vadd.f32 %v923, %v1454
      %v1583 = vadd.f32 %v924, %v1455
      %v1584 = vadd.f32 %v925, %v1456
      %v1585 = vadd.f32 %v926, %v1457
      %v1586 = vadd.f32 %v927, %v1458
      %v1587 = vadd.f32 %v928, %v1459
      %v1588 = vadd.f32 %v929, %v1460
      %v1589 = vadd.f32 %v930, %v1461
      %v1590 = vadd.f32 %v931, %v1462
      %v1591 = vadd.f32 %v932, %v1463
      %v1592 = vadd.f32 %v933, %v1464
      %v1593 = vadd.f32 %v934, %v1465
      %v1594 = vadd.f32 %v935, %v1466
      %v1595 = vadd.f32 %v936, %v1467
      %v1596 = vadd.f32 %v937, %v1468
      %v1597 = vadd.f32 %v938, %v1469
      %v1598 = vadd.f32 %v939, %v1470
      %v1599 = vadd.f32 %v940, %v1471
      %v1600 = vadd.f32 %v941, %v1472
      %v1601 = vadd.f32 %v942, %v1473
      %v1602 = vadd.f32 %v943, %v1474
      %v1603 = vadd.f32 %v944, %v1475
      %v1604 = vadd.f32 %v945, %v1476
      %v1605 = vadd.f32 %v946, %v1477
      %v1606 = vadd.f32 %v947, %v1478
      %v1607 = vadd.f32 %v948, %v1479
      %v1608 = vadd.f32 %v949, %v1480
      %v1609 = vadd.f32 %v950, %v1481
      %v1610 = vadd.f32 %v951, %v1482
      %v1611 = vadd.f32 %v952, %v1483
      %v1612 = vadd.f32 %v953, %v1484
      %v1613 = vadd.f32 %v954, %v1485
      %v1614 = vadd.f32 %v955, %v1486
      %v1615 = vadd.f32 %v956, %v1487
      %v1616 = vadd.f32 %v957, %v1488
      %v1617 = vadd.f32 %v958, %v1489
      %v1618 = vadd.f32 %v959, %v1490
      %v1619 = vadd.f32 %v960, %v1491
      %v1620 = vadd.f32 %v961, %v1492
      %v1621 = vadd.f32 %v962, %v1493
      %v1622 = vadd.f32 %v963, %v1494
      %v1623 = vadd.f32 %v964, %v1495
      %v1624 = vadd.f32 %v965, %v1496
      %v1625 = vadd.f32 %v966, %v1497
      %v1626 = vadd.f32 %v967, %v1498
      %v1627 = vadd.f32 %v968, %v1499
      %v1628 = vadd.f32 %v969, %v1500
      %v1629 = vadd.f32 %v970, %v1501
      %v1630 = vadd.f32 %v971, %v1502
      %v1631 = vadd.f32 %v972, %v1503
      %v1632 = vadd.f32 %v973, %v1504
      %v1633 = vadd.f32 %v974, %v1505
      %v1634 = vadd.f32 %v975, %v1506
      %v1635 = vadd.f32 %v976, %v1507
      %v1636 = vadd.f32 %v977, %v1508
      %v1637 = vadd.f32 %v978, %v1509
      %v1638 = vadd.f32 %v979, %v1510
      %v1639 = vadd.f32 %v980, %v1511
      %v1640 = vadd.f32 %v981, %v1512
      %v1641 = vadd.f32 %v982, %v1513
      %v1642 = vadd.f32 %v983, %v1514
      %v1643 = vadd.f32 %v984, %v1515
      %v1644 = vadd.f32 %v985, %v1516
      %v1645 = vadd.f32 %v986, %v1517
      %v1646 = vadd.f32 %v987, %v1518
      %v1647 = vadd.f32 %v988, %v1519
      %v1648 = vadd.f32 %v989, %v1520
      %v1649 = vadd.f32 %v990, %v1521
      %v1650 = vadd.f32 %v991, %v1522
      %v1651 = vadd.f32 %v992, %v1523
      %v1652 = vadd.f32 %v993, %v1524
      %v1653 = vadd.f32 %v994, %v1525
      %v1654 = vadd.f32 %v995, %v1526
      %v1655 = vadd.f32 %v996, %v1527
      %v1656 = vadd.f32 %v997, %v1528
      %v1657 = vadd.f32 %v998, %v1529
      %v1658 = vadd.f32 %v999, %v1530
      %v1659 = vadd.f32 %v1000, %v1531
      %v1660 = vadd.f32 %v1001, %v1532
      %v1661 = vadd.f32 %v1002, %v1533
      %v1662 = vadd.f32 %v1003, %v1534
      %v1663 = vadd.f32 %v1004, %v1535
      %v1664 = vadd.f32 %v1005, %v1536
      %v1665 = vadd.f32 %v1006, %v1537
      %v1666 = vadd.f32 %v1007, %v1538
      %v1667 = vadd.f32 %v1008, %v1539
      %v1668 = vadd.f32 %v1009, %v1540
      %v1669 = vadd.f32 %v1010, %v1541
      %v1670 = vadd.f32 %v1011, %v1542
      %v1671 = vadd.f32 %v1012, %v1543
      %v1672 = vadd.f32 %v1013, %v1544
      %v1673 = vadd.f32 %v1014, %v1545
      %v1674 = vadd.f32 %v1015, %v1546
      %v1675 = vadd.f32 %v1016, %v1547
      %v1676 = vadd.f32 %v1017, %v1548
      %v1677 = vadd.f32 %v1018, %v1549
      %v1678 = vadd.f32 %v1019, %v1550
      %v1679 = vadd.f32 %v1020, %v1551
      %v1680 = vadd.f32 %v1021, %v1552
      %v1681 = vadd.f32 %v1022, %v1553
      %v1682 = vadd.f32 %v1023, %v1554
      %v1683 = vadd.f32 %v1024, %v1555
      %v1684 = vadd.f32 %v1025, %v1556
      %v1685 = vadd.f32 %v1026, %v1557
      %v1686 = vadd.f32 %v1027, %v1558
      %v1687 = vadd.f32 %v1028, %v1559
      %v1688 = vadd.f32 %v1029, %v1560
      %v1689 = vadd.f32 %v1030, %v1561
      %v1690 = vadd.f32 %v1031, %v1562
      %s1691 = scalar_lea.vmem %s3, 1024
      %v1692 = vld [vmem:[%s1691] sm:$0xff]
      %v1693 = vld [vmem:[%s1691 + $0x8] sm:$0xff]
      %v1694 = vld [vmem:[%s1691 + $0x10] sm:$0xff]
      %v1695 = vld [vmem:[%s1691 + $0x18] sm:$0xff]
      %v1696 = vld [vmem:[%s1691 + $0x20] sm:$0xff]
      %v1697 = vld [vmem:[%s1691 + $0x28] sm:$0xff]
      %v1698 = vld [vmem:[%s1691 + $0x30] sm:$0xff]
      %v1699 = vld [vmem:[%s1691 + $0x38] sm:$0xff]
      %v1700 = vld [vmem:[%s1691 + $0x40] sm:$0xff]
      %v1701 = vld [vmem:[%s1691 + $0x48] sm:$0xff]
      %v1702 = vld [vmem:[%s1691 + $0x50] sm:$0xff]
      %v1703 = vld [vmem:[%s1691 + $0x58] sm:$0xff]
      %v1704 = vld [vmem:[%s1691 + $0x60] sm:$0xff]
      %v1705 = vld [vmem:[%s1691 + $0x68] sm:$0xff]
      %v1706 = vld [vmem:[%s1691 + $0x70] sm:$0xff]
      %v1707 = vld [vmem:[%s1691 + $0x78] sm:$0xff]
      %v1708 = vld [vmem:[%s1691 + $0x80] sm:$0xff]
      %v1709 = vld [vmem:[%s1691 + $0x88] sm:$0xff]
      %v1710 = vld [vmem:[%s1691 + $0x90] sm:$0xff]
      %v1711 = vld [vmem:[%s1691 + $0x98] sm:$0xff]
      %v1712 = vld [vmem:[%s1691 + $0xa0] sm:$0xff]
      %v1713 = vld [vmem:[%s1691 + $0xa8] sm:$0xff]
      %v1714 = vld [vmem:[%s1691 + $0xb0] sm:$0xff]
      %v1715 = vld [vmem:[%s1691 + $0xb8] sm:$0xff]
      %v1716 = vld [vmem:[%s1691 + $0xc0] sm:$0xff]
      %v1717 = vld [vmem:[%s1691 + $0xc8] sm:$0xff]
      %v1718 = vld [vmem:[%s1691 + $0xd0] sm:$0xff]
      %v1719 = vld [vmem:[%s1691 + $0xd8] sm:$0xff]
      %v1720 = vld [vmem:[%s1691 + $0xe0] sm:$0xff]
      %v1721 = vld [vmem:[%s1691 + $0xe8] sm:$0xff]
      %v1722 = vld [vmem:[%s1691 + $0xf0] sm:$0xff]
      %v1723 = vld [vmem:[%s1691 + $0xf8] sm:$0xff]
      %v1724 = vld [vmem:[%s1691 + $0x100] sm:$0xff]
      %v1725 = vld [vmem:[%s1691 + $0x108] sm:$0xff]
      %v1726 = vld [vmem:[%s1691 + $0x110] sm:$0xff]
      %v1727 = vld [vmem:[%s1691 + $0x118] sm:$0xff]
      %v1728 = vld [vmem:[%s1691 + $0x120] sm:$0xff]
      %v1729 = vld [vmem:[%s1691 + $0x128] sm:$0xff]
      %v1730 = vld [vmem:[%s1691 + $0x130] sm:$0xff]
      %v1731 = vld [vmem:[%s1691 + $0x138] sm:$0xff]
      %v1732 = vld [vmem:[%s1691 + $0x140] sm:$0xff]
      %v1733 = vld [vmem:[%s1691 + $0x148] sm:$0xff]
      %v1734 = vld [vmem:[%s1691 + $0x150] sm:$0xff]
      %v1735 = vld [vmem:[%s1691 + $0x158] sm:$0xff]
      %v1736 = vld [vmem:[%s1691 + $0x160] sm:$0xff]
      %v1737 = vld [vmem:[%s1691 + $0x168] sm:$0xff]
      %v1738 = vld [vmem:[%s1691 + $0x170] sm:$0xff]
      %v1739 = vld [vmem:[%s1691 + $0x178] sm:$0xff]
      %v1740 = vld [vmem:[%s1691 + $0x180] sm:$0xff]
      %v1741 = vld [vmem:[%s1691 + $0x188] sm:$0xff]
      %v1742 = vld [vmem:[%s1691 + $0x190] sm:$0xff]
      %v1743 = vld [vmem:[%s1691 + $0x198] sm:$0xff]
      %v1744 = vld [vmem:[%s1691 + $0x1a0] sm:$0xff]
      %v1745 = vld [vmem:[%s1691 + $0x1a8] sm:$0xff]
      %v1746 = vld [vmem:[%s1691 + $0x1b0] sm:$0xff]
      %v1747 = vld [vmem:[%s1691 + $0x1b8] sm:$0xff]
      %v1748 = vld [vmem:[%s1691 + $0x1c0] sm:$0xff]
      %v1749 = vld [vmem:[%s1691 + $0x1c8] sm:$0xff]
      %v1750 = vld [vmem:[%s1691 + $0x1d0] sm:$0xff]
      %v1751 = vld [vmem:[%s1691 + $0x1d8] sm:$0xff]
      %v1752 = vld [vmem:[%s1691 + $0x1e0] sm:$0xff]
      %v1753 = vld [vmem:[%s1691 + $0x1e8] sm:$0xff]
      %v1754 = vld [vmem:[%s1691 + $0x1f0] sm:$0xff]
      %v1755 = vld [vmem:[%s1691 + $0x1f8] sm:$0xff]
      %1757 = vset.pattern.permute.xlu0 0
      %1758 = vperm.xlu0 %1757, %v1692
      %v1759 = vpop.permute.xlu0 %1758
      %1762 = vset.pattern.permute.xlu0 0
      %1763 = vperm.xlu0 %1762, %v1693
      %v1764 = vpop.permute.xlu0 %1763
      %1767 = vset.pattern.permute.xlu0 0
      %1768 = vperm.xlu0 %1767, %v1694
      %v1769 = vpop.permute.xlu0 %1768
      %1772 = vset.pattern.permute.xlu0 0
      %1773 = vperm.xlu0 %1772, %v1695
      %v1774 = vpop.permute.xlu0 %1773
      %1777 = vset.pattern.permute.xlu0 0
      %1778 = vperm.xlu0 %1777, %v1696
      %v1779 = vpop.permute.xlu0 %1778
      %1782 = vset.pattern.permute.xlu0 0
      %1783 = vperm.xlu0 %1782, %v1697
      %v1784 = vpop.permute.xlu0 %1783
      %1787 = vset.pattern.permute.xlu0 0
      %1788 = vperm.xlu0 %1787, %v1698
      %v1789 = vpop.permute.xlu0 %1788
      %1792 = vset.pattern.permute.xlu0 0
      %1793 = vperm.xlu0 %1792, %v1699
      %v1794 = vpop.permute.xlu0 %1793
      %1797 = vset.pattern.permute.xlu0 0
      %1798 = vperm.xlu0 %1797, %v1700
      %v1799 = vpop.permute.xlu0 %1798
      %1802 = vset.pattern.permute.xlu0 0
      %1803 = vperm.xlu0 %1802, %v1701
      %v1804 = vpop.permute.xlu0 %1803
      %1807 = vset.pattern.permute.xlu0 0
      %1808 = vperm.xlu0 %1807, %v1702
      %v1809 = vpop.permute.xlu0 %1808
      %1812 = vset.pattern.permute.xlu0 0
      %1813 = vperm.xlu0 %1812, %v1703
      %v1814 = vpop.permute.xlu0 %1813
      %1817 = vset.pattern.permute.xlu0 0
      %1818 = vperm.xlu0 %1817, %v1704
      %v1819 = vpop.permute.xlu0 %1818
      %1822 = vset.pattern.permute.xlu0 0
      %1823 = vperm.xlu0 %1822, %v1705
      %v1824 = vpop.permute.xlu0 %1823
      %1827 = vset.pattern.permute.xlu0 0
      %1828 = vperm.xlu0 %1827, %v1706
      %v1829 = vpop.permute.xlu0 %1828
      %1832 = vset.pattern.permute.xlu0 0
      %1833 = vperm.xlu0 %1832, %v1707
      %v1834 = vpop.permute.xlu0 %1833
      %1837 = vset.pattern.permute.xlu0 0
      %1838 = vperm.xlu0 %1837, %v1708
      %v1839 = vpop.permute.xlu0 %1838
      %1842 = vset.pattern.permute.xlu0 0
      %1843 = vperm.xlu0 %1842, %v1709
      %v1844 = vpop.permute.xlu0 %1843
      %1847 = vset.pattern.permute.xlu0 0
      %1848 = vperm.xlu0 %1847, %v1710
      %v1849 = vpop.permute.xlu0 %1848
      %1852 = vset.pattern.permute.xlu0 0
      %1853 = vperm.xlu0 %1852, %v1711
      %v1854 = vpop.permute.xlu0 %1853
      %1857 = vset.pattern.permute.xlu0 0
      %1858 = vperm.xlu0 %1857, %v1712
      %v1859 = vpop.permute.xlu0 %1858
      %1862 = vset.pattern.permute.xlu0 0
      %1863 = vperm.xlu0 %1862, %v1713
      %v1864 = vpop.permute.xlu0 %1863
      %1867 = vset.pattern.permute.xlu0 0
      %1868 = vperm.xlu0 %1867, %v1714
      %v1869 = vpop.permute.xlu0 %1868
      %1872 = vset.pattern.permute.xlu0 0
      %1873 = vperm.xlu0 %1872, %v1715
      %v1874 = vpop.permute.xlu0 %1873
      %1877 = vset.pattern.permute.xlu0 0
      %1878 = vperm.xlu0 %1877, %v1716
      %v1879 = vpop.permute.xlu0 %1878
      %1882 = vset.pattern.permute.xlu0 0
      %1883 = vperm.xlu0 %1882, %v1717
      %v1884 = vpop.permute.xlu0 %1883
      %1887 = vset.pattern.permute.xlu0 0
      %1888 = vperm.xlu0 %1887, %v1718
      %v1889 = vpop.permute.xlu0 %1888
      %1892 = vset.pattern.permute.xlu0 0
      %1893 = vperm.xlu0 %1892, %v1719
      %v1894 = vpop.permute.xlu0 %1893
      %1897 = vset.pattern.permute.xlu0 0
      %1898 = vperm.xlu0 %1897, %v1720
      %v1899 = vpop.permute.xlu0 %1898
      %1902 = vset.pattern.permute.xlu0 0
      %1903 = vperm.xlu0 %1902, %v1721
      %v1904 = vpop.permute.xlu0 %1903
      %1907 = vset.pattern.permute.xlu0 0
      %1908 = vperm.xlu0 %1907, %v1722
      %v1909 = vpop.permute.xlu0 %1908
      %1912 = vset.pattern.permute.xlu0 0
      %1913 = vperm.xlu0 %1912, %v1723
      %v1914 = vpop.permute.xlu0 %1913
      %1917 = vset.pattern.permute.xlu0 0
      %1918 = vperm.xlu0 %1917, %v1724
      %v1919 = vpop.permute.xlu0 %1918
      %1922 = vset.pattern.permute.xlu0 0
      %1923 = vperm.xlu0 %1922, %v1725
      %v1924 = vpop.permute.xlu0 %1923
      %1927 = vset.pattern.permute.xlu0 0
      %1928 = vperm.xlu0 %1927, %v1726
      %v1929 = vpop.permute.xlu0 %1928
      %1932 = vset.pattern.permute.xlu0 0
      %1933 = vperm.xlu0 %1932, %v1727
      %v1934 = vpop.permute.xlu0 %1933
      %1937 = vset.pattern.permute.xlu0 0
      %1938 = vperm.xlu0 %1937, %v1728
      %v1939 = vpop.permute.xlu0 %1938
      %1942 = vset.pattern.permute.xlu0 0
      %1943 = vperm.xlu0 %1942, %v1729
      %v1944 = vpop.permute.xlu0 %1943
      %1947 = vset.pattern.permute.xlu0 0
      %1948 = vperm.xlu0 %1947, %v1730
      %v1949 = vpop.permute.xlu0 %1948
      %1952 = vset.pattern.permute.xlu0 0
      %1953 = vperm.xlu0 %1952, %v1731
      %v1954 = vpop.permute.xlu0 %1953
      %1957 = vset.pattern.permute.xlu0 0
      %1958 = vperm.xlu0 %1957, %v1732
      %v1959 = vpop.permute.xlu0 %1958
      %1962 = vset.pattern.permute.xlu0 0
      %1963 = vperm.xlu0 %1962, %v1733
      %v1964 = vpop.permute.xlu0 %1963
      %1967 = vset.pattern.permute.xlu0 0
      %1968 = vperm.xlu0 %1967, %v1734
      %v1969 = vpop.permute.xlu0 %1968
      %1972 = vset.pattern.permute.xlu0 0
      %1973 = vperm.xlu0 %1972, %v1735
      %v1974 = vpop.permute.xlu0 %1973
      %1977 = vset.pattern.permute.xlu0 0
      %1978 = vperm.xlu0 %1977, %v1736
      %v1979 = vpop.permute.xlu0 %1978
      %1982 = vset.pattern.permute.xlu0 0
      %1983 = vperm.xlu0 %1982, %v1737
      %v1984 = vpop.permute.xlu0 %1983
      %1987 = vset.pattern.permute.xlu0 0
      %1988 = vperm.xlu0 %1987, %v1738
      %v1989 = vpop.permute.xlu0 %1988
      %1992 = vset.pattern.permute.xlu0 0
      %1993 = vperm.xlu0 %1992, %v1739
      %v1994 = vpop.permute.xlu0 %1993
      %1997 = vset.pattern.permute.xlu0 0
      %1998 = vperm.xlu0 %1997, %v1740
      %v1999 = vpop.permute.xlu0 %1998
      %2002 = vset.pattern.permute.xlu0 0
      %2003 = vperm.xlu0 %2002, %v1741
      %v2004 = vpop.permute.xlu0 %2003
      %2007 = vset.pattern.permute.xlu0 0
      %2008 = vperm.xlu0 %2007, %v1742
      %v2009 = vpop.permute.xlu0 %2008
      %2012 = vset.pattern.permute.xlu0 0
      %2013 = vperm.xlu0 %2012, %v1743
      %v2014 = vpop.permute.xlu0 %2013
      %2017 = vset.pattern.permute.xlu0 0
      %2018 = vperm.xlu0 %2017, %v1744
      %v2019 = vpop.permute.xlu0 %2018
      %2022 = vset.pattern.permute.xlu0 0
      %2023 = vperm.xlu0 %2022, %v1745
      %v2024 = vpop.permute.xlu0 %2023
      %2027 = vset.pattern.permute.xlu0 0
      %2028 = vperm.xlu0 %2027, %v1746
      %v2029 = vpop.permute.xlu0 %2028
      %2032 = vset.pattern.permute.xlu0 0
      %2033 = vperm.xlu0 %2032, %v1747
      %v2034 = vpop.permute.xlu0 %2033
      %2037 = vset.pattern.permute.xlu0 0
      %2038 = vperm.xlu0 %2037, %v1748
      %v2039 = vpop.permute.xlu0 %2038
      %2042 = vset.pattern.permute.xlu0 0
      %2043 = vperm.xlu0 %2042, %v1749
      %v2044 = vpop.permute.xlu0 %2043
      %2047 = vset.pattern.permute.xlu0 0
      %2048 = vperm.xlu0 %2047, %v1750
      %v2049 = vpop.permute.xlu0 %2048
      %2052 = vset.pattern.permute.xlu0 0
      %2053 = vperm.xlu0 %2052, %v1751
      %v2054 = vpop.permute.xlu0 %2053
      %2057 = vset.pattern.permute.xlu0 0
      %2058 = vperm.xlu0 %2057, %v1752
      %v2059 = vpop.permute.xlu0 %2058
      %2062 = vset.pattern.permute.xlu0 0
      %2063 = vperm.xlu0 %2062, %v1753
      %v2064 = vpop.permute.xlu0 %2063
      %2067 = vset.pattern.permute.xlu0 0
      %2068 = vperm.xlu0 %2067, %v1754
      %v2069 = vpop.permute.xlu0 %2068
      %2072 = vset.pattern.permute.xlu0 0
      %2073 = vperm.xlu0 %2072, %v1755
      %v2074 = vpop.permute.xlu0 %2073
      %v2076 = vlaneseq
      %v2077 = vshrl.u32 %v2076, 7
      %v2078 = vsub.s32 2, %v2077
      %v2079 = vrot.slane %v500, %v2078
      %v2080 = vlaneseq
      %v2081 = vshrl.u32 %v2080, 7
      %v2082 = vsub.s32 6, %v2081
      %v2083 = vrot.slane %v500, %v2082
      %v2086 = vlaneseq
      %v2087 = vshrl.u32 %v2086, 7
      %v2088 = vsub.s32 2, %v2087
      %v2089 = vrot.slane %v2079, %v2088
      %v2090 = vlaneseq
      %v2091 = vshrl.u32 %v2090, 7
      %v2092 = vsub.s32 2, %v2091
      %v2093 = vrot.slane %v2083, %v2092
      %v2094 = vmul.f32 %v1759, %v2089
      %v2095 = vmul.f32 %v1759, %v2093
      %v2096 = vmul.f32 %v1764, %v2089
      %v2097 = vmul.f32 %v1764, %v2093
      %v2098 = vmul.f32 %v1769, %v2089
      %v2099 = vmul.f32 %v1769, %v2093
      %v2100 = vmul.f32 %v1774, %v2089
      %v2101 = vmul.f32 %v1774, %v2093
      %v2102 = vmul.f32 %v1779, %v2089
      %v2103 = vmul.f32 %v1779, %v2093
      %v2104 = vmul.f32 %v1784, %v2089
      %v2105 = vmul.f32 %v1784, %v2093
      %v2106 = vmul.f32 %v1789, %v2089
      %v2107 = vmul.f32 %v1789, %v2093
      %v2108 = vmul.f32 %v1794, %v2089
      %v2109 = vmul.f32 %v1794, %v2093
      %v2110 = vmul.f32 %v1799, %v2089
      %v2111 = vmul.f32 %v1799, %v2093
      %v2112 = vmul.f32 %v1804, %v2089
      %v2113 = vmul.f32 %v1804, %v2093
      %v2114 = vmul.f32 %v1809, %v2089
      %v2115 = vmul.f32 %v1809, %v2093
      %v2116 = vmul.f32 %v1814, %v2089
      %v2117 = vmul.f32 %v1814, %v2093
      %v2118 = vmul.f32 %v1819, %v2089
      %v2119 = vmul.f32 %v1819, %v2093
      %v2120 = vmul.f32 %v1824, %v2089
      %v2121 = vmul.f32 %v1824, %v2093
      %v2122 = vmul.f32 %v1829, %v2089
      %v2123 = vmul.f32 %v1829, %v2093
      %v2124 = vmul.f32 %v1834, %v2089
      %v2125 = vmul.f32 %v1834, %v2093
      %v2126 = vmul.f32 %v1839, %v2089
      %v2127 = vmul.f32 %v1839, %v2093
      %v2128 = vmul.f32 %v1844, %v2089
      %v2129 = vmul.f32 %v1844, %v2093
      %v2130 = vmul.f32 %v1849, %v2089
      %v2131 = vmul.f32 %v1849, %v2093
      %v2132 = vmul.f32 %v1854, %v2089
      %v2133 = vmul.f32 %v1854, %v2093
      %v2134 = vmul.f32 %v1859, %v2089
      %v2135 = vmul.f32 %v1859, %v2093
      %v2136 = vmul.f32 %v1864, %v2089
      %v2137 = vmul.f32 %v1864, %v2093
      %v2138 = vmul.f32 %v1869, %v2089
      %v2139 = vmul.f32 %v1869, %v2093
      %v2140 = vmul.f32 %v1874, %v2089
      %v2141 = vmul.f32 %v1874, %v2093
      %v2142 = vmul.f32 %v1879, %v2089
      %v2143 = vmul.f32 %v1879, %v2093
      %v2144 = vmul.f32 %v1884, %v2089
      %v2145 = vmul.f32 %v1884, %v2093
      %v2146 = vmul.f32 %v1889, %v2089
      %v2147 = vmul.f32 %v1889, %v2093
      %v2148 = vmul.f32 %v1894, %v2089
      %v2149 = vmul.f32 %v1894, %v2093
      %v2150 = vmul.f32 %v1899, %v2089
      %v2151 = vmul.f32 %v1899, %v2093
      %v2152 = vmul.f32 %v1904, %v2089
      %v2153 = vmul.f32 %v1904, %v2093
      %v2154 = vmul.f32 %v1909, %v2089
      %v2155 = vmul.f32 %v1909, %v2093
      %v2156 = vmul.f32 %v1914, %v2089
      %v2157 = vmul.f32 %v1914, %v2093
      %v2158 = vmul.f32 %v1919, %v2089
      %v2159 = vmul.f32 %v1919, %v2093
      %v2160 = vmul.f32 %v1924, %v2089
      %v2161 = vmul.f32 %v1924, %v2093
      %v2162 = vmul.f32 %v1929, %v2089
      %v2163 = vmul.f32 %v1929, %v2093
      %v2164 = vmul.f32 %v1934, %v2089
      %v2165 = vmul.f32 %v1934, %v2093
      %v2166 = vmul.f32 %v1939, %v2089
      %v2167 = vmul.f32 %v1939, %v2093
      %v2168 = vmul.f32 %v1944, %v2089
      %v2169 = vmul.f32 %v1944, %v2093
      %v2170 = vmul.f32 %v1949, %v2089
      %v2171 = vmul.f32 %v1949, %v2093
      %v2172 = vmul.f32 %v1954, %v2089
      %v2173 = vmul.f32 %v1954, %v2093
      %v2174 = vmul.f32 %v1959, %v2089
      %v2175 = vmul.f32 %v1959, %v2093
      %v2176 = vmul.f32 %v1964, %v2089
      %v2177 = vmul.f32 %v1964, %v2093
      %v2178 = vmul.f32 %v1969, %v2089
      %v2179 = vmul.f32 %v1969, %v2093
      %v2180 = vmul.f32 %v1974, %v2089
      %v2181 = vmul.f32 %v1974, %v2093
      %v2182 = vmul.f32 %v1979, %v2089
      %v2183 = vmul.f32 %v1979, %v2093
      %v2184 = vmul.f32 %v1984, %v2089
      %v2185 = vmul.f32 %v1984, %v2093
      %v2186 = vmul.f32 %v1989, %v2089
      %v2187 = vmul.f32 %v1989, %v2093
      %v2188 = vmul.f32 %v1994, %v2089
      %v2189 = vmul.f32 %v1994, %v2093
      %v2190 = vmul.f32 %v1999, %v2089
      %v2191 = vmul.f32 %v1999, %v2093
      %v2192 = vmul.f32 %v2004, %v2089
      %v2193 = vmul.f32 %v2004, %v2093
      %v2194 = vmul.f32 %v2009, %v2089
      %v2195 = vmul.f32 %v2009, %v2093
      %v2196 = vmul.f32 %v2014, %v2089
      %v2197 = vmul.f32 %v2014, %v2093
      %v2198 = vmul.f32 %v2019, %v2089
      %v2199 = vmul.f32 %v2019, %v2093
      %v2200 = vmul.f32 %v2024, %v2089
      %v2201 = vmul.f32 %v2024, %v2093
      %v2202 = vmul.f32 %v2029, %v2089
      %v2203 = vmul.f32 %v2029, %v2093
      %v2204 = vmul.f32 %v2034, %v2089
      %v2205 = vmul.f32 %v2034, %v2093
      %v2206 = vmul.f32 %v2039, %v2089
      %v2207 = vmul.f32 %v2039, %v2093
      %v2208 = vmul.f32 %v2044, %v2089
      %v2209 = vmul.f32 %v2044, %v2093
      %v2210 = vmul.f32 %v2049, %v2089
      %v2211 = vmul.f32 %v2049, %v2093
      %v2212 = vmul.f32 %v2054, %v2089
      %v2213 = vmul.f32 %v2054, %v2093
      %v2214 = vmul.f32 %v2059, %v2089
      %v2215 = vmul.f32 %v2059, %v2093
      %v2216 = vmul.f32 %v2064, %v2089
      %v2217 = vmul.f32 %v2064, %v2093
      %v2218 = vmul.f32 %v2069, %v2089
      %v2219 = vmul.f32 %v2069, %v2093
      %v2220 = vmul.f32 %v2074, %v2089
      %v2221 = vmul.f32 %v2074, %v2093
      %v2222 = vadd.f32 %v1563, %v2094
      %v2223 = vadd.f32 %v1564, %v2095
      %v2224 = vadd.f32 %v1565, %v2096
      %v2225 = vadd.f32 %v1566, %v2097
      %v2226 = vadd.f32 %v1567, %v2098
      %v2227 = vadd.f32 %v1568, %v2099
      %v2228 = vadd.f32 %v1569, %v2100
      %v2229 = vadd.f32 %v1570, %v2101
      %v2230 = vadd.f32 %v1571, %v2102
      %v2231 = vadd.f32 %v1572, %v2103
      %v2232 = vadd.f32 %v1573, %v2104
      %v2233 = vadd.f32 %v1574, %v2105
      %v2234 = vadd.f32 %v1575, %v2106
      %v2235 = vadd.f32 %v1576, %v2107
      %v2236 = vadd.f32 %v1577, %v2108
      %v2237 = vadd.f32 %v1578, %v2109
      %v2238 = vadd.f32 %v1579, %v2110
      %v2239 = vadd.f32 %v1580, %v2111
      %v2240 = vadd.f32 %v1581, %v2112
      %v2241 = vadd.f32 %v1582, %v2113
      %v2242 = vadd.f32 %v1583, %v2114
      %v2243 = vadd.f32 %v1584, %v2115
      %v2244 = vadd.f32 %v1585, %v2116
      %v2245 = vadd.f32 %v1586, %v2117
      %v2246 = vadd.f32 %v1587, %v2118
      %v2247 = vadd.f32 %v1588, %v2119
      %v2248 = vadd.f32 %v1589, %v2120
      %v2249 = vadd.f32 %v1590, %v2121
      %v2250 = vadd.f32 %v1591, %v2122
      %v2251 = vadd.f32 %v1592, %v2123
      %v2252 = vadd.f32 %v1593, %v2124
      %v2253 = vadd.f32 %v1594, %v2125
      %v2254 = vadd.f32 %v1595, %v2126
      %v2255 = vadd.f32 %v1596, %v2127
      %v2256 = vadd.f32 %v1597, %v2128
      %v2257 = vadd.f32 %v1598, %v2129
      %v2258 = vadd.f32 %v1599, %v2130
      %v2259 = vadd.f32 %v1600, %v2131
      %v2260 = vadd.f32 %v1601, %v2132
      %v2261 = vadd.f32 %v1602, %v2133
      %v2262 = vadd.f32 %v1603, %v2134
      %v2263 = vadd.f32 %v1604, %v2135
      %v2264 = vadd.f32 %v1605, %v2136
      %v2265 = vadd.f32 %v1606, %v2137
      %v2266 = vadd.f32 %v1607, %v2138
      %v2267 = vadd.f32 %v1608, %v2139
      %v2268 = vadd.f32 %v1609, %v2140
      %v2269 = vadd.f32 %v1610, %v2141
      %v2270 = vadd.f32 %v1611, %v2142
      %v2271 = vadd.f32 %v1612, %v2143
      %v2272 = vadd.f32 %v1613, %v2144
      %v2273 = vadd.f32 %v1614, %v2145
      %v2274 = vadd.f32 %v1615, %v2146
      %v2275 = vadd.f32 %v1616, %v2147
      %v2276 = vadd.f32 %v1617, %v2148
      %v2277 = vadd.f32 %v1618, %v2149
      %v2278 = vadd.f32 %v1619, %v2150
      %v2279 = vadd.f32 %v1620, %v2151
      %v2280 = vadd.f32 %v1621, %v2152
      %v2281 = vadd.f32 %v1622, %v2153
      %v2282 = vadd.f32 %v1623, %v2154
      %v2283 = vadd.f32 %v1624, %v2155
      %v2284 = vadd.f32 %v1625, %v2156
      %v2285 = vadd.f32 %v1626, %v2157
      %v2286 = vadd.f32 %v1627, %v2158
      %v2287 = vadd.f32 %v1628, %v2159
      %v2288 = vadd.f32 %v1629, %v2160
      %v2289 = vadd.f32 %v1630, %v2161
      %v2290 = vadd.f32 %v1631, %v2162
      %v2291 = vadd.f32 %v1632, %v2163
      %v2292 = vadd.f32 %v1633, %v2164
      %v2293 = vadd.f32 %v1634, %v2165
      %v2294 = vadd.f32 %v1635, %v2166
      %v2295 = vadd.f32 %v1636, %v2167
      %v2296 = vadd.f32 %v1637, %v2168
      %v2297 = vadd.f32 %v1638, %v2169
      %v2298 = vadd.f32 %v1639, %v2170
      %v2299 = vadd.f32 %v1640, %v2171
      %v2300 = vadd.f32 %v1641, %v2172
      %v2301 = vadd.f32 %v1642, %v2173
      %v2302 = vadd.f32 %v1643, %v2174
      %v2303 = vadd.f32 %v1644, %v2175
      %v2304 = vadd.f32 %v1645, %v2176
      %v2305 = vadd.f32 %v1646, %v2177
      %v2306 = vadd.f32 %v1647, %v2178
      %v2307 = vadd.f32 %v1648, %v2179
      %v2308 = vadd.f32 %v1649, %v2180
      %v2309 = vadd.f32 %v1650, %v2181
      %v2310 = vadd.f32 %v1651, %v2182
      %v2311 = vadd.f32 %v1652, %v2183
      %v2312 = vadd.f32 %v1653, %v2184
      %v2313 = vadd.f32 %v1654, %v2185
      %v2314 = vadd.f32 %v1655, %v2186
      %v2315 = vadd.f32 %v1656, %v2187
      %v2316 = vadd.f32 %v1657, %v2188
      %v2317 = vadd.f32 %v1658, %v2189
      %v2318 = vadd.f32 %v1659, %v2190
      %v2319 = vadd.f32 %v1660, %v2191
      %v2320 = vadd.f32 %v1661, %v2192
      %v2321 = vadd.f32 %v1662, %v2193
      %v2322 = vadd.f32 %v1663, %v2194
      %v2323 = vadd.f32 %v1664, %v2195
      %v2324 = vadd.f32 %v1665, %v2196
      %v2325 = vadd.f32 %v1666, %v2197
      %v2326 = vadd.f32 %v1667, %v2198
      %v2327 = vadd.f32 %v1668, %v2199
      %v2328 = vadd.f32 %v1669, %v2200
      %v2329 = vadd.f32 %v1670, %v2201
      %v2330 = vadd.f32 %v1671, %v2202
      %v2331 = vadd.f32 %v1672, %v2203
      %v2332 = vadd.f32 %v1673, %v2204
      %v2333 = vadd.f32 %v1674, %v2205
      %v2334 = vadd.f32 %v1675, %v2206
      %v2335 = vadd.f32 %v1676, %v2207
      %v2336 = vadd.f32 %v1677, %v2208
      %v2337 = vadd.f32 %v1678, %v2209
      %v2338 = vadd.f32 %v1679, %v2210
      %v2339 = vadd.f32 %v1680, %v2211
      %v2340 = vadd.f32 %v1681, %v2212
      %v2341 = vadd.f32 %v1682, %v2213
      %v2342 = vadd.f32 %v1683, %v2214
      %v2343 = vadd.f32 %v1684, %v2215
      %v2344 = vadd.f32 %v1685, %v2216
      %v2345 = vadd.f32 %v1686, %v2217
      %v2346 = vadd.f32 %v1687, %v2218
      %v2347 = vadd.f32 %v1688, %v2219
      %v2348 = vadd.f32 %v1689, %v2220
      %v2349 = vadd.f32 %v1690, %v2221
      %v2350 = vld [vmem:[%s4] sm:$0xff]
      %v2351 = vld [vmem:[%s4 + $0x8] sm:$0xff]
      %v2352 = vld [vmem:[%s4 + $0x10] sm:$0xff]
      %v2353 = vld [vmem:[%s4 + $0x18] sm:$0xff]
      %v2354 = vld [vmem:[%s4 + $0x20] sm:$0xff]
      %v2355 = vld [vmem:[%s4 + $0x28] sm:$0xff]
      %v2356 = vld [vmem:[%s4 + $0x30] sm:$0xff]
      %v2357 = vld [vmem:[%s4 + $0x38] sm:$0xff]
      %v2358 = vld [vmem:[%s4 + $0x40] sm:$0xff]
      %v2359 = vld [vmem:[%s4 + $0x48] sm:$0xff]
      %v2360 = vld [vmem:[%s4 + $0x50] sm:$0xff]
      %v2361 = vld [vmem:[%s4 + $0x58] sm:$0xff]
      %v2362 = vld [vmem:[%s4 + $0x60] sm:$0xff]
      %v2363 = vld [vmem:[%s4 + $0x68] sm:$0xff]
      %v2364 = vld [vmem:[%s4 + $0x70] sm:$0xff]
      %v2365 = vld [vmem:[%s4 + $0x78] sm:$0xff]
      %v2366 = vld [vmem:[%s4 + $0x80] sm:$0xff]
      %v2367 = vld [vmem:[%s4 + $0x88] sm:$0xff]
      %v2368 = vld [vmem:[%s4 + $0x90] sm:$0xff]
      %v2369 = vld [vmem:[%s4 + $0x98] sm:$0xff]
      %v2370 = vld [vmem:[%s4 + $0xa0] sm:$0xff]
      %v2371 = vld [vmem:[%s4 + $0xa8] sm:$0xff]
      %v2372 = vld [vmem:[%s4 + $0xb0] sm:$0xff]
      %v2373 = vld [vmem:[%s4 + $0xb8] sm:$0xff]
      %v2374 = vld [vmem:[%s4 + $0xc0] sm:$0xff]
      %v2375 = vld [vmem:[%s4 + $0xc8] sm:$0xff]
      %v2376 = vld [vmem:[%s4 + $0xd0] sm:$0xff]
      %v2377 = vld [vmem:[%s4 + $0xd8] sm:$0xff]
      %v2378 = vld [vmem:[%s4 + $0xe0] sm:$0xff]
      %v2379 = vld [vmem:[%s4 + $0xe8] sm:$0xff]
      %v2380 = vld [vmem:[%s4 + $0xf0] sm:$0xff]
      %v2381 = vld [vmem:[%s4 + $0xf8] sm:$0xff]
      %v2382 = vld [vmem:[%s4 + $0x100] sm:$0xff]
      %v2383 = vld [vmem:[%s4 + $0x108] sm:$0xff]
      %v2384 = vld [vmem:[%s4 + $0x110] sm:$0xff]
      %v2385 = vld [vmem:[%s4 + $0x118] sm:$0xff]
      %v2386 = vld [vmem:[%s4 + $0x120] sm:$0xff]
      %v2387 = vld [vmem:[%s4 + $0x128] sm:$0xff]
      %v2388 = vld [vmem:[%s4 + $0x130] sm:$0xff]
      %v2389 = vld [vmem:[%s4 + $0x138] sm:$0xff]
      %v2390 = vld [vmem:[%s4 + $0x140] sm:$0xff]
      %v2391 = vld [vmem:[%s4 + $0x148] sm:$0xff]
      %v2392 = vld [vmem:[%s4 + $0x150] sm:$0xff]
      %v2393 = vld [vmem:[%s4 + $0x158] sm:$0xff]
      %v2394 = vld [vmem:[%s4 + $0x160] sm:$0xff]
      %v2395 = vld [vmem:[%s4 + $0x168] sm:$0xff]
      %v2396 = vld [vmem:[%s4 + $0x170] sm:$0xff]
      %v2397 = vld [vmem:[%s4 + $0x178] sm:$0xff]
      %v2398 = vld [vmem:[%s4 + $0x180] sm:$0xff]
      %v2399 = vld [vmem:[%s4 + $0x188] sm:$0xff]
      %v2400 = vld [vmem:[%s4 + $0x190] sm:$0xff]
      %v2401 = vld [vmem:[%s4 + $0x198] sm:$0xff]
      %v2402 = vld [vmem:[%s4 + $0x1a0] sm:$0xff]
      %v2403 = vld [vmem:[%s4 + $0x1a8] sm:$0xff]
      %v2404 = vld [vmem:[%s4 + $0x1b0] sm:$0xff]
      %v2405 = vld [vmem:[%s4 + $0x1b8] sm:$0xff]
      %v2406 = vld [vmem:[%s4 + $0x1c0] sm:$0xff]
      %v2407 = vld [vmem:[%s4 + $0x1c8] sm:$0xff]
      %v2408 = vld [vmem:[%s4 + $0x1d0] sm:$0xff]
      %v2409 = vld [vmem:[%s4 + $0x1d8] sm:$0xff]
      %v2410 = vld [vmem:[%s4 + $0x1e0] sm:$0xff]
      %v2411 = vld [vmem:[%s4 + $0x1e8] sm:$0xff]
      %v2412 = vld [vmem:[%s4 + $0x1f0] sm:$0xff]
      %v2413 = vld [vmem:[%s4 + $0x1f8] sm:$0xff]
      %2415 = vset.pattern.permute.xlu0 0
      %2416 = vperm.xlu0 %2415, %v2350
      %v2417 = vpop.permute.xlu0 %2416
      %2420 = vset.pattern.permute.xlu0 0
      %2421 = vperm.xlu0 %2420, %v2351
      %v2422 = vpop.permute.xlu0 %2421
      %2425 = vset.pattern.permute.xlu0 0
      %2426 = vperm.xlu0 %2425, %v2352
      %v2427 = vpop.permute.xlu0 %2426
      %2430 = vset.pattern.permute.xlu0 0
      %2431 = vperm.xlu0 %2430, %v2353
      %v2432 = vpop.permute.xlu0 %2431
      %2435 = vset.pattern.permute.xlu0 0
      %2436 = vperm.xlu0 %2435, %v2354
      %v2437 = vpop.permute.xlu0 %2436
      %2440 = vset.pattern.permute.xlu0 0
      %2441 = vperm.xlu0 %2440, %v2355
      %v2442 = vpop.permute.xlu0 %2441
      %2445 = vset.pattern.permute.xlu0 0
      %2446 = vperm.xlu0 %2445, %v2356
      %v2447 = vpop.permute.xlu0 %2446
      %2450 = vset.pattern.permute.xlu0 0
      %2451 = vperm.xlu0 %2450, %v2357
      %v2452 = vpop.permute.xlu0 %2451
      %2455 = vset.pattern.permute.xlu0 0
      %2456 = vperm.xlu0 %2455, %v2358
      %v2457 = vpop.permute.xlu0 %2456
      %2460 = vset.pattern.permute.xlu0 0
      %2461 = vperm.xlu0 %2460, %v2359
      %v2462 = vpop.permute.xlu0 %2461
      %2465 = vset.pattern.permute.xlu0 0
      %2466 = vperm.xlu0 %2465, %v2360
      %v2467 = vpop.permute.xlu0 %2466
      %2470 = vset.pattern.permute.xlu0 0
      %2471 = vperm.xlu0 %2470, %v2361
      %v2472 = vpop.permute.xlu0 %2471
      %2475 = vset.pattern.permute.xlu0 0
      %2476 = vperm.xlu0 %2475, %v2362
      %v2477 = vpop.permute.xlu0 %2476
      %2480 = vset.pattern.permute.xlu0 0
      %2481 = vperm.xlu0 %2480, %v2363
      %v2482 = vpop.permute.xlu0 %2481
      %2485 = vset.pattern.permute.xlu0 0
      %2486 = vperm.xlu0 %2485, %v2364
      %v2487 = vpop.permute.xlu0 %2486
      %2490 = vset.pattern.permute.xlu0 0
      %2491 = vperm.xlu0 %2490, %v2365
      %v2492 = vpop.permute.xlu0 %2491
      %2495 = vset.pattern.permute.xlu0 0
      %2496 = vperm.xlu0 %2495, %v2366
      %v2497 = vpop.permute.xlu0 %2496
      %2500 = vset.pattern.permute.xlu0 0
      %2501 = vperm.xlu0 %2500, %v2367
      %v2502 = vpop.permute.xlu0 %2501
      %2505 = vset.pattern.permute.xlu0 0
      %2506 = vperm.xlu0 %2505, %v2368
      %v2507 = vpop.permute.xlu0 %2506
      %2510 = vset.pattern.permute.xlu0 0
      %2511 = vperm.xlu0 %2510, %v2369
      %v2512 = vpop.permute.xlu0 %2511
      %2515 = vset.pattern.permute.xlu0 0
      %2516 = vperm.xlu0 %2515, %v2370
      %v2517 = vpop.permute.xlu0 %2516
      %2520 = vset.pattern.permute.xlu0 0
      %2521 = vperm.xlu0 %2520, %v2371
      %v2522 = vpop.permute.xlu0 %2521
      %2525 = vset.pattern.permute.xlu0 0
      %2526 = vperm.xlu0 %2525, %v2372
      %v2527 = vpop.permute.xlu0 %2526
      %2530 = vset.pattern.permute.xlu0 0
      %2531 = vperm.xlu0 %2530, %v2373
      %v2532 = vpop.permute.xlu0 %2531
      %2535 = vset.pattern.permute.xlu0 0
      %2536 = vperm.xlu0 %2535, %v2374
      %v2537 = vpop.permute.xlu0 %2536
      %2540 = vset.pattern.permute.xlu0 0
      %2541 = vperm.xlu0 %2540, %v2375
      %v2542 = vpop.permute.xlu0 %2541
      %2545 = vset.pattern.permute.xlu0 0
      %2546 = vperm.xlu0 %2545, %v2376
      %v2547 = vpop.permute.xlu0 %2546
      %2550 = vset.pattern.permute.xlu0 0
      %2551 = vperm.xlu0 %2550, %v2377
      %v2552 = vpop.permute.xlu0 %2551
      %2555 = vset.pattern.permute.xlu0 0
      %2556 = vperm.xlu0 %2555, %v2378
      %v2557 = vpop.permute.xlu0 %2556
      %2560 = vset.pattern.permute.xlu0 0
      %2561 = vperm.xlu0 %2560, %v2379
      %v2562 = vpop.permute.xlu0 %2561
      %2565 = vset.pattern.permute.xlu0 0
      %2566 = vperm.xlu0 %2565, %v2380
      %v2567 = vpop.permute.xlu0 %2566
      %2570 = vset.pattern.permute.xlu0 0
      %2571 = vperm.xlu0 %2570, %v2381
      %v2572 = vpop.permute.xlu0 %2571
      %2575 = vset.pattern.permute.xlu0 0
      %2576 = vperm.xlu0 %2575, %v2382
      %v2577 = vpop.permute.xlu0 %2576
      %2580 = vset.pattern.permute.xlu0 0
      %2581 = vperm.xlu0 %2580, %v2383
      %v2582 = vpop.permute.xlu0 %2581
      %2585 = vset.pattern.permute.xlu0 0
      %2586 = vperm.xlu0 %2585, %v2384
      %v2587 = vpop.permute.xlu0 %2586
      %2590 = vset.pattern.permute.xlu0 0
      %2591 = vperm.xlu0 %2590, %v2385
      %v2592 = vpop.permute.xlu0 %2591
      %2595 = vset.pattern.permute.xlu0 0
      %2596 = vperm.xlu0 %2595, %v2386
      %v2597 = vpop.permute.xlu0 %2596
      %2600 = vset.pattern.permute.xlu0 0
      %2601 = vperm.xlu0 %2600, %v2387
      %v2602 = vpop.permute.xlu0 %2601
      %2605 = vset.pattern.permute.xlu0 0
      %2606 = vperm.xlu0 %2605, %v2388
      %v2607 = vpop.permute.xlu0 %2606
      %2610 = vset.pattern.permute.xlu0 0
      %2611 = vperm.xlu0 %2610, %v2389
      %v2612 = vpop.permute.xlu0 %2611
      %2615 = vset.pattern.permute.xlu0 0
      %2616 = vperm.xlu0 %2615, %v2390
      %v2617 = vpop.permute.xlu0 %2616
      %2620 = vset.pattern.permute.xlu0 0
      %2621 = vperm.xlu0 %2620, %v2391
      %v2622 = vpop.permute.xlu0 %2621
      %2625 = vset.pattern.permute.xlu0 0
      %2626 = vperm.xlu0 %2625, %v2392
      %v2627 = vpop.permute.xlu0 %2626
      %2630 = vset.pattern.permute.xlu0 0
      %2631 = vperm.xlu0 %2630, %v2393
      %v2632 = vpop.permute.xlu0 %2631
      %2635 = vset.pattern.permute.xlu0 0
      %2636 = vperm.xlu0 %2635, %v2394
      %v2637 = vpop.permute.xlu0 %2636
      %2640 = vset.pattern.permute.xlu0 0
      %2641 = vperm.xlu0 %2640, %v2395
      %v2642 = vpop.permute.xlu0 %2641
      %2645 = vset.pattern.permute.xlu0 0
      %2646 = vperm.xlu0 %2645, %v2396
      %v2647 = vpop.permute.xlu0 %2646
      %2650 = vset.pattern.permute.xlu0 0
      %2651 = vperm.xlu0 %2650, %v2397
      %v2652 = vpop.permute.xlu0 %2651
      %2655 = vset.pattern.permute.xlu0 0
      %2656 = vperm.xlu0 %2655, %v2398
      %v2657 = vpop.permute.xlu0 %2656
      %2660 = vset.pattern.permute.xlu0 0
      %2661 = vperm.xlu0 %2660, %v2399
      %v2662 = vpop.permute.xlu0 %2661
      %2665 = vset.pattern.permute.xlu0 0
      %2666 = vperm.xlu0 %2665, %v2400
      %v2667 = vpop.permute.xlu0 %2666
      %2670 = vset.pattern.permute.xlu0 0
      %2671 = vperm.xlu0 %2670, %v2401
      %v2672 = vpop.permute.xlu0 %2671
      %2675 = vset.pattern.permute.xlu0 0
      %2676 = vperm.xlu0 %2675, %v2402
      %v2677 = vpop.permute.xlu0 %2676
      %2680 = vset.pattern.permute.xlu0 0
      %2681 = vperm.xlu0 %2680, %v2403
      %v2682 = vpop.permute.xlu0 %2681
      %2685 = vset.pattern.permute.xlu0 0
      %2686 = vperm.xlu0 %2685, %v2404
      %v2687 = vpop.permute.xlu0 %2686
      %2690 = vset.pattern.permute.xlu0 0
      %2691 = vperm.xlu0 %2690, %v2405
      %v2692 = vpop.permute.xlu0 %2691
      %2695 = vset.pattern.permute.xlu0 0
      %2696 = vperm.xlu0 %2695, %v2406
      %v2697 = vpop.permute.xlu0 %2696
      %2700 = vset.pattern.permute.xlu0 0
      %2701 = vperm.xlu0 %2700, %v2407
      %v2702 = vpop.permute.xlu0 %2701
      %2705 = vset.pattern.permute.xlu0 0
      %2706 = vperm.xlu0 %2705, %v2408
      %v2707 = vpop.permute.xlu0 %2706
      %2710 = vset.pattern.permute.xlu0 0
      %2711 = vperm.xlu0 %2710, %v2409
      %v2712 = vpop.permute.xlu0 %2711
      %2715 = vset.pattern.permute.xlu0 0
      %2716 = vperm.xlu0 %2715, %v2410
      %v2717 = vpop.permute.xlu0 %2716
      %2720 = vset.pattern.permute.xlu0 0
      %2721 = vperm.xlu0 %2720, %v2411
      %v2722 = vpop.permute.xlu0 %2721
      %2725 = vset.pattern.permute.xlu0 0
      %2726 = vperm.xlu0 %2725, %v2412
      %v2727 = vpop.permute.xlu0 %2726
      %2730 = vset.pattern.permute.xlu0 0
      %2731 = vperm.xlu0 %2730, %v2413
      %v2732 = vpop.permute.xlu0 %2731
      %v2734 = vadd.f32 %v2222, %v2417
      %v2735 = vadd.f32 %v2223, %v2417
      %v2736 = vadd.f32 %v2224, %v2422
      %v2737 = vadd.f32 %v2225, %v2422
      %v2738 = vadd.f32 %v2226, %v2427
      %v2739 = vadd.f32 %v2227, %v2427
      %v2740 = vadd.f32 %v2228, %v2432
      %v2741 = vadd.f32 %v2229, %v2432
      %v2742 = vadd.f32 %v2230, %v2437
      %v2743 = vadd.f32 %v2231, %v2437
      %v2744 = vadd.f32 %v2232, %v2442
      %v2745 = vadd.f32 %v2233, %v2442
      %v2746 = vadd.f32 %v2234, %v2447
      %v2747 = vadd.f32 %v2235, %v2447
      %v2748 = vadd.f32 %v2236, %v2452
      %v2749 = vadd.f32 %v2237, %v2452
      %v2750 = vadd.f32 %v2238, %v2457
      %v2751 = vadd.f32 %v2239, %v2457
      %v2752 = vadd.f32 %v2240, %v2462
      %v2753 = vadd.f32 %v2241, %v2462
      %v2754 = vadd.f32 %v2242, %v2467
      %v2755 = vadd.f32 %v2243, %v2467
      %v2756 = vadd.f32 %v2244, %v2472
      %v2757 = vadd.f32 %v2245, %v2472
      %v2758 = vadd.f32 %v2246, %v2477
      %v2759 = vadd.f32 %v2247, %v2477
      %v2760 = vadd.f32 %v2248, %v2482
      %v2761 = vadd.f32 %v2249, %v2482
      %v2762 = vadd.f32 %v2250, %v2487
      %v2763 = vadd.f32 %v2251, %v2487
      %v2764 = vadd.f32 %v2252, %v2492
      %v2765 = vadd.f32 %v2253, %v2492
      %v2766 = vadd.f32 %v2254, %v2497
      %v2767 = vadd.f32 %v2255, %v2497
      %v2768 = vadd.f32 %v2256, %v2502
      %v2769 = vadd.f32 %v2257, %v2502
      %v2770 = vadd.f32 %v2258, %v2507
      %v2771 = vadd.f32 %v2259, %v2507
      %v2772 = vadd.f32 %v2260, %v2512
      %v2773 = vadd.f32 %v2261, %v2512
      %v2774 = vadd.f32 %v2262, %v2517
      %v2775 = vadd.f32 %v2263, %v2517
      %v2776 = vadd.f32 %v2264, %v2522
      %v2777 = vadd.f32 %v2265, %v2522
      %v2778 = vadd.f32 %v2266, %v2527
      %v2779 = vadd.f32 %v2267, %v2527
      %v2780 = vadd.f32 %v2268, %v2532
      %v2781 = vadd.f32 %v2269, %v2532
      %v2782 = vadd.f32 %v2270, %v2537
      %v2783 = vadd.f32 %v2271, %v2537
      %v2784 = vadd.f32 %v2272, %v2542
      %v2785 = vadd.f32 %v2273, %v2542
      %v2786 = vadd.f32 %v2274, %v2547
      %v2787 = vadd.f32 %v2275, %v2547
      %v2788 = vadd.f32 %v2276, %v2552
      %v2789 = vadd.f32 %v2277, %v2552
      %v2790 = vadd.f32 %v2278, %v2557
      %v2791 = vadd.f32 %v2279, %v2557
      %v2792 = vadd.f32 %v2280, %v2562
      %v2793 = vadd.f32 %v2281, %v2562
      %v2794 = vadd.f32 %v2282, %v2567
      %v2795 = vadd.f32 %v2283, %v2567
      %v2796 = vadd.f32 %v2284, %v2572
      %v2797 = vadd.f32 %v2285, %v2572
      %v2798 = vadd.f32 %v2286, %v2577
      %v2799 = vadd.f32 %v2287, %v2577
      %v2800 = vadd.f32 %v2288, %v2582
      %v2801 = vadd.f32 %v2289, %v2582
      %v2802 = vadd.f32 %v2290, %v2587
      %v2803 = vadd.f32 %v2291, %v2587
      %v2804 = vadd.f32 %v2292, %v2592
      %v2805 = vadd.f32 %v2293, %v2592
      %v2806 = vadd.f32 %v2294, %v2597
      %v2807 = vadd.f32 %v2295, %v2597
      %v2808 = vadd.f32 %v2296, %v2602
      %v2809 = vadd.f32 %v2297, %v2602
      %v2810 = vadd.f32 %v2298, %v2607
      %v2811 = vadd.f32 %v2299, %v2607
      %v2812 = vadd.f32 %v2300, %v2612
      %v2813 = vadd.f32 %v2301, %v2612
      %v2814 = vadd.f32 %v2302, %v2617
      %v2815 = vadd.f32 %v2303, %v2617
      %v2816 = vadd.f32 %v2304, %v2622
      %v2817 = vadd.f32 %v2305, %v2622
      %v2818 = vadd.f32 %v2306, %v2627
      %v2819 = vadd.f32 %v2307, %v2627
      %v2820 = vadd.f32 %v2308, %v2632
      %v2821 = vadd.f32 %v2309, %v2632
      %v2822 = vadd.f32 %v2310, %v2637
      %v2823 = vadd.f32 %v2311, %v2637
      %v2824 = vadd.f32 %v2312, %v2642
      %v2825 = vadd.f32 %v2313, %v2642
      %v2826 = vadd.f32 %v2314, %v2647
      %v2827 = vadd.f32 %v2315, %v2647
      %v2828 = vadd.f32 %v2316, %v2652
      %v2829 = vadd.f32 %v2317, %v2652
      %v2830 = vadd.f32 %v2318, %v2657
      %v2831 = vadd.f32 %v2319, %v2657
      %v2832 = vadd.f32 %v2320, %v2662
      %v2833 = vadd.f32 %v2321, %v2662
      %v2834 = vadd.f32 %v2322, %v2667
      %v2835 = vadd.f32 %v2323, %v2667
      %v2836 = vadd.f32 %v2324, %v2672
      %v2837 = vadd.f32 %v2325, %v2672
      %v2838 = vadd.f32 %v2326, %v2677
      %v2839 = vadd.f32 %v2327, %v2677
      %v2840 = vadd.f32 %v2328, %v2682
      %v2841 = vadd.f32 %v2329, %v2682
      %v2842 = vadd.f32 %v2330, %v2687
      %v2843 = vadd.f32 %v2331, %v2687
      %v2844 = vadd.f32 %v2332, %v2692
      %v2845 = vadd.f32 %v2333, %v2692
      %v2846 = vadd.f32 %v2334, %v2697
      %v2847 = vadd.f32 %v2335, %v2697
      %v2848 = vadd.f32 %v2336, %v2702
      %v2849 = vadd.f32 %v2337, %v2702
      %v2850 = vadd.f32 %v2338, %v2707
      %v2851 = vadd.f32 %v2339, %v2707
      %v2852 = vadd.f32 %v2340, %v2712
      %v2853 = vadd.f32 %v2341, %v2712
      %v2854 = vadd.f32 %v2342, %v2717
      %v2855 = vadd.f32 %v2343, %v2717
      %v2856 = vadd.f32 %v2344, %v2722
      %v2857 = vadd.f32 %v2345, %v2722
      %v2858 = vadd.f32 %v2346, %v2727
      %v2859 = vadd.f32 %v2347, %v2727
      %v2860 = vadd.f32 %v2348, %v2732
      %v2861 = vadd.f32 %v2349, %v2732
      %v2862 = vmax.f32 %v2734, 0.0
      %v2863 = vmax.f32 %v2735, 0.0
      %v2864 = vmax.f32 %v2736, 0.0
      %v2865 = vmax.f32 %v2737, 0.0
      %v2866 = vmax.f32 %v2738, 0.0
      %v2867 = vmax.f32 %v2739, 0.0
      %v2868 = vmax.f32 %v2740, 0.0
      %v2869 = vmax.f32 %v2741, 0.0
      %v2870 = vmax.f32 %v2742, 0.0
      %v2871 = vmax.f32 %v2743, 0.0
      %v2872 = vmax.f32 %v2744, 0.0
      %v2873 = vmax.f32 %v2745, 0.0
      %v2874 = vmax.f32 %v2746, 0.0
      %v2875 = vmax.f32 %v2747, 0.0
      %v2876 = vmax.f32 %v2748, 0.0
      %v2877 = vmax.f32 %v2749, 0.0
      %v2878 = vmax.f32 %v2750, 0.0
      %v2879 = vmax.f32 %v2751, 0.0
      %v2880 = vmax.f32 %v2752, 0.0
      %v2881 = vmax.f32 %v2753, 0.0
      %v2882 = vmax.f32 %v2754, 0.0
      %v2883 = vmax.f32 %v2755, 0.0
      %v2884 = vmax.f32 %v2756, 0.0
      %v2885 = vmax.f32 %v2757, 0.0
      %v2886 = vmax.f32 %v2758, 0.0
      %v2887 = vmax.f32 %v2759, 0.0
      %v2888 = vmax.f32 %v2760, 0.0
      %v2889 = vmax.f32 %v2761, 0.0
      %v2890 = vmax.f32 %v2762, 0.0
      %v2891 = vmax.f32 %v2763, 0.0
      %v2892 = vmax.f32 %v2764, 0.0
      %v2893 = vmax.f32 %v2765, 0.0
      %v2894 = vmax.f32 %v2766, 0.0
      %v2895 = vmax.f32 %v2767, 0.0
      %v2896 = vmax.f32 %v2768, 0.0
      %v2897 = vmax.f32 %v2769, 0.0
      %v2898 = vmax.f32 %v2770, 0.0
      %v2899 = vmax.f32 %v2771, 0.0
      %v2900 = vmax.f32 %v2772, 0.0
      %v2901 = vmax.f32 %v2773, 0.0
      %v2902 = vmax.f32 %v2774, 0.0
      %v2903 = vmax.f32 %v2775, 0.0
      %v2904 = vmax.f32 %v2776, 0.0
      %v2905 = vmax.f32 %v2777, 0.0
      %v2906 = vmax.f32 %v2778, 0.0
      %v2907 = vmax.f32 %v2779, 0.0
      %v2908 = vmax.f32 %v2780, 0.0
      %v2909 = vmax.f32 %v2781, 0.0
      %v2910 = vmax.f32 %v2782, 0.0
      %v2911 = vmax.f32 %v2783, 0.0
      %v2912 = vmax.f32 %v2784, 0.0
      %v2913 = vmax.f32 %v2785, 0.0
      %v2914 = vmax.f32 %v2786, 0.0
      %v2915 = vmax.f32 %v2787, 0.0
      %v2916 = vmax.f32 %v2788, 0.0
      %v2917 = vmax.f32 %v2789, 0.0
      %v2918 = vmax.f32 %v2790, 0.0
      %v2919 = vmax.f32 %v2791, 0.0
      %v2920 = vmax.f32 %v2792, 0.0
      %v2921 = vmax.f32 %v2793, 0.0
      %v2922 = vmax.f32 %v2794, 0.0
      %v2923 = vmax.f32 %v2795, 0.0
      %v2924 = vmax.f32 %v2796, 0.0
      %v2925 = vmax.f32 %v2797, 0.0
      %v2926 = vmax.f32 %v2798, 0.0
      %v2927 = vmax.f32 %v2799, 0.0
      %v2928 = vmax.f32 %v2800, 0.0
      %v2929 = vmax.f32 %v2801, 0.0
      %v2930 = vmax.f32 %v2802, 0.0
      %v2931 = vmax.f32 %v2803, 0.0
      %v2932 = vmax.f32 %v2804, 0.0
      %v2933 = vmax.f32 %v2805, 0.0
      %v2934 = vmax.f32 %v2806, 0.0
      %v2935 = vmax.f32 %v2807, 0.0
      %v2936 = vmax.f32 %v2808, 0.0
      %v2937 = vmax.f32 %v2809, 0.0
      %v2938 = vmax.f32 %v2810, 0.0
      %v2939 = vmax.f32 %v2811, 0.0
      %v2940 = vmax.f32 %v2812, 0.0
      %v2941 = vmax.f32 %v2813, 0.0
      %v2942 = vmax.f32 %v2814, 0.0
      %v2943 = vmax.f32 %v2815, 0.0
      %v2944 = vmax.f32 %v2816, 0.0
      %v2945 = vmax.f32 %v2817, 0.0
      %v2946 = vmax.f32 %v2818, 0.0
      %v2947 = vmax.f32 %v2819, 0.0
      %v2948 = vmax.f32 %v2820, 0.0
      %v2949 = vmax.f32 %v2821, 0.0
      %v2950 = vmax.f32 %v2822, 0.0
      %v2951 = vmax.f32 %v2823, 0.0
      %v2952 = vmax.f32 %v2824, 0.0
      %v2953 = vmax.f32 %v2825, 0.0
      %v2954 = vmax.f32 %v2826, 0.0
      %v2955 = vmax.f32 %v2827, 0.0
      %v2956 = vmax.f32 %v2828, 0.0
      %v2957 = vmax.f32 %v2829, 0.0
      %v2958 = vmax.f32 %v2830, 0.0
      %v2959 = vmax.f32 %v2831, 0.0
      %v2960 = vmax.f32 %v2832, 0.0
      %v2961 = vmax.f32 %v2833, 0.0
      %v2962 = vmax.f32 %v2834, 0.0
      %v2963 = vmax.f32 %v2835, 0.0
      %v2964 = vmax.f32 %v2836, 0.0
      %v2965 = vmax.f32 %v2837, 0.0
      %v2966 = vmax.f32 %v2838, 0.0
      %v2967 = vmax.f32 %v2839, 0.0
      %v2968 = vmax.f32 %v2840, 0.0
      %v2969 = vmax.f32 %v2841, 0.0
      %v2970 = vmax.f32 %v2842, 0.0
      %v2971 = vmax.f32 %v2843, 0.0
      %v2972 = vmax.f32 %v2844, 0.0
      %v2973 = vmax.f32 %v2845, 0.0
      %v2974 = vmax.f32 %v2846, 0.0
      %v2975 = vmax.f32 %v2847, 0.0
      %v2976 = vmax.f32 %v2848, 0.0
      %v2977 = vmax.f32 %v2849, 0.0
      %v2978 = vmax.f32 %v2850, 0.0
      %v2979 = vmax.f32 %v2851, 0.0
      %v2980 = vmax.f32 %v2852, 0.0
      %v2981 = vmax.f32 %v2853, 0.0
      %v2982 = vmax.f32 %v2854, 0.0
      %v2983 = vmax.f32 %v2855, 0.0
      %v2984 = vmax.f32 %v2856, 0.0
      %v2985 = vmax.f32 %v2857, 0.0
      %v2986 = vmax.f32 %v2858, 0.0
      %v2987 = vmax.f32 %v2859, 0.0
      %v2988 = vmax.f32 %v2860, 0.0
      %v2989 = vmax.f32 %v2861, 0.0
      // Predicated region
      $region53: #{tpu_custom_call.1} parent=47 // pred_check
        %p2990 = pneg %p365
      $region54: #{tpu_custom_call.1} parent=47 // pred_check_branch
        %2992 = sbr.rel (%p2990) target = $region56
      $region55: #{tpu_custom_call.1} parent=47 // pred_region
        %v2993 = vld [vmem:[#allocation2] sm:$0xff]
        %v2994 = vld [vmem:[#allocation2 + $0x8] sm:$0xff]
        %v2995 = vld [vmem:[#allocation2 + $0x10] sm:$0xff]
        %v2996 = vld [vmem:[#allocation2 + $0x18] sm:$0xff]
        %v2997 = vld [vmem:[#allocation2 + $0x20] sm:$0xff]
        %v2998 = vld [vmem:[#allocation2 + $0x28] sm:$0xff]
        %v2999 = vld [vmem:[#allocation2 + $0x30] sm:$0xff]
        %v3000 = vld [vmem:[#allocation2 + $0x38] sm:$0xff]
        %v3001 = vld [vmem:[#allocation2 + $0x40] sm:$0xff]
        %v3002 = vld [vmem:[#allocation2 + $0x48] sm:$0xff]
        %v3003 = vld [vmem:[#allocation2 + $0x50] sm:$0xff]
        %v3004 = vld [vmem:[#allocation2 + $0x58] sm:$0xff]
        %v3005 = vld [vmem:[#allocation2 + $0x60] sm:$0xff]
        %v3006 = vld [vmem:[#allocation2 + $0x68] sm:$0xff]
        %v3007 = vld [vmem:[#allocation2 + $0x70] sm:$0xff]
        %v3008 = vld [vmem:[#allocation2 + $0x78] sm:$0xff]
        %v3009 = vld [vmem:[#allocation2 + $0x80] sm:$0xff]
        %v3010 = vld [vmem:[#allocation2 + $0x88] sm:$0xff]
        %v3011 = vld [vmem:[#allocation2 + $0x90] sm:$0xff]
        %v3012 = vld [vmem:[#allocation2 + $0x98] sm:$0xff]
        %v3013 = vld [vmem:[#allocation2 + $0xa0] sm:$0xff]
        %v3014 = vld [vmem:[#allocation2 + $0xa8] sm:$0xff]
        %v3015 = vld [vmem:[#allocation2 + $0xb0] sm:$0xff]
        %v3016 = vld [vmem:[#allocation2 + $0xb8] sm:$0xff]
        %v3017 = vld [vmem:[#allocation2 + $0xc0] sm:$0xff]
        %v3018 = vld [vmem:[#allocation2 + $0xc8] sm:$0xff]
        %v3019 = vld [vmem:[#allocation2 + $0xd0] sm:$0xff]
        %v3020 = vld [vmem:[#allocation2 + $0xd8] sm:$0xff]
        %v3021 = vld [vmem:[#allocation2 + $0xe0] sm:$0xff]
        %v3022 = vld [vmem:[#allocation2 + $0xe8] sm:$0xff]
        %v3023 = vld [vmem:[#allocation2 + $0xf0] sm:$0xff]
        %v3024 = vld [vmem:[#allocation2 + $0xf8] sm:$0xff]
        %v3025 = vld [vmem:[#allocation2 + $0x100] sm:$0xff]
        %v3026 = vld [vmem:[#allocation2 + $0x108] sm:$0xff]
        %v3027 = vld [vmem:[#allocation2 + $0x110] sm:$0xff]
        %v3028 = vld [vmem:[#allocation2 + $0x118] sm:$0xff]
        %v3029 = vld [vmem:[#allocation2 + $0x120] sm:$0xff]
        %v3030 = vld [vmem:[#allocation2 + $0x128] sm:$0xff]
        %v3031 = vld [vmem:[#allocation2 + $0x130] sm:$0xff]
        %v3032 = vld [vmem:[#allocation2 + $0x138] sm:$0xff]
        %v3033 = vld [vmem:[#allocation2 + $0x140] sm:$0xff]
        %v3034 = vld [vmem:[#allocation2 + $0x148] sm:$0xff]
        %v3035 = vld [vmem:[#allocation2 + $0x150] sm:$0xff]
        %v3036 = vld [vmem:[#allocation2 + $0x158] sm:$0xff]
        %v3037 = vld [vmem:[#allocation2 + $0x160] sm:$0xff]
        %v3038 = vld [vmem:[#allocation2 + $0x168] sm:$0xff]
        %v3039 = vld [vmem:[#allocation2 + $0x170] sm:$0xff]
        %v3040 = vld [vmem:[#allocation2 + $0x178] sm:$0xff]
        %v3041 = vld [vmem:[#allocation2 + $0x180] sm:$0xff]
        %v3042 = vld [vmem:[#allocation2 + $0x188] sm:$0xff]
        %v3043 = vld [vmem:[#allocation2 + $0x190] sm:$0xff]
        %v3044 = vld [vmem:[#allocation2 + $0x198] sm:$0xff]
        %v3045 = vld [vmem:[#allocation2 + $0x1a0] sm:$0xff]
        %v3046 = vld [vmem:[#allocation2 + $0x1a8] sm:$0xff]
        %v3047 = vld [vmem:[#allocation2 + $0x1b0] sm:$0xff]
        %v3048 = vld [vmem:[#allocation2 + $0x1b8] sm:$0xff]
        %v3049 = vld [vmem:[#allocation2 + $0x1c0] sm:$0xff]
        %v3050 = vld [vmem:[#allocation2 + $0x1c8] sm:$0xff]
        %v3051 = vld [vmem:[#allocation2 + $0x1d0] sm:$0xff]
        %v3052 = vld [vmem:[#allocation2 + $0x1d8] sm:$0xff]
        %v3053 = vld [vmem:[#allocation2 + $0x1e0] sm:$0xff]
        %v3054 = vld [vmem:[#allocation2 + $0x1e8] sm:$0xff]
        %v3055 = vld [vmem:[#allocation2 + $0x1f0] sm:$0xff]
        %v3056 = vld [vmem:[#allocation2 + $0x1f8] sm:$0xff]
        %v3057 = vadd.f32 %v2862, %v2863
        %3058 = vadd.xlane.f32.xlu0 %v3057
        %v3059 = vpop.xlane.xlu0 %3058
        %v3060 = vadd.f32 %v2864, %v2865
        %3061 = vadd.xlane.f32.xlu0 %v3060
        %v3062 = vpop.xlane.xlu0 %3061
        %v3063 = vadd.f32 %v2866, %v2867
        %3064 = vadd.xlane.f32.xlu0 %v3063
        %v3065 = vpop.xlane.xlu0 %3064
        %v3066 = vadd.f32 %v2868, %v2869
        %3067 = vadd.xlane.f32.xlu0 %v3066
        %v3068 = vpop.xlane.xlu0 %3067
        %v3069 = vadd.f32 %v2870, %v2871
        %3070 = vadd.xlane.f32.xlu0 %v3069
        %v3071 = vpop.xlane.xlu0 %3070
        %v3072 = vadd.f32 %v2872, %v2873
        %3073 = vadd.xlane.f32.xlu0 %v3072
        %v3074 = vpop.xlane.xlu0 %3073
        %v3075 = vadd.f32 %v2874, %v2875
        %3076 = vadd.xlane.f32.xlu0 %v3075
        %v3077 = vpop.xlane.xlu0 %3076
        %v3078 = vadd.f32 %v2876, %v2877
        %3079 = vadd.xlane.f32.xlu0 %v3078
        %v3080 = vpop.xlane.xlu0 %3079
        %v3081 = vadd.f32 %v2878, %v2879
        %3082 = vadd.xlane.f32.xlu0 %v3081
        %v3083 = vpop.xlane.xlu0 %3082
        %v3084 = vadd.f32 %v2880, %v2881
        %3085 = vadd.xlane.f32.xlu0 %v3084
        %v3086 = vpop.xlane.xlu0 %3085
        %v3087 = vadd.f32 %v2882, %v2883
        %3088 = vadd.xlane.f32.xlu0 %v3087
        %v3089 = vpop.xlane.xlu0 %3088
        %v3090 = vadd.f32 %v2884, %v2885
        %3091 = vadd.xlane.f32.xlu0 %v3090
        %v3092 = vpop.xlane.xlu0 %3091
        %v3093 = vadd.f32 %v2886, %v2887
        %3094 = vadd.xlane.f32.xlu0 %v3093
        %v3095 = vpop.xlane.xlu0 %3094
        %v3096 = vadd.f32 %v2888, %v2889
        %3097 = vadd.xlane.f32.xlu0 %v3096
        %v3098 = vpop.xlane.xlu0 %3097
        %v3099 = vadd.f32 %v2890, %v2891
        %3100 = vadd.xlane.f32.xlu0 %v3099
        %v3101 = vpop.xlane.xlu0 %3100
        %v3102 = vadd.f32 %v2892, %v2893
        %3103 = vadd.xlane.f32.xlu0 %v3102
        %v3104 = vpop.xlane.xlu0 %3103
        %v3105 = vadd.f32 %v2894, %v2895
        %3106 = vadd.xlane.f32.xlu0 %v3105
        %v3107 = vpop.xlane.xlu0 %3106
        %v3108 = vadd.f32 %v2896, %v2897
        %3109 = vadd.xlane.f32.xlu0 %v3108
        %v3110 = vpop.xlane.xlu0 %3109
        %v3111 = vadd.f32 %v2898, %v2899
        %3112 = vadd.xlane.f32.xlu0 %v3111
        %v3113 = vpop.xlane.xlu0 %3112
        %v3114 = vadd.f32 %v2900, %v2901
        %3115 = vadd.xlane.f32.xlu0 %v3114
        %v3116 = vpop.xlane.xlu0 %3115
        %v3117 = vadd.f32 %v2902, %v2903
        %3118 = vadd.xlane.f32.xlu0 %v3117
        %v3119 = vpop.xlane.xlu0 %3118
        %v3120 = vadd.f32 %v2904, %v2905
        %3121 = vadd.xlane.f32.xlu0 %v3120
        %v3122 = vpop.xlane.xlu0 %3121
        %v3123 = vadd.f32 %v2906, %v2907
        %3124 = vadd.xlane.f32.xlu0 %v3123
        %v3125 = vpop.xlane.xlu0 %3124
        %v3126 = vadd.f32 %v2908, %v2909
        %3127 = vadd.xlane.f32.xlu0 %v3126
        %v3128 = vpop.xlane.xlu0 %3127
        %v3129 = vadd.f32 %v2910, %v2911
        %3130 = vadd.xlane.f32.xlu0 %v3129
        %v3131 = vpop.xlane.xlu0 %3130
        %v3132 = vadd.f32 %v2912, %v2913
        %3133 = vadd.xlane.f32.xlu0 %v3132
        %v3134 = vpop.xlane.xlu0 %3133
        %v3135 = vadd.f32 %v2914, %v2915
        %3136 = vadd.xlane.f32.xlu0 %v3135
        %v3137 = vpop.xlane.xlu0 %3136
        %v3138 = vadd.f32 %v2916, %v2917
        %3139 = vadd.xlane.f32.xlu0 %v3138
        %v3140 = vpop.xlane.xlu0 %3139
        %v3141 = vadd.f32 %v2918, %v2919
        %3142 = vadd.xlane.f32.xlu0 %v3141
        %v3143 = vpop.xlane.xlu0 %3142
        %v3144 = vadd.f32 %v2920, %v2921
        %3145 = vadd.xlane.f32.xlu0 %v3144
        %v3146 = vpop.xlane.xlu0 %3145
        %v3147 = vadd.f32 %v2922, %v2923
        %3148 = vadd.xlane.f32.xlu0 %v3147
        %v3149 = vpop.xlane.xlu0 %3148
        %v3150 = vadd.f32 %v2924, %v2925
        %3151 = vadd.xlane.f32.xlu0 %v3150
        %v3152 = vpop.xlane.xlu0 %3151
        %v3153 = vadd.f32 %v2926, %v2927
        %3154 = vadd.xlane.f32.xlu0 %v3153
        %v3155 = vpop.xlane.xlu0 %3154
        %v3156 = vadd.f32 %v2928, %v2929
        %3157 = vadd.xlane.f32.xlu0 %v3156
        %v3158 = vpop.xlane.xlu0 %3157
        %v3159 = vadd.f32 %v2930, %v2931
        %3160 = vadd.xlane.f32.xlu0 %v3159
        %v3161 = vpop.xlane.xlu0 %3160
        %v3162 = vadd.f32 %v2932, %v2933
        %3163 = vadd.xlane.f32.xlu0 %v3162
        %v3164 = vpop.xlane.xlu0 %3163
        %v3165 = vadd.f32 %v2934, %v2935
        %3166 = vadd.xlane.f32.xlu0 %v3165
        %v3167 = vpop.xlane.xlu0 %3166
        %v3168 = vadd.f32 %v2936, %v2937
        %3169 = vadd.xlane.f32.xlu0 %v3168
        %v3170 = vpop.xlane.xlu0 %3169
        %v3171 = vadd.f32 %v2938, %v2939
        %3172 = vadd.xlane.f32.xlu0 %v3171
        %v3173 = vpop.xlane.xlu0 %3172
        %v3174 = vadd.f32 %v2940, %v2941
        %3175 = vadd.xlane.f32.xlu0 %v3174
        %v3176 = vpop.xlane.xlu0 %3175
        %v3177 = vadd.f32 %v2942, %v2943
        %3178 = vadd.xlane.f32.xlu0 %v3177
        %v3179 = vpop.xlane.xlu0 %3178
        %v3180 = vadd.f32 %v2944, %v2945
        %3181 = vadd.xlane.f32.xlu0 %v3180
        %v3182 = vpop.xlane.xlu0 %3181
        %v3183 = vadd.f32 %v2946, %v2947
        %3184 = vadd.xlane.f32.xlu0 %v3183
        %v3185 = vpop.xlane.xlu0 %3184
        %v3186 = vadd.f32 %v2948, %v2949
        %3187 = vadd.xlane.f32.xlu0 %v3186
        %v3188 = vpop.xlane.xlu0 %3187
        %v3189 = vadd.f32 %v2950, %v2951
        %3190 = vadd.xlane.f32.xlu0 %v3189
        %v3191 = vpop.xlane.xlu0 %3190
        %v3192 = vadd.f32 %v2952, %v2953
        %3193 = vadd.xlane.f32.xlu0 %v3192
        %v3194 = vpop.xlane.xlu0 %3193
        %v3195 = vadd.f32 %v2954, %v2955
        %3196 = vadd.xlane.f32.xlu0 %v3195
        %v3197 = vpop.xlane.xlu0 %3196
        %v3198 = vadd.f32 %v2956, %v2957
        %3199 = vadd.xlane.f32.xlu0 %v3198
        %v3200 = vpop.xlane.xlu0 %3199
        %v3201 = vadd.f32 %v2958, %v2959
        %3202 = vadd.xlane.f32.xlu0 %v3201
        %v3203 = vpop.xlane.xlu0 %3202
        %v3204 = vadd.f32 %v2960, %v2961
        %3205 = vadd.xlane.f32.xlu0 %v3204
        %v3206 = vpop.xlane.xlu0 %3205
        %v3207 = vadd.f32 %v2962, %v2963
        %3208 = vadd.xlane.f32.xlu0 %v3207
        %v3209 = vpop.xlane.xlu0 %3208
        %v3210 = vadd.f32 %v2964, %v2965
        %3211 = vadd.xlane.f32.xlu0 %v3210
        %v3212 = vpop.xlane.xlu0 %3211
        %v3213 = vadd.f32 %v2966, %v2967
        %3214 = vadd.xlane.f32.xlu0 %v3213
        %v3215 = vpop.xlane.xlu0 %3214
        %v3216 = vadd.f32 %v2968, %v2969
        %3217 = vadd.xlane.f32.xlu0 %v3216
        %v3218 = vpop.xlane.xlu0 %3217
        %v3219 = vadd.f32 %v2970, %v2971
        %3220 = vadd.xlane.f32.xlu0 %v3219
        %v3221 = vpop.xlane.xlu0 %3220
        %v3222 = vadd.f32 %v2972, %v2973
        %3223 = vadd.xlane.f32.xlu0 %v3222
        %v3224 = vpop.xlane.xlu0 %3223
        %v3225 = vadd.f32 %v2974, %v2975
        %3226 = vadd.xlane.f32.xlu0 %v3225
        %v3227 = vpop.xlane.xlu0 %3226
        %v3228 = vadd.f32 %v2976, %v2977
        %3229 = vadd.xlane.f32.xlu0 %v3228
        %v3230 = vpop.xlane.xlu0 %3229
        %v3231 = vadd.f32 %v2978, %v2979
        %3232 = vadd.xlane.f32.xlu0 %v3231
        %v3233 = vpop.xlane.xlu0 %3232
        %v3234 = vadd.f32 %v2980, %v2981
        %3235 = vadd.xlane.f32.xlu0 %v3234
        %v3236 = vpop.xlane.xlu0 %3235
        %v3237 = vadd.f32 %v2982, %v2983
        %3238 = vadd.xlane.f32.xlu0 %v3237
        %v3239 = vpop.xlane.xlu0 %3238
        %v3240 = vadd.f32 %v2984, %v2985
        %3241 = vadd.xlane.f32.xlu0 %v3240
        %v3242 = vpop.xlane.xlu0 %3241
        %v3243 = vadd.f32 %v2986, %v2987
        %3244 = vadd.xlane.f32.xlu0 %v3243
        %v3245 = vpop.xlane.xlu0 %3244
        %v3246 = vadd.f32 %v2988, %v2989
        %3247 = vadd.xlane.f32.xlu0 %v3246
        %v3248 = vpop.xlane.xlu0 %3247
        %v3249 = vadd.f32 %v2993, %v3059
        %v3250 = vadd.f32 %v2994, %v3062
        %v3251 = vadd.f32 %v2995, %v3065
        %v3252 = vadd.f32 %v2996, %v3068
        %v3253 = vadd.f32 %v2997, %v3071
        %v3254 = vadd.f32 %v2998, %v3074
        %v3255 = vadd.f32 %v2999, %v3077
        %v3256 = vadd.f32 %v3000, %v3080
        %v3257 = vadd.f32 %v3001, %v3083
        %v3258 = vadd.f32 %v3002, %v3086
        %v3259 = vadd.f32 %v3003, %v3089
        %v3260 = vadd.f32 %v3004, %v3092
        %v3261 = vadd.f32 %v3005, %v3095
        %v3262 = vadd.f32 %v3006, %v3098
        %v3263 = vadd.f32 %v3007, %v3101
        %v3264 = vadd.f32 %v3008, %v3104
        %v3265 = vadd.f32 %v3009, %v3107
        %v3266 = vadd.f32 %v3010, %v3110
        %v3267 = vadd.f32 %v3011, %v3113
        %v3268 = vadd.f32 %v3012, %v3116
        %v3269 = vadd.f32 %v3013, %v3119
        %v3270 = vadd.f32 %v3014, %v3122
        %v3271 = vadd.f32 %v3015, %v3125
        %v3272 = vadd.f32 %v3016, %v3128
        %v3273 = vadd.f32 %v3017, %v3131
        %v3274 = vadd.f32 %v3018, %v3134
        %v3275 = vadd.f32 %v3019, %v3137
        %v3276 = vadd.f32 %v3020, %v3140
        %v3277 = vadd.f32 %v3021, %v3143
        %v3278 = vadd.f32 %v3022, %v3146
        %v3279 = vadd.f32 %v3023, %v3149
        %v3280 = vadd.f32 %v3024, %v3152
        %v3281 = vadd.f32 %v3025, %v3155
        %v3282 = vadd.f32 %v3026, %v3158
        %v3283 = vadd.f32 %v3027, %v3161
        %v3284 = vadd.f32 %v3028, %v3164
        %v3285 = vadd.f32 %v3029, %v3167
        %v3286 = vadd.f32 %v3030, %v3170
        %v3287 = vadd.f32 %v3031, %v3173
        %v3288 = vadd.f32 %v3032, %v3176
        %v3289 = vadd.f32 %v3033, %v3179
        %v3290 = vadd.f32 %v3034, %v3182
        %v3291 = vadd.f32 %v3035, %v3185
        %v3292 = vadd.f32 %v3036, %v3188
        %v3293 = vadd.f32 %v3037, %v3191
        %v3294 = vadd.f32 %v3038, %v3194
        %v3295 = vadd.f32 %v3039, %v3197
        %v3296 = vadd.f32 %v3040, %v3200
        %v3297 = vadd.f32 %v3041, %v3203
        %v3298 = vadd.f32 %v3042, %v3206
        %v3299 = vadd.f32 %v3043, %v3209
        %v3300 = vadd.f32 %v3044, %v3212
        %v3301 = vadd.f32 %v3045, %v3215
        %v3302 = vadd.f32 %v3046, %v3218
        %v3303 = vadd.f32 %v3047, %v3221
        %v3304 = vadd.f32 %v3048, %v3224
        %v3305 = vadd.f32 %v3049, %v3227
        %v3306 = vadd.f32 %v3050, %v3230
        %v3307 = vadd.f32 %v3051, %v3233
        %v3308 = vadd.f32 %v3052, %v3236
        %v3309 = vadd.f32 %v3053, %v3239
        %v3310 = vadd.f32 %v3054, %v3242
        %v3311 = vadd.f32 %v3055, %v3245
        %v3312 = vadd.f32 %v3056, %v3248
        %vm3313 = vcmask 7168
        %3314 = vst.msk [vmem:[#allocation2] sm:$0xff] %vm3313, %v3249
        %3315 = vst.msk [vmem:[#allocation2 + $0x8] sm:$0xff] %vm3313, %v3250
        %3316 = vst.msk [vmem:[#allocation2 + $0x10] sm:$0xff] %vm3313, %v3251
        %3317 = vst.msk [vmem:[#allocation2 + $0x18] sm:$0xff] %vm3313, %v3252
        %3318 = vst.msk [vmem:[#allocation2 + $0x20] sm:$0xff] %vm3313, %v3253
        %3319 = vst.msk [vmem:[#allocation2 + $0x28] sm:$0xff] %vm3313, %v3254
        %3320 = vst.msk [vmem:[#allocation2 + $0x30] sm:$0xff] %vm3313, %v3255
        %3321 = vst.msk [vmem:[#allocation2 + $0x38] sm:$0xff] %vm3313, %v3256
        %3322 = vst.msk [vmem:[#allocation2 + $0x40] sm:$0xff] %vm3313, %v3257
        %3323 = vst.msk [vmem:[#allocation2 + $0x48] sm:$0xff] %vm3313, %v3258
        %3324 = vst.msk [vmem:[#allocation2 + $0x50] sm:$0xff] %vm3313, %v3259
        %3325 = vst.msk [vmem:[#allocation2 + $0x58] sm:$0xff] %vm3313, %v3260
        %3326 = vst.msk [vmem:[#allocation2 + $0x60] sm:$0xff] %vm3313, %v3261
        %3327 = vst.msk [vmem:[#allocation2 + $0x68] sm:$0xff] %vm3313, %v3262
        %3328 = vst.msk [vmem:[#allocation2 + $0x70] sm:$0xff] %vm3313, %v3263
        %3329 = vst.msk [vmem:[#allocation2 + $0x78] sm:$0xff] %vm3313, %v3264
        %3330 = vst.msk [vmem:[#allocation2 + $0x80] sm:$0xff] %vm3313, %v3265
        %3331 = vst.msk [vmem:[#allocation2 + $0x88] sm:$0xff] %vm3313, %v3266
        %3332 = vst.msk [vmem:[#allocation2 + $0x90] sm:$0xff] %vm3313, %v3267
        %3333 = vst.msk [vmem:[#allocation2 + $0x98] sm:$0xff] %vm3313, %v3268
        %3334 = vst.msk [vmem:[#allocation2 + $0xa0] sm:$0xff] %vm3313, %v3269
        %3335 = vst.msk [vmem:[#allocation2 + $0xa8] sm:$0xff] %vm3313, %v3270
        %3336 = vst.msk [vmem:[#allocation2 + $0xb0] sm:$0xff] %vm3313, %v3271
        %3337 = vst.msk [vmem:[#allocation2 + $0xb8] sm:$0xff] %vm3313, %v3272
        %3338 = vst.msk [vmem:[#allocation2 + $0xc0] sm:$0xff] %vm3313, %v3273
        %3339 = vst.msk [vmem:[#allocation2 + $0xc8] sm:$0xff] %vm3313, %v3274
        %3340 = vst.msk [vmem:[#allocation2 + $0xd0] sm:$0xff] %vm3313, %v3275
        %3341 = vst.msk [vmem:[#allocation2 + $0xd8] sm:$0xff] %vm3313, %v3276
        %3342 = vst.msk [vmem:[#allocation2 + $0xe0] sm:$0xff] %vm3313, %v3277
        %3343 = vst.msk [vmem:[#allocation2 + $0xe8] sm:$0xff] %vm3313, %v3278
        %3344 = vst.msk [vmem:[#allocation2 + $0xf0] sm:$0xff] %vm3313, %v3279
        %3345 = vst.msk [vmem:[#allocation2 + $0xf8] sm:$0xff] %vm3313, %v3280
        %3346 = vst.msk [vmem:[#allocation2 + $0x100] sm:$0xff] %vm3313, %v3281
        %3347 = vst.msk [vmem:[#allocation2 + $0x108] sm:$0xff] %vm3313, %v3282
        %3348 = vst.msk [vmem:[#allocation2 + $0x110] sm:$0xff] %vm3313, %v3283
        %3349 = vst.msk [vmem:[#allocation2 + $0x118] sm:$0xff] %vm3313, %v3284
        %3350 = vst.msk [vmem:[#allocation2 + $0x120] sm:$0xff] %vm3313, %v3285
        %3351 = vst.msk [vmem:[#allocation2 + $0x128] sm:$0xff] %vm3313, %v3286
        %3352 = vst.msk [vmem:[#allocation2 + $0x130] sm:$0xff] %vm3313, %v3287
        %3353 = vst.msk [vmem:[#allocation2 + $0x138] sm:$0xff] %vm3313, %v3288
        %3354 = vst.msk [vmem:[#allocation2 + $0x140] sm:$0xff] %vm3313, %v3289
        %3355 = vst.msk [vmem:[#allocation2 + $0x148] sm:$0xff] %vm3313, %v3290
        %3356 = vst.msk [vmem:[#allocation2 + $0x150] sm:$0xff] %vm3313, %v3291
        %3357 = vst.msk [vmem:[#allocation2 + $0x158] sm:$0xff] %vm3313, %v3292
        %3358 = vst.msk [vmem:[#allocation2 + $0x160] sm:$0xff] %vm3313, %v3293
        %3359 = vst.msk [vmem:[#allocation2 + $0x168] sm:$0xff] %vm3313, %v3294
        %3360 = vst.msk [vmem:[#allocation2 + $0x170] sm:$0xff] %vm3313, %v3295
        %3361 = vst.msk [vmem:[#allocation2 + $0x178] sm:$0xff] %vm3313, %v3296
        %3362 = vst.msk [vmem:[#allocation2 + $0x180] sm:$0xff] %vm3313, %v3297
        %3363 = vst.msk [vmem:[#allocation2 + $0x188] sm:$0xff] %vm3313, %v3298
        %3364 = vst.msk [vmem:[#allocation2 + $0x190] sm:$0xff] %vm3313, %v3299
        %3365 = vst.msk [vmem:[#allocation2 + $0x198] sm:$0xff] %vm3313, %v3300
        %3366 = vst.msk [vmem:[#allocation2 + $0x1a0] sm:$0xff] %vm3313, %v3301
        %3367 = vst.msk [vmem:[#allocation2 + $0x1a8] sm:$0xff] %vm3313, %v3302
        %3368 = vst.msk [vmem:[#allocation2 + $0x1b0] sm:$0xff] %vm3313, %v3303
        %3369 = vst.msk [vmem:[#allocation2 + $0x1b8] sm:$0xff] %vm3313, %v3304
        %3370 = vst.msk [vmem:[#allocation2 + $0x1c0] sm:$0xff] %vm3313, %v3305
        %3371 = vst.msk [vmem:[#allocation2 + $0x1c8] sm:$0xff] %vm3313, %v3306
        %3372 = vst.msk [vmem:[#allocation2 + $0x1d0] sm:$0xff] %vm3313, %v3307
        %3373 = vst.msk [vmem:[#allocation2 + $0x1d8] sm:$0xff] %vm3313, %v3308
        %3374 = vst.msk [vmem:[#allocation2 + $0x1e0] sm:$0xff] %vm3313, %v3309
        %3375 = vst.msk [vmem:[#allocation2 + $0x1e8] sm:$0xff] %vm3313, %v3310
        %3376 = vst.msk [vmem:[#allocation2 + $0x1f0] sm:$0xff] %vm3313, %v3311
        %3377 = vst.msk [vmem:[#allocation2 + $0x1f8] sm:$0xff] %vm3313, %v3312
        %v3378 = vld [vmem:[#allocation3] sm:$0xff]
        %v3379 = vld [vmem:[#allocation3 + $0x8] sm:$0xff]
        %v3380 = vld [vmem:[#allocation3 + $0x10] sm:$0xff]
        %v3381 = vld [vmem:[#allocation3 + $0x18] sm:$0xff]
        %v3382 = vld [vmem:[#allocation3 + $0x20] sm:$0xff]
        %v3383 = vld [vmem:[#allocation3 + $0x28] sm:$0xff]
        %v3384 = vld [vmem:[#allocation3 + $0x30] sm:$0xff]
        %v3385 = vld [vmem:[#allocation3 + $0x38] sm:$0xff]
        %v3386 = vld [vmem:[#allocation3 + $0x40] sm:$0xff]
        %v3387 = vld [vmem:[#allocation3 + $0x48] sm:$0xff]
        %v3388 = vld [vmem:[#allocation3 + $0x50] sm:$0xff]
        %v3389 = vld [vmem:[#allocation3 + $0x58] sm:$0xff]
        %v3390 = vld [vmem:[#allocation3 + $0x60] sm:$0xff]
        %v3391 = vld [vmem:[#allocation3 + $0x68] sm:$0xff]
        %v3392 = vld [vmem:[#allocation3 + $0x70] sm:$0xff]
        %v3393 = vld [vmem:[#allocation3 + $0x78] sm:$0xff]
        %v3394 = vld [vmem:[#allocation3 + $0x80] sm:$0xff]
        %v3395 = vld [vmem:[#allocation3 + $0x88] sm:$0xff]
        %v3396 = vld [vmem:[#allocation3 + $0x90] sm:$0xff]
        %v3397 = vld [vmem:[#allocation3 + $0x98] sm:$0xff]
        %v3398 = vld [vmem:[#allocation3 + $0xa0] sm:$0xff]
        %v3399 = vld [vmem:[#allocation3 + $0xa8] sm:$0xff]
        %v3400 = vld [vmem:[#allocation3 + $0xb0] sm:$0xff]
        %v3401 = vld [vmem:[#allocation3 + $0xb8] sm:$0xff]
        %v3402 = vld [vmem:[#allocation3 + $0xc0] sm:$0xff]
        %v3403 = vld [vmem:[#allocation3 + $0xc8] sm:$0xff]
        %v3404 = vld [vmem:[#allocation3 + $0xd0] sm:$0xff]
        %v3405 = vld [vmem:[#allocation3 + $0xd8] sm:$0xff]
        %v3406 = vld [vmem:[#allocation3 + $0xe0] sm:$0xff]
        %v3407 = vld [vmem:[#allocation3 + $0xe8] sm:$0xff]
        %v3408 = vld [vmem:[#allocation3 + $0xf0] sm:$0xff]
        %v3409 = vld [vmem:[#allocation3 + $0xf8] sm:$0xff]
        %v3410 = vld [vmem:[#allocation3 + $0x100] sm:$0xff]
        %v3411 = vld [vmem:[#allocation3 + $0x108] sm:$0xff]
        %v3412 = vld [vmem:[#allocation3 + $0x110] sm:$0xff]
        %v3413 = vld [vmem:[#allocation3 + $0x118] sm:$0xff]
        %v3414 = vld [vmem:[#allocation3 + $0x120] sm:$0xff]
        %v3415 = vld [vmem:[#allocation3 + $0x128] sm:$0xff]
        %v3416 = vld [vmem:[#allocation3 + $0x130] sm:$0xff]
        %v3417 = vld [vmem:[#allocation3 + $0x138] sm:$0xff]
        %v3418 = vld [vmem:[#allocation3 + $0x140] sm:$0xff]
        %v3419 = vld [vmem:[#allocation3 + $0x148] sm:$0xff]
        %v3420 = vld [vmem:[#allocation3 + $0x150] sm:$0xff]
        %v3421 = vld [vmem:[#allocation3 + $0x158] sm:$0xff]
        %v3422 = vld [vmem:[#allocation3 + $0x160] sm:$0xff]
        %v3423 = vld [vmem:[#allocation3 + $0x168] sm:$0xff]
        %v3424 = vld [vmem:[#allocation3 + $0x170] sm:$0xff]
        %v3425 = vld [vmem:[#allocation3 + $0x178] sm:$0xff]
        %v3426 = vld [vmem:[#allocation3 + $0x180] sm:$0xff]
        %v3427 = vld [vmem:[#allocation3 + $0x188] sm:$0xff]
        %v3428 = vld [vmem:[#allocation3 + $0x190] sm:$0xff]
        %v3429 = vld [vmem:[#allocation3 + $0x198] sm:$0xff]
        %v3430 = vld [vmem:[#allocation3 + $0x1a0] sm:$0xff]
        %v3431 = vld [vmem:[#allocation3 + $0x1a8] sm:$0xff]
        %v3432 = vld [vmem:[#allocation3 + $0x1b0] sm:$0xff]
        %v3433 = vld [vmem:[#allocation3 + $0x1b8] sm:$0xff]
        %v3434 = vld [vmem:[#allocation3 + $0x1c0] sm:$0xff]
        %v3435 = vld [vmem:[#allocation3 + $0x1c8] sm:$0xff]
        %v3436 = vld [vmem:[#allocation3 + $0x1d0] sm:$0xff]
        %v3437 = vld [vmem:[#allocation3 + $0x1d8] sm:$0xff]
        %v3438 = vld [vmem:[#allocation3 + $0x1e0] sm:$0xff]
        %v3439 = vld [vmem:[#allocation3 + $0x1e8] sm:$0xff]
        %v3440 = vld [vmem:[#allocation3 + $0x1f0] sm:$0xff]
        %v3441 = vld [vmem:[#allocation3 + $0x1f8] sm:$0xff]
        %v3442 = vmul.f32 %v2862, %v2862
        %v3443 = vmul.f32 %v2863, %v2863
        %v3444 = vmul.f32 %v2864, %v2864
        %v3445 = vmul.f32 %v2865, %v2865
        %v3446 = vmul.f32 %v2866, %v2866
        %v3447 = vmul.f32 %v2867, %v2867
        %v3448 = vmul.f32 %v2868, %v2868
        %v3449 = vmul.f32 %v2869, %v2869
        %v3450 = vmul.f32 %v2870, %v2870
        %v3451 = vmul.f32 %v2871, %v2871
        %v3452 = vmul.f32 %v2872, %v2872
        %v3453 = vmul.f32 %v2873, %v2873
        %v3454 = vmul.f32 %v2874, %v2874
        %v3455 = vmul.f32 %v2875, %v2875
        %v3456 = vmul.f32 %v2876, %v2876
        %v3457 = vmul.f32 %v2877, %v2877
        %v3458 = vmul.f32 %v2878, %v2878
        %v3459 = vmul.f32 %v2879, %v2879
        %v3460 = vmul.f32 %v2880, %v2880
        %v3461 = vmul.f32 %v2881, %v2881
        %v3462 = vmul.f32 %v2882, %v2882
        %v3463 = vmul.f32 %v2883, %v2883
        %v3464 = vmul.f32 %v2884, %v2884
        %v3465 = vmul.f32 %v2885, %v2885
        %v3466 = vmul.f32 %v2886, %v2886
        %v3467 = vmul.f32 %v2887, %v2887
        %v3468 = vmul.f32 %v2888, %v2888
        %v3469 = vmul.f32 %v2889, %v2889
        %v3470 = vmul.f32 %v2890, %v2890
        %v3471 = vmul.f32 %v2891, %v2891
        %v3472 = vmul.f32 %v2892, %v2892
        %v3473 = vmul.f32 %v2893, %v2893
        %v3474 = vmul.f32 %v2894, %v2894
        %v3475 = vmul.f32 %v2895, %v2895
        %v3476 = vmul.f32 %v2896, %v2896
        %v3477 = vmul.f32 %v2897, %v2897
        %v3478 = vmul.f32 %v2898, %v2898
        %v3479 = vmul.f32 %v2899, %v2899
        %v3480 = vmul.f32 %v2900, %v2900
        %v3481 = vmul.f32 %v2901, %v2901
        %v3482 = vmul.f32 %v2902, %v2902
        %v3483 = vmul.f32 %v2903, %v2903
        %v3484 = vmul.f32 %v2904, %v2904
        %v3485 = vmul.f32 %v2905, %v2905
        %v3486 = vmul.f32 %v2906, %v2906
        %v3487 = vmul.f32 %v2907, %v2907
        %v3488 = vmul.f32 %v2908, %v2908
        %v3489 = vmul.f32 %v2909, %v2909
        %v3490 = vmul.f32 %v2910, %v2910
        %v3491 = vmul.f32 %v2911, %v2911
        %v3492 = vmul.f32 %v2912, %v2912
        %v3493 = vmul.f32 %v2913, %v2913
        %v3494 = vmul.f32 %v2914, %v2914
        %v3495 = vmul.f32 %v2915, %v2915
        %v3496 = vmul.f32 %v2916, %v2916
        %v3497 = vmul.f32 %v2917, %v2917
        %v3498 = vmul.f32 %v2918, %v2918
        %v3499 = vmul.f32 %v2919, %v2919
        %v3500 = vmul.f32 %v2920, %v2920
        %v3501 = vmul.f32 %v2921, %v2921
        %v3502 = vmul.f32 %v2922, %v2922
        %v3503 = vmul.f32 %v2923, %v2923
        %v3504 = vmul.f32 %v2924, %v2924
        %v3505 = vmul.f32 %v2925, %v2925
        %v3506 = vmul.f32 %v2926, %v2926
        %v3507 = vmul.f32 %v2927, %v2927
        %v3508 = vmul.f32 %v2928, %v2928
        %v3509 = vmul.f32 %v2929, %v2929
        %v3510 = vmul.f32 %v2930, %v2930
        %v3511 = vmul.f32 %v2931, %v2931
        %v3512 = vmul.f32 %v2932, %v2932
        %v3513 = vmul.f32 %v2933, %v2933
        %v3514 = vmul.f32 %v2934, %v2934
        %v3515 = vmul.f32 %v2935, %v2935
        %v3516 = vmul.f32 %v2936, %v2936
        %v3517 = vmul.f32 %v2937, %v2937
        %v3518 = vmul.f32 %v2938, %v2938
        %v3519 = vmul.f32 %v2939, %v2939
        %v3520 = vmul.f32 %v2940, %v2940
        %v3521 = vmul.f32 %v2941, %v2941
        %v3522 = vmul.f32 %v2942, %v2942
        %v3523 = vmul.f32 %v2943, %v2943
        %v3524 = vmul.f32 %v2944, %v2944
        %v3525 = vmul.f32 %v2945, %v2945
        %v3526 = vmul.f32 %v2946, %v2946
        %v3527 = vmul.f32 %v2947, %v2947
        %v3528 = vmul.f32 %v2948, %v2948
        %v3529 = vmul.f32 %v2949, %v2949
        %v3530 = vmul.f32 %v2950, %v2950
        %v3531 = vmul.f32 %v2951, %v2951
        %v3532 = vmul.f32 %v2952, %v2952
        %v3533 = vmul.f32 %v2953, %v2953
        %v3534 = vmul.f32 %v2954, %v2954
        %v3535 = vmul.f32 %v2955, %v2955
        %v3536 = vmul.f32 %v2956, %v2956
        %v3537 = vmul.f32 %v2957, %v2957
        %v3538 = vmul.f32 %v2958, %v2958
        %v3539 = vmul.f32 %v2959, %v2959
        %v3540 = vmul.f32 %v2960, %v2960
        %v3541 = vmul.f32 %v2961, %v2961
        %v3542 = vmul.f32 %v2962, %v2962
        %v3543 = vmul.f32 %v2963, %v2963
        %v3544 = vmul.f32 %v2964, %v2964
        %v3545 = vmul.f32 %v2965, %v2965
        %v3546 = vmul.f32 %v2966, %v2966
        %v3547 = vmul.f32 %v2967, %v2967
        %v3548 = vmul.f32 %v2968, %v2968
        %v3549 = vmul.f32 %v2969, %v2969
        %v3550 = vmul.f32 %v2970, %v2970
        %v3551 = vmul.f32 %v2971, %v2971
        %v3552 = vmul.f32 %v2972, %v2972
        %v3553 = vmul.f32 %v2973, %v2973
        %v3554 = vmul.f32 %v2974, %v2974
        %v3555 = vmul.f32 %v2975, %v2975
        %v3556 = vmul.f32 %v2976, %v2976
        %v3557 = vmul.f32 %v2977, %v2977
        %v3558 = vmul.f32 %v2978, %v2978
        %v3559 = vmul.f32 %v2979, %v2979
        %v3560 = vmul.f32 %v2980, %v2980
        %v3561 = vmul.f32 %v2981, %v2981
        %v3562 = vmul.f32 %v2982, %v2982
        %v3563 = vmul.f32 %v2983, %v2983
        %v3564 = vmul.f32 %v2984, %v2984
        %v3565 = vmul.f32 %v2985, %v2985
        %v3566 = vmul.f32 %v2986, %v2986
        %v3567 = vmul.f32 %v2987, %v2987
        %v3568 = vmul.f32 %v2988, %v2988
        %v3569 = vmul.f32 %v2989, %v2989
        %v3570 = vadd.f32 %v3442, %v3443
        %3571 = vadd.xlane.f32.xlu0 %v3570
        %v3572 = vpop.xlane.xlu0 %3571
        %v3573 = vadd.f32 %v3444, %v3445
        %3574 = vadd.xlane.f32.xlu0 %v3573
        %v3575 = vpop.xlane.xlu0 %3574
        %v3576 = vadd.f32 %v3446, %v3447
        %3577 = vadd.xlane.f32.xlu0 %v3576
        %v3578 = vpop.xlane.xlu0 %3577
        %v3579 = vadd.f32 %v3448, %v3449
        %3580 = vadd.xlane.f32.xlu0 %v3579
        %v3581 = vpop.xlane.xlu0 %3580
        %v3582 = vadd.f32 %v3450, %v3451
        %3583 = vadd.xlane.f32.xlu0 %v3582
        %v3584 = vpop.xlane.xlu0 %3583
        %v3585 = vadd.f32 %v3452, %v3453
        %3586 = vadd.xlane.f32.xlu0 %v3585
        %v3587 = vpop.xlane.xlu0 %3586
        %v3588 = vadd.f32 %v3454, %v3455
        %3589 = vadd.xlane.f32.xlu0 %v3588
        %v3590 = vpop.xlane.xlu0 %3589
        %v3591 = vadd.f32 %v3456, %v3457
        %3592 = vadd.xlane.f32.xlu0 %v3591
        %v3593 = vpop.xlane.xlu0 %3592
        %v3594 = vadd.f32 %v3458, %v3459
        %3595 = vadd.xlane.f32.xlu0 %v3594
        %v3596 = vpop.xlane.xlu0 %3595
        %v3597 = vadd.f32 %v3460, %v3461
        %3598 = vadd.xlane.f32.xlu0 %v3597
        %v3599 = vpop.xlane.xlu0 %3598
        %v3600 = vadd.f32 %v3462, %v3463
        %3601 = vadd.xlane.f32.xlu0 %v3600
        %v3602 = vpop.xlane.xlu0 %3601
        %v3603 = vadd.f32 %v3464, %v3465
        %3604 = vadd.xlane.f32.xlu0 %v3603
        %v3605 = vpop.xlane.xlu0 %3604
        %v3606 = vadd.f32 %v3466, %v3467
        %3607 = vadd.xlane.f32.xlu0 %v3606
        %v3608 = vpop.xlane.xlu0 %3607
        %v3609 = vadd.f32 %v3468, %v3469
        %3610 = vadd.xlane.f32.xlu0 %v3609
        %v3611 = vpop.xlane.xlu0 %3610
        %v3612 = vadd.f32 %v3470, %v3471
        %3613 = vadd.xlane.f32.xlu0 %v3612
        %v3614 = vpop.xlane.xlu0 %3613
        %v3615 = vadd.f32 %v3472, %v3473
        %3616 = vadd.xlane.f32.xlu0 %v3615
        %v3617 = vpop.xlane.xlu0 %3616
        %v3618 = vadd.f32 %v3474, %v3475
        %3619 = vadd.xlane.f32.xlu0 %v3618
        %v3620 = vpop.xlane.xlu0 %3619
        %v3621 = vadd.f32 %v3476, %v3477
        %3622 = vadd.xlane.f32.xlu0 %v3621
        %v3623 = vpop.xlane.xlu0 %3622
        %v3624 = vadd.f32 %v3478, %v3479
        %3625 = vadd.xlane.f32.xlu0 %v3624
        %v3626 = vpop.xlane.xlu0 %3625
        %v3627 = vadd.f32 %v3480, %v3481
        %3628 = vadd.xlane.f32.xlu0 %v3627
        %v3629 = vpop.xlane.xlu0 %3628
        %v3630 = vadd.f32 %v3482, %v3483
        %3631 = vadd.xlane.f32.xlu0 %v3630
        %v3632 = vpop.xlane.xlu0 %3631
        %v3633 = vadd.f32 %v3484, %v3485
        %3634 = vadd.xlane.f32.xlu0 %v3633
        %v3635 = vpop.xlane.xlu0 %3634
        %v3636 = vadd.f32 %v3486, %v3487
        %3637 = vadd.xlane.f32.xlu0 %v3636
        %v3638 = vpop.xlane.xlu0 %3637
        %v3639 = vadd.f32 %v3488, %v3489
        %3640 = vadd.xlane.f32.xlu0 %v3639
        %v3641 = vpop.xlane.xlu0 %3640
        %v3642 = vadd.f32 %v3490, %v3491
        %3643 = vadd.xlane.f32.xlu0 %v3642
        %v3644 = vpop.xlane.xlu0 %3643
        %v3645 = vadd.f32 %v3492, %v3493
        %3646 = vadd.xlane.f32.xlu0 %v3645
        %v3647 = vpop.xlane.xlu0 %3646
        %v3648 = vadd.f32 %v3494, %v3495
        %3649 = vadd.xlane.f32.xlu0 %v3648
        %v3650 = vpop.xlane.xlu0 %3649
        %v3651 = vadd.f32 %v3496, %v3497
        %3652 = vadd.xlane.f32.xlu0 %v3651
        %v3653 = vpop.xlane.xlu0 %3652
        %v3654 = vadd.f32 %v3498, %v3499
        %3655 = vadd.xlane.f32.xlu0 %v3654
        %v3656 = vpop.xlane.xlu0 %3655
        %v3657 = vadd.f32 %v3500, %v3501
        %3658 = vadd.xlane.f32.xlu0 %v3657
        %v3659 = vpop.xlane.xlu0 %3658
        %v3660 = vadd.f32 %v3502, %v3503
        %3661 = vadd.xlane.f32.xlu0 %v3660
        %v3662 = vpop.xlane.xlu0 %3661
        %v3663 = vadd.f32 %v3504, %v3505
        %3664 = vadd.xlane.f32.xlu0 %v3663
        %v3665 = vpop.xlane.xlu0 %3664
        %v3666 = vadd.f32 %v3506, %v3507
        %3667 = vadd.xlane.f32.xlu0 %v3666
        %v3668 = vpop.xlane.xlu0 %3667
        %v3669 = vadd.f32 %v3508, %v3509
        %3670 = vadd.xlane.f32.xlu0 %v3669
        %v3671 = vpop.xlane.xlu0 %3670
        %v3672 = vadd.f32 %v3510, %v3511
        %3673 = vadd.xlane.f32.xlu0 %v3672
        %v3674 = vpop.xlane.xlu0 %3673
        %v3675 = vadd.f32 %v3512, %v3513
        %3676 = vadd.xlane.f32.xlu0 %v3675
        %v3677 = vpop.xlane.xlu0 %3676
        %v3678 = vadd.f32 %v3514, %v3515
        %3679 = vadd.xlane.f32.xlu0 %v3678
        %v3680 = vpop.xlane.xlu0 %3679
        %v3681 = vadd.f32 %v3516, %v3517
        %3682 = vadd.xlane.f32.xlu0 %v3681
        %v3683 = vpop.xlane.xlu0 %3682
        %v3684 = vadd.f32 %v3518, %v3519
        %3685 = vadd.xlane.f32.xlu0 %v3684
        %v3686 = vpop.xlane.xlu0 %3685
        %v3687 = vadd.f32 %v3520, %v3521
        %3688 = vadd.xlane.f32.xlu0 %v3687
        %v3689 = vpop.xlane.xlu0 %3688
        %v3690 = vadd.f32 %v3522, %v3523
        %3691 = vadd.xlane.f32.xlu0 %v3690
        %v3692 = vpop.xlane.xlu0 %3691
        %v3693 = vadd.f32 %v3524, %v3525
        %3694 = vadd.xlane.f32.xlu0 %v3693
        %v3695 = vpop.xlane.xlu0 %3694
        %v3696 = vadd.f32 %v3526, %v3527
        %3697 = vadd.xlane.f32.xlu0 %v3696
        %v3698 = vpop.xlane.xlu0 %3697
        %v3699 = vadd.f32 %v3528, %v3529
        %3700 = vadd.xlane.f32.xlu0 %v3699
        %v3701 = vpop.xlane.xlu0 %3700
        %v3702 = vadd.f32 %v3530, %v3531
        %3703 = vadd.xlane.f32.xlu0 %v3702
        %v3704 = vpop.xlane.xlu0 %3703
        %v3705 = vadd.f32 %v3532, %v3533
        %3706 = vadd.xlane.f32.xlu0 %v3705
        %v3707 = vpop.xlane.xlu0 %3706
        %v3708 = vadd.f32 %v3534, %v3535
        %3709 = vadd.xlane.f32.xlu0 %v3708
        %v3710 = vpop.xlane.xlu0 %3709
        %v3711 = vadd.f32 %v3536, %v3537
        %3712 = vadd.xlane.f32.xlu0 %v3711
        %v3713 = vpop.xlane.xlu0 %3712
        %v3714 = vadd.f32 %v3538, %v3539
        %3715 = vadd.xlane.f32.xlu0 %v3714
        %v3716 = vpop.xlane.xlu0 %3715
        %v3717 = vadd.f32 %v3540, %v3541
        %3718 = vadd.xlane.f32.xlu0 %v3717
        %v3719 = vpop.xlane.xlu0 %3718
        %v3720 = vadd.f32 %v3542, %v3543
        %3721 = vadd.xlane.f32.xlu0 %v3720
        %v3722 = vpop.xlane.xlu0 %3721
        %v3723 = vadd.f32 %v3544, %v3545
        %3724 = vadd.xlane.f32.xlu0 %v3723
        %v3725 = vpop.xlane.xlu0 %3724
        %v3726 = vadd.f32 %v3546, %v3547
        %3727 = vadd.xlane.f32.xlu0 %v3726
        %v3728 = vpop.xlane.xlu0 %3727
        %v3729 = vadd.f32 %v3548, %v3549
        %3730 = vadd.xlane.f32.xlu0 %v3729
        %v3731 = vpop.xlane.xlu0 %3730
        %v3732 = vadd.f32 %v3550, %v3551
        %3733 = vadd.xlane.f32.xlu0 %v3732
        %v3734 = vpop.xlane.xlu0 %3733
        %v3735 = vadd.f32 %v3552, %v3553
        %3736 = vadd.xlane.f32.xlu0 %v3735
        %v3737 = vpop.xlane.xlu0 %3736
        %v3738 = vadd.f32 %v3554, %v3555
        %3739 = vadd.xlane.f32.xlu0 %v3738
        %v3740 = vpop.xlane.xlu0 %3739
        %v3741 = vadd.f32 %v3556, %v3557
        %3742 = vadd.xlane.f32.xlu0 %v3741
        %v3743 = vpop.xlane.xlu0 %3742
        %v3744 = vadd.f32 %v3558, %v3559
        %3745 = vadd.xlane.f32.xlu0 %v3744
        %v3746 = vpop.xlane.xlu0 %3745
        %v3747 = vadd.f32 %v3560, %v3561
        %3748 = vadd.xlane.f32.xlu0 %v3747
        %v3749 = vpop.xlane.xlu0 %3748
        %v3750 = vadd.f32 %v3562, %v3563
        %3751 = vadd.xlane.f32.xlu0 %v3750
        %v3752 = vpop.xlane.xlu0 %3751
        %v3753 = vadd.f32 %v3564, %v3565
        %3754 = vadd.xlane.f32.xlu0 %v3753
        %v3755 = vpop.xlane.xlu0 %3754
        %v3756 = vadd.f32 %v3566, %v3567
        %3757 = vadd.xlane.f32.xlu0 %v3756
        %v3758 = vpop.xlane.xlu0 %3757
        %v3759 = vadd.f32 %v3568, %v3569
        %3760 = vadd.xlane.f32.xlu0 %v3759
        %v3761 = vpop.xlane.xlu0 %3760
        %v3762 = vadd.f32 %v3378, %v3572
        %v3763 = vadd.f32 %v3379, %v3575
        %v3764 = vadd.f32 %v3380, %v3578
        %v3765 = vadd.f32 %v3381, %v3581
        %v3766 = vadd.f32 %v3382, %v3584
        %v3767 = vadd.f32 %v3383, %v3587
        %v3768 = vadd.f32 %v3384, %v3590
        %v3769 = vadd.f32 %v3385, %v3593
        %v3770 = vadd.f32 %v3386, %v3596
        %v3771 = vadd.f32 %v3387, %v3599
        %v3772 = vadd.f32 %v3388, %v3602
        %v3773 = vadd.f32 %v3389, %v3605
        %v3774 = vadd.f32 %v3390, %v3608
        %v3775 = vadd.f32 %v3391, %v3611
        %v3776 = vadd.f32 %v3392, %v3614
        %v3777 = vadd.f32 %v3393, %v3617
        %v3778 = vadd.f32 %v3394, %v3620
        %v3779 = vadd.f32 %v3395, %v3623
        %v3780 = vadd.f32 %v3396, %v3626
        %v3781 = vadd.f32 %v3397, %v3629
        %v3782 = vadd.f32 %v3398, %v3632
        %v3783 = vadd.f32 %v3399, %v3635
        %v3784 = vadd.f32 %v3400, %v3638
        %v3785 = vadd.f32 %v3401, %v3641
        %v3786 = vadd.f32 %v3402, %v3644
        %v3787 = vadd.f32 %v3403, %v3647
        %v3788 = vadd.f32 %v3404, %v3650
        %v3789 = vadd.f32 %v3405, %v3653
        %v3790 = vadd.f32 %v3406, %v3656
        %v3791 = vadd.f32 %v3407, %v3659
        %v3792 = vadd.f32 %v3408, %v3662
        %v3793 = vadd.f32 %v3409, %v3665
        %v3794 = vadd.f32 %v3410, %v3668
        %v3795 = vadd.f32 %v3411, %v3671
        %v3796 = vadd.f32 %v3412, %v3674
        %v3797 = vadd.f32 %v3413, %v3677
        %v3798 = vadd.f32 %v3414, %v3680
        %v3799 = vadd.f32 %v3415, %v3683
        %v3800 = vadd.f32 %v3416, %v3686
        %v3801 = vadd.f32 %v3417, %v3689
        %v3802 = vadd.f32 %v3418, %v3692
        %v3803 = vadd.f32 %v3419, %v3695
        %v3804 = vadd.f32 %v3420, %v3698
        %v3805 = vadd.f32 %v3421, %v3701
        %v3806 = vadd.f32 %v3422, %v3704
        %v3807 = vadd.f32 %v3423, %v3707
        %v3808 = vadd.f32 %v3424, %v3710
        %v3809 = vadd.f32 %v3425, %v3713
        %v3810 = vadd.f32 %v3426, %v3716
        %v3811 = vadd.f32 %v3427, %v3719
        %v3812 = vadd.f32 %v3428, %v3722
        %v3813 = vadd.f32 %v3429, %v3725
        %v3814 = vadd.f32 %v3430, %v3728
        %v3815 = vadd.f32 %v3431, %v3731
        %v3816 = vadd.f32 %v3432, %v3734
        %v3817 = vadd.f32 %v3433, %v3737
        %v3818 = vadd.f32 %v3434, %v3740
        %v3819 = vadd.f32 %v3435, %v3743
        %v3820 = vadd.f32 %v3436, %v3746
        %v3821 = vadd.f32 %v3437, %v3749
        %v3822 = vadd.f32 %v3438, %v3752
        %v3823 = vadd.f32 %v3439, %v3755
        %v3824 = vadd.f32 %v3440, %v3758
        %v3825 = vadd.f32 %v3441, %v3761
        %3826 = vst.msk [vmem:[#allocation3] sm:$0xff] %vm3313, %v3762
        %3827 = vst.msk [vmem:[#allocation3 + $0x8] sm:$0xff] %vm3313, %v3763
        %3828 = vst.msk [vmem:[#allocation3 + $0x10] sm:$0xff] %vm3313, %v3764
        %3829 = vst.msk [vmem:[#allocation3 + $0x18] sm:$0xff] %vm3313, %v3765
        %3830 = vst.msk [vmem:[#allocation3 + $0x20] sm:$0xff] %vm3313, %v3766
        %3831 = vst.msk [vmem:[#allocation3 + $0x28] sm:$0xff] %vm3313, %v3767
        %3832 = vst.msk [vmem:[#allocation3 + $0x30] sm:$0xff] %vm3313, %v3768
        %3833 = vst.msk [vmem:[#allocation3 + $0x38] sm:$0xff] %vm3313, %v3769
        %3834 = vst.msk [vmem:[#allocation3 + $0x40] sm:$0xff] %vm3313, %v3770
        %3835 = vst.msk [vmem:[#allocation3 + $0x48] sm:$0xff] %vm3313, %v3771
        %3836 = vst.msk [vmem:[#allocation3 + $0x50] sm:$0xff] %vm3313, %v3772
        %3837 = vst.msk [vmem:[#allocation3 + $0x58] sm:$0xff] %vm3313, %v3773
        %3838 = vst.msk [vmem:[#allocation3 + $0x60] sm:$0xff] %vm3313, %v3774
        %3839 = vst.msk [vmem:[#allocation3 + $0x68] sm:$0xff] %vm3313, %v3775
        %3840 = vst.msk [vmem:[#allocation3 + $0x70] sm:$0xff] %vm3313, %v3776
        %3841 = vst.msk [vmem:[#allocation3 + $0x78] sm:$0xff] %vm3313, %v3777
        %3842 = vst.msk [vmem:[#allocation3 + $0x80] sm:$0xff] %vm3313, %v3778
        %3843 = vst.msk [vmem:[#allocation3 + $0x88] sm:$0xff] %vm3313, %v3779
        %3844 = vst.msk [vmem:[#allocation3 + $0x90] sm:$0xff] %vm3313, %v3780
        %3845 = vst.msk [vmem:[#allocation3 + $0x98] sm:$0xff] %vm3313, %v3781
        %3846 = vst.msk [vmem:[#allocation3 + $0xa0] sm:$0xff] %vm3313, %v3782
        %3847 = vst.msk [vmem:[#allocation3 + $0xa8] sm:$0xff] %vm3313, %v3783
        %3848 = vst.msk [vmem:[#allocation3 + $0xb0] sm:$0xff] %vm3313, %v3784
        %3849 = vst.msk [vmem:[#allocation3 + $0xb8] sm:$0xff] %vm3313, %v3785
        %3850 = vst.msk [vmem:[#allocation3 + $0xc0] sm:$0xff] %vm3313, %v3786
        %3851 = vst.msk [vmem:[#allocation3 + $0xc8] sm:$0xff] %vm3313, %v3787
        %3852 = vst.msk [vmem:[#allocation3 + $0xd0] sm:$0xff] %vm3313, %v3788
        %3853 = vst.msk [vmem:[#allocation3 + $0xd8] sm:$0xff] %vm3313, %v3789
        %3854 = vst.msk [vmem:[#allocation3 + $0xe0] sm:$0xff] %vm3313, %v3790
        %3855 = vst.msk [vmem:[#allocation3 + $0xe8] sm:$0xff] %vm3313, %v3791
        %3856 = vst.msk [vmem:[#allocation3 + $0xf0] sm:$0xff] %vm3313, %v3792
        %3857 = vst.msk [vmem:[#allocation3 + $0xf8] sm:$0xff] %vm3313, %v3793
        %3858 = vst.msk [vmem:[#allocation3 + $0x100] sm:$0xff] %vm3313, %v3794
        %3859 = vst.msk [vmem:[#allocation3 + $0x108] sm:$0xff] %vm3313, %v3795
        %3860 = vst.msk [vmem:[#allocation3 + $0x110] sm:$0xff] %vm3313, %v3796
        %3861 = vst.msk [vmem:[#allocation3 + $0x118] sm:$0xff] %vm3313, %v3797
        %3862 = vst.msk [vmem:[#allocation3 + $0x120] sm:$0xff] %vm3313, %v3798
        %3863 = vst.msk [vmem:[#allocation3 + $0x128] sm:$0xff] %vm3313, %v3799
        %3864 = vst.msk [vmem:[#allocation3 + $0x130] sm:$0xff] %vm3313, %v3800
        %3865 = vst.msk [vmem:[#allocation3 + $0x138] sm:$0xff] %vm3313, %v3801
        %3866 = vst.msk [vmem:[#allocation3 + $0x140] sm:$0xff] %vm3313, %v3802
        %3867 = vst.msk [vmem:[#allocation3 + $0x148] sm:$0xff] %vm3313, %v3803
        %3868 = vst.msk [vmem:[#allocation3 + $0x150] sm:$0xff] %vm3313, %v3804
        %3869 = vst.msk [vmem:[#allocation3 + $0x158] sm:$0xff] %vm3313, %v3805
        %3870 = vst.msk [vmem:[#allocation3 + $0x160] sm:$0xff] %vm3313, %v3806
        %3871 = vst.msk [vmem:[#allocation3 + $0x168] sm:$0xff] %vm3313, %v3807
        %3872 = vst.msk [vmem:[#allocation3 + $0x170] sm:$0xff] %vm3313, %v3808
        %3873 = vst.msk [vmem:[#allocation3 + $0x178] sm:$0xff] %vm3313, %v3809
        %3874 = vst.msk [vmem:[#allocation3 + $0x180] sm:$0xff] %vm3313, %v3810
        %3875 = vst.msk [vmem:[#allocation3 + $0x188] sm:$0xff] %vm3313, %v3811
        %3876 = vst.msk [vmem:[#allocation3 + $0x190] sm:$0xff] %vm3313, %v3812
        %3877 = vst.msk [vmem:[#allocation3 + $0x198] sm:$0xff] %vm3313, %v3813
        %3878 = vst.msk [vmem:[#allocation3 + $0x1a0] sm:$0xff] %vm3313, %v3814
        %3879 = vst.msk [vmem:[#allocation3 + $0x1a8] sm:$0xff] %vm3313, %v3815
        %3880 = vst.msk [vmem:[#allocation3 + $0x1b0] sm:$0xff] %vm3313, %v3816
        %3881 = vst.msk [vmem:[#allocation3 + $0x1b8] sm:$0xff] %vm3313, %v3817
        %3882 = vst.msk [vmem:[#allocation3 + $0x1c0] sm:$0xff] %vm3313, %v3818
        %3883 = vst.msk [vmem:[#allocation3 + $0x1c8] sm:$0xff] %vm3313, %v3819
        %3884 = vst.msk [vmem:[#allocation3 + $0x1d0] sm:$0xff] %vm3313, %v3820
        %3885 = vst.msk [vmem:[#allocation3 + $0x1d8] sm:$0xff] %vm3313, %v3821
        %3886 = vst.msk [vmem:[#allocation3 + $0x1e0] sm:$0xff] %vm3313, %v3822
        %3887 = vst.msk [vmem:[#allocation3 + $0x1e8] sm:$0xff] %vm3313, %v3823
        %3888 = vst.msk [vmem:[#allocation3 + $0x1f0] sm:$0xff] %vm3313, %v3824
        %3889 = vst.msk [vmem:[#allocation3 + $0x1f8] sm:$0xff] %vm3313, %v3825
        %3890 = vst [vmem:[%s363] sm:$0x77] 0.0
      $region56: #{tpu_custom_call.1} parent=47 // pred_fallthru
        _
      %p3891 = scmp.eq.s32.totalorder %s24, 1
      // Predicated region
      $region57: #{tpu_custom_call.1} parent=47 // pred_check
        %p3892 = pneg %p3891
      $region58: #{tpu_custom_call.1} parent=47 // pred_check_branch
        %3894 = sbr.rel (%p3892) target = $region60
      $region59: #{tpu_custom_call.1} parent=47 // pred_region
        %v3895 = vld [vmem:[#allocation2] sm:$0xff]
        %v3896 = vld [vmem:[#allocation2 + $0x8] sm:$0xff]
        %v3897 = vld [vmem:[#allocation2 + $0x10] sm:$0xff]
        %v3898 = vld [vmem:[#allocation2 + $0x18] sm:$0xff]
        %v3899 = vld [vmem:[#allocation2 + $0x20] sm:$0xff]
        %v3900 = vld [vmem:[#allocation2 + $0x28] sm:$0xff]
        %v3901 = vld [vmem:[#allocation2 + $0x30] sm:$0xff]
        %v3902 = vld [vmem:[#allocation2 + $0x38] sm:$0xff]
        %v3903 = vld [vmem:[#allocation2 + $0x40] sm:$0xff]
        %v3904 = vld [vmem:[#allocation2 + $0x48] sm:$0xff]
        %v3905 = vld [vmem:[#allocation2 + $0x50] sm:$0xff]
        %v3906 = vld [vmem:[#allocation2 + $0x58] sm:$0xff]
        %v3907 = vld [vmem:[#allocation2 + $0x60] sm:$0xff]
        %v3908 = vld [vmem:[#allocation2 + $0x68] sm:$0xff]
        %v3909 = vld [vmem:[#allocation2 + $0x70] sm:$0xff]
        %v3910 = vld [vmem:[#allocation2 + $0x78] sm:$0xff]
        %v3911 = vld [vmem:[#allocation2 + $0x80] sm:$0xff]
        %v3912 = vld [vmem:[#allocation2 + $0x88] sm:$0xff]
        %v3913 = vld [vmem:[#allocation2 + $0x90] sm:$0xff]
        %v3914 = vld [vmem:[#allocation2 + $0x98] sm:$0xff]
        %v3915 = vld [vmem:[#allocation2 + $0xa0] sm:$0xff]
        %v3916 = vld [vmem:[#allocation2 + $0xa8] sm:$0xff]
        %v3917 = vld [vmem:[#allocation2 + $0xb0] sm:$0xff]
        %v3918 = vld [vmem:[#allocation2 + $0xb8] sm:$0xff]
        %v3919 = vld [vmem:[#allocation2 + $0xc0] sm:$0xff]
        %v3920 = vld [vmem:[#allocation2 + $0xc8] sm:$0xff]
        %v3921 = vld [vmem:[#allocation2 + $0xd0] sm:$0xff]
        %v3922 = vld [vmem:[#allocation2 + $0xd8] sm:$0xff]
        %v3923 = vld [vmem:[#allocation2 + $0xe0] sm:$0xff]
        %v3924 = vld [vmem:[#allocation2 + $0xe8] sm:$0xff]
        %v3925 = vld [vmem:[#allocation2 + $0xf0] sm:$0xff]
        %v3926 = vld [vmem:[#allocation2 + $0xf8] sm:$0xff]
        %v3927 = vld [vmem:[#allocation2 + $0x100] sm:$0xff]
        %v3928 = vld [vmem:[#allocation2 + $0x108] sm:$0xff]
        %v3929 = vld [vmem:[#allocation2 + $0x110] sm:$0xff]
        %v3930 = vld [vmem:[#allocation2 + $0x118] sm:$0xff]
        %v3931 = vld [vmem:[#allocation2 + $0x120] sm:$0xff]
        %v3932 = vld [vmem:[#allocation2 + $0x128] sm:$0xff]
        %v3933 = vld [vmem:[#allocation2 + $0x130] sm:$0xff]
        %v3934 = vld [vmem:[#allocation2 + $0x138] sm:$0xff]
        %v3935 = vld [vmem:[#allocation2 + $0x140] sm:$0xff]
        %v3936 = vld [vmem:[#allocation2 + $0x148] sm:$0xff]
        %v3937 = vld [vmem:[#allocation2 + $0x150] sm:$0xff]
        %v3938 = vld [vmem:[#allocation2 + $0x158] sm:$0xff]
        %v3939 = vld [vmem:[#allocation2 + $0x160] sm:$0xff]
        %v3940 = vld [vmem:[#allocation2 + $0x168] sm:$0xff]
        %v3941 = vld [vmem:[#allocation2 + $0x170] sm:$0xff]
        %v3942 = vld [vmem:[#allocation2 + $0x178] sm:$0xff]
        %v3943 = vld [vmem:[#allocation2 + $0x180] sm:$0xff]
        %v3944 = vld [vmem:[#allocation2 + $0x188] sm:$0xff]
        %v3945 = vld [vmem:[#allocation2 + $0x190] sm:$0xff]
        %v3946 = vld [vmem:[#allocation2 + $0x198] sm:$0xff]
        %v3947 = vld [vmem:[#allocation2 + $0x1a0] sm:$0xff]
        %v3948 = vld [vmem:[#allocation2 + $0x1a8] sm:$0xff]
        %v3949 = vld [vmem:[#allocation2 + $0x1b0] sm:$0xff]
        %v3950 = vld [vmem:[#allocation2 + $0x1b8] sm:$0xff]
        %v3951 = vld [vmem:[#allocation2 + $0x1c0] sm:$0xff]
        %v3952 = vld [vmem:[#allocation2 + $0x1c8] sm:$0xff]
        %v3953 = vld [vmem:[#allocation2 + $0x1d0] sm:$0xff]
        %v3954 = vld [vmem:[#allocation2 + $0x1d8] sm:$0xff]
        %v3955 = vld [vmem:[#allocation2 + $0x1e0] sm:$0xff]
        %v3956 = vld [vmem:[#allocation2 + $0x1e8] sm:$0xff]
        %v3957 = vld [vmem:[#allocation2 + $0x1f0] sm:$0xff]
        %v3958 = vld [vmem:[#allocation2 + $0x1f8] sm:$0xff]
        %v3959 = vmul.f32 %v3895, 0.00390625
        %v3960 = vmul.f32 %v3896, 0.00390625
        %v3961 = vmul.f32 %v3897, 0.00390625
        %v3962 = vmul.f32 %v3898, 0.00390625
        %v3963 = vmul.f32 %v3899, 0.00390625
        %v3964 = vmul.f32 %v3900, 0.00390625
        %v3965 = vmul.f32 %v3901, 0.00390625
        %v3966 = vmul.f32 %v3902, 0.00390625
        %v3967 = vmul.f32 %v3903, 0.00390625
        %v3968 = vmul.f32 %v3904, 0.00390625
        %v3969 = vmul.f32 %v3905, 0.00390625
        %v3970 = vmul.f32 %v3906, 0.00390625
        %v3971 = vmul.f32 %v3907, 0.00390625
        %v3972 = vmul.f32 %v3908, 0.00390625
        %v3973 = vmul.f32 %v3909, 0.00390625
        %v3974 = vmul.f32 %v3910, 0.00390625
        %v3975 = vmul.f32 %v3911, 0.00390625
        %v3976 = vmul.f32 %v3912, 0.00390625
        %v3977 = vmul.f32 %v3913, 0.00390625
        %v3978 = vmul.f32 %v3914, 0.00390625
        %v3979 = vmul.f32 %v3915, 0.00390625
        %v3980 = vmul.f32 %v3916, 0.00390625
        %v3981 = vmul.f32 %v3917, 0.00390625
        %v3982 = vmul.f32 %v3918, 0.00390625
        %v3983 = vmul.f32 %v3919, 0.00390625
        %v3984 = vmul.f32 %v3920, 0.00390625
        %v3985 = vmul.f32 %v3921, 0.00390625
        %v3986 = vmul.f32 %v3922, 0.00390625
        %v3987 = vmul.f32 %v3923, 0.00390625
        %v3988 = vmul.f32 %v3924, 0.00390625
        %v3989 = vmul.f32 %v3925, 0.00390625
        %v3990 = vmul.f32 %v3926, 0.00390625
        %v3991 = vmul.f32 %v3927, 0.00390625
        %v3992 = vmul.f32 %v3928, 0.00390625
        %v3993 = vmul.f32 %v3929, 0.00390625
        %v3994 = vmul.f32 %v3930, 0.00390625
        %v3995 = vmul.f32 %v3931, 0.00390625
        %v3996 = vmul.f32 %v3932, 0.00390625
        %v3997 = vmul.f32 %v3933, 0.00390625
        %v3998 = vmul.f32 %v3934, 0.00390625
        %v3999 = vmul.f32 %v3935, 0.00390625
        %v4000 = vmul.f32 %v3936, 0.00390625
        %v4001 = vmul.f32 %v3937, 0.00390625
        %v4002 = vmul.f32 %v3938, 0.00390625
        %v4003 = vmul.f32 %v3939, 0.00390625
        %v4004 = vmul.f32 %v3940, 0.00390625
        %v4005 = vmul.f32 %v3941, 0.00390625
        %v4006 = vmul.f32 %v3942, 0.00390625
        %v4007 = vmul.f32 %v3943, 0.00390625
        %v4008 = vmul.f32 %v3944, 0.00390625
        %v4009 = vmul.f32 %v3945, 0.00390625
        %v4010 = vmul.f32 %v3946, 0.00390625
        %v4011 = vmul.f32 %v3947, 0.00390625
        %v4012 = vmul.f32 %v3948, 0.00390625
        %v4013 = vmul.f32 %v3949, 0.00390625
        %v4014 = vmul.f32 %v3950, 0.00390625
        %v4015 = vmul.f32 %v3951, 0.00390625
        %v4016 = vmul.f32 %v3952, 0.00390625
        %v4017 = vmul.f32 %v3953, 0.00390625
        %v4018 = vmul.f32 %v3954, 0.00390625
        %v4019 = vmul.f32 %v3955, 0.00390625
        %v4020 = vmul.f32 %v3956, 0.00390625
        %v4021 = vmul.f32 %v3957, 0.00390625
        %v4022 = vmul.f32 %v3958, 0.00390625
        %v4023 = vld [vmem:[#allocation3] sm:$0xff]
        %v4024 = vld [vmem:[#allocation3 + $0x8] sm:$0xff]
        %v4025 = vld [vmem:[#allocation3 + $0x10] sm:$0xff]
        %v4026 = vld [vmem:[#allocation3 + $0x18] sm:$0xff]
        %v4027 = vld [vmem:[#allocation3 + $0x20] sm:$0xff]
        %v4028 = vld [vmem:[#allocation3 + $0x28] sm:$0xff]
        %v4029 = vld [vmem:[#allocation3 + $0x30] sm:$0xff]
        %v4030 = vld [vmem:[#allocation3 + $0x38] sm:$0xff]
        %v4031 = vld [vmem:[#allocation3 + $0x40] sm:$0xff]
        %v4032 = vld [vmem:[#allocation3 + $0x48] sm:$0xff]
        %v4033 = vld [vmem:[#allocation3 + $0x50] sm:$0xff]
        %v4034 = vld [vmem:[#allocation3 + $0x58] sm:$0xff]
        %v4035 = vld [vmem:[#allocation3 + $0x60] sm:$0xff]
        %v4036 = vld [vmem:[#allocation3 + $0x68] sm:$0xff]
        %v4037 = vld [vmem:[#allocation3 + $0x70] sm:$0xff]
        %v4038 = vld [vmem:[#allocation3 + $0x78] sm:$0xff]
        %v4039 = vld [vmem:[#allocation3 + $0x80] sm:$0xff]
        %v4040 = vld [vmem:[#allocation3 + $0x88] sm:$0xff]
        %v4041 = vld [vmem:[#allocation3 + $0x90] sm:$0xff]
        %v4042 = vld [vmem:[#allocation3 + $0x98] sm:$0xff]
        %v4043 = vld [vmem:[#allocation3 + $0xa0] sm:$0xff]
        %v4044 = vld [vmem:[#allocation3 + $0xa8] sm:$0xff]
        %v4045 = vld [vmem:[#allocation3 + $0xb0] sm:$0xff]
        %v4046 = vld [vmem:[#allocation3 + $0xb8] sm:$0xff]
        %v4047 = vld [vmem:[#allocation3 + $0xc0] sm:$0xff]
        %v4048 = vld [vmem:[#allocation3 + $0xc8] sm:$0xff]
        %v4049 = vld [vmem:[#allocation3 + $0xd0] sm:$0xff]
        %v4050 = vld [vmem:[#allocation3 + $0xd8] sm:$0xff]
        %v4051 = vld [vmem:[#allocation3 + $0xe0] sm:$0xff]
        %v4052 = vld [vmem:[#allocation3 + $0xe8] sm:$0xff]
        %v4053 = vld [vmem:[#allocation3 + $0xf0] sm:$0xff]
        %v4054 = vld [vmem:[#allocation3 + $0xf8] sm:$0xff]
        %v4055 = vld [vmem:[#allocation3 + $0x100] sm:$0xff]
        %v4056 = vld [vmem:[#allocation3 + $0x108] sm:$0xff]
        %v4057 = vld [vmem:[#allocation3 + $0x110] sm:$0xff]
        %v4058 = vld [vmem:[#allocation3 + $0x118] sm:$0xff]
        %v4059 = vld [vmem:[#allocation3 + $0x120] sm:$0xff]
        %v4060 = vld [vmem:[#allocation3 + $0x128] sm:$0xff]
        %v4061 = vld [vmem:[#allocation3 + $0x130] sm:$0xff]
        %v4062 = vld [vmem:[#allocation3 + $0x138] sm:$0xff]
        %v4063 = vld [vmem:[#allocation3 + $0x140] sm:$0xff]
        %v4064 = vld [vmem:[#allocation3 + $0x148] sm:$0xff]
        %v4065 = vld [vmem:[#allocation3 + $0x150] sm:$0xff]
        %v4066 = vld [vmem:[#allocation3 + $0x158] sm:$0xff]
        %v4067 = vld [vmem:[#allocation3 + $0x160] sm:$0xff]
        %v4068 = vld [vmem:[#allocation3 + $0x168] sm:$0xff]
        %v4069 = vld [vmem:[#allocation3 + $0x170] sm:$0xff]
        %v4070 = vld [vmem:[#allocation3 + $0x178] sm:$0xff]
        %v4071 = vld [vmem:[#allocation3 + $0x180] sm:$0xff]
        %v4072 = vld [vmem:[#allocation3 + $0x188] sm:$0xff]
        %v4073 = vld [vmem:[#allocation3 + $0x190] sm:$0xff]
        %v4074 = vld [vmem:[#allocation3 + $0x198] sm:$0xff]
        %v4075 = vld [vmem:[#allocation3 + $0x1a0] sm:$0xff]
        %v4076 = vld [vmem:[#allocation3 + $0x1a8] sm:$0xff]
        %v4077 = vld [vmem:[#allocation3 + $0x1b0] sm:$0xff]
        %v4078 = vld [vmem:[#allocation3 + $0x1b8] sm:$0xff]
        %v4079 = vld [vmem:[#allocation3 + $0x1c0] sm:$0xff]
        %v4080 = vld [vmem:[#allocation3 + $0x1c8] sm:$0xff]
        %v4081 = vld [vmem:[#allocation3 + $0x1d0] sm:$0xff]
        %v4082 = vld [vmem:[#allocation3 + $0x1d8] sm:$0xff]
        %v4083 = vld [vmem:[#allocation3 + $0x1e0] sm:$0xff]
        %v4084 = vld [vmem:[#allocation3 + $0x1e8] sm:$0xff]
        %v4085 = vld [vmem:[#allocation3 + $0x1f0] sm:$0xff]
        %v4086 = vld [vmem:[#allocation3 + $0x1f8] sm:$0xff]
        %v4087 = vmul.f32 %v3959, 256.0
        %v4088 = vmul.f32 %v3960, 256.0
        %v4089 = vmul.f32 %v3961, 256.0
        %v4090 = vmul.f32 %v3962, 256.0
        %v4091 = vmul.f32 %v3963, 256.0
        %v4092 = vmul.f32 %v3964, 256.0
        %v4093 = vmul.f32 %v3965, 256.0
        %v4094 = vmul.f32 %v3966, 256.0
        %v4095 = vmul.f32 %v3967, 256.0
        %v4096 = vmul.f32 %v3968, 256.0
        %v4097 = vmul.f32 %v3969, 256.0
        %v4098 = vmul.f32 %v3970, 256.0
        %v4099 = vmul.f32 %v3971, 256.0
        %v4100 = vmul.f32 %v3972, 256.0
        %v4101 = vmul.f32 %v3973, 256.0
        %v4102 = vmul.f32 %v3974, 256.0
        %v4103 = vmul.f32 %v3975, 256.0
        %v4104 = vmul.f32 %v3976, 256.0
        %v4105 = vmul.f32 %v3977, 256.0
        %v4106 = vmul.f32 %v3978, 256.0
        %v4107 = vmul.f32 %v3979, 256.0
        %v4108 = vmul.f32 %v3980, 256.0
        %v4109 = vmul.f32 %v3981, 256.0
        %v4110 = vmul.f32 %v3982, 256.0
        %v4111 = vmul.f32 %v3983, 256.0
        %v4112 = vmul.f32 %v3984, 256.0
        %v4113 = vmul.f32 %v3985, 256.0
        %v4114 = vmul.f32 %v3986, 256.0
        %v4115 = vmul.f32 %v3987, 256.0
        %v4116 = vmul.f32 %v3988, 256.0
        %v4117 = vmul.f32 %v3989, 256.0
        %v4118 = vmul.f32 %v3990, 256.0
        %v4119 = vmul.f32 %v3991, 256.0
        %v4120 = vmul.f32 %v3992, 256.0
        %v4121 = vmul.f32 %v3993, 256.0
        %v4122 = vmul.f32 %v3994, 256.0
        %v4123 = vmul.f32 %v3995, 256.0
        %v4124 = vmul.f32 %v3996, 256.0
        %v4125 = vmul.f32 %v3997, 256.0
        %v4126 = vmul.f32 %v3998, 256.0
        %v4127 = vmul.f32 %v3999, 256.0
        %v4128 = vmul.f32 %v4000, 256.0
        %v4129 = vmul.f32 %v4001, 256.0
        %v4130 = vmul.f32 %v4002, 256.0
        %v4131 = vmul.f32 %v4003, 256.0
        %v4132 = vmul.f32 %v4004, 256.0
        %v4133 = vmul.f32 %v4005, 256.0
        %v4134 = vmul.f32 %v4006, 256.0
        %v4135 = vmul.f32 %v4007, 256.0
        %v4136 = vmul.f32 %v4008, 256.0
        %v4137 = vmul.f32 %v4009, 256.0
        %v4138 = vmul.f32 %v4010, 256.0
        %v4139 = vmul.f32 %v4011, 256.0
        %v4140 = vmul.f32 %v4012, 256.0
        %v4141 = vmul.f32 %v4013, 256.0
        %v4142 = vmul.f32 %v4014, 256.0
        %v4143 = vmul.f32 %v4015, 256.0
        %v4144 = vmul.f32 %v4016, 256.0
        %v4145 = vmul.f32 %v4017, 256.0
        %v4146 = vmul.f32 %v4018, 256.0
        %v4147 = vmul.f32 %v4019, 256.0
        %v4148 = vmul.f32 %v4020, 256.0
        %v4149 = vmul.f32 %v4021, 256.0
        %v4150 = vmul.f32 %v4022, 256.0
        %v4151 = vmul.f32 %v4087, %v3959
        %v4152 = vmul.f32 %v4088, %v3960
        %v4153 = vmul.f32 %v4089, %v3961
        %v4154 = vmul.f32 %v4090, %v3962
        %v4155 = vmul.f32 %v4091, %v3963
        %v4156 = vmul.f32 %v4092, %v3964
        %v4157 = vmul.f32 %v4093, %v3965
        %v4158 = vmul.f32 %v4094, %v3966
        %v4159 = vmul.f32 %v4095, %v3967
        %v4160 = vmul.f32 %v4096, %v3968
        %v4161 = vmul.f32 %v4097, %v3969
        %v4162 = vmul.f32 %v4098, %v3970
        %v4163 = vmul.f32 %v4099, %v3971
        %v4164 = vmul.f32 %v4100, %v3972
        %v4165 = vmul.f32 %v4101, %v3973
        %v4166 = vmul.f32 %v4102, %v3974
        %v4167 = vmul.f32 %v4103, %v3975
        %v4168 = vmul.f32 %v4104, %v3976
        %v4169 = vmul.f32 %v4105, %v3977
        %v4170 = vmul.f32 %v4106, %v3978
        %v4171 = vmul.f32 %v4107, %v3979
        %v4172 = vmul.f32 %v4108, %v3980
        %v4173 = vmul.f32 %v4109, %v3981
        %v4174 = vmul.f32 %v4110, %v3982
        %v4175 = vmul.f32 %v4111, %v3983
        %v4176 = vmul.f32 %v4112, %v3984
        %v4177 = vmul.f32 %v4113, %v3985
        %v4178 = vmul.f32 %v4114, %v3986
        %v4179 = vmul.f32 %v4115, %v3987
        %v4180 = vmul.f32 %v4116, %v3988
        %v4181 = vmul.f32 %v4117, %v3989
        %v4182 = vmul.f32 %v4118, %v3990
        %v4183 = vmul.f32 %v4119, %v3991
        %v4184 = vmul.f32 %v4120, %v3992
        %v4185 = vmul.f32 %v4121, %v3993
        %v4186 = vmul.f32 %v4122, %v3994
        %v4187 = vmul.f32 %v4123, %v3995
        %v4188 = vmul.f32 %v4124, %v3996
        %v4189 = vmul.f32 %v4125, %v3997
        %v4190 = vmul.f32 %v4126, %v3998
        %v4191 = vmul.f32 %v4127, %v3999
        %v4192 = vmul.f32 %v4128, %v4000
        %v4193 = vmul.f32 %v4129, %v4001
        %v4194 = vmul.f32 %v4130, %v4002
        %v4195 = vmul.f32 %v4131, %v4003
        %v4196 = vmul.f32 %v4132, %v4004
        %v4197 = vmul.f32 %v4133, %v4005
        %v4198 = vmul.f32 %v4134, %v4006
        %v4199 = vmul.f32 %v4135, %v4007
        %v4200 = vmul.f32 %v4136, %v4008
        %v4201 = vmul.f32 %v4137, %v4009
        %v4202 = vmul.f32 %v4138, %v4010
        %v4203 = vmul.f32 %v4139, %v4011
        %v4204 = vmul.f32 %v4140, %v4012
        %v4205 = vmul.f32 %v4141, %v4013
        %v4206 = vmul.f32 %v4142, %v4014
        %v4207 = vmul.f32 %v4143, %v4015
        %v4208 = vmul.f32 %v4144, %v4016
        %v4209 = vmul.f32 %v4145, %v4017
        %v4210 = vmul.f32 %v4146, %v4018
        %v4211 = vmul.f32 %v4147, %v4019
        %v4212 = vmul.f32 %v4148, %v4020
        %v4213 = vmul.f32 %v4149, %v4021
        %v4214 = vmul.f32 %v4150, %v4022
        %v4215 = vsub.f32 %v4023, %v4151
        %v4216 = vsub.f32 %v4024, %v4152
        %v4217 = vsub.f32 %v4025, %v4153
        %v4218 = vsub.f32 %v4026, %v4154
        %v4219 = vsub.f32 %v4027, %v4155
        %v4220 = vsub.f32 %v4028, %v4156
        %v4221 = vsub.f32 %v4029, %v4157
        %v4222 = vsub.f32 %v4030, %v4158
        %v4223 = vsub.f32 %v4031, %v4159
        %v4224 = vsub.f32 %v4032, %v4160
        %v4225 = vsub.f32 %v4033, %v4161
        %v4226 = vsub.f32 %v4034, %v4162
        %v4227 = vsub.f32 %v4035, %v4163
        %v4228 = vsub.f32 %v4036, %v4164
        %v4229 = vsub.f32 %v4037, %v4165
        %v4230 = vsub.f32 %v4038, %v4166
        %v4231 = vsub.f32 %v4039, %v4167
        %v4232 = vsub.f32 %v4040, %v4168
        %v4233 = vsub.f32 %v4041, %v4169
        %v4234 = vsub.f32 %v4042, %v4170
        %v4235 = vsub.f32 %v4043, %v4171
        %v4236 = vsub.f32 %v4044, %v4172
        %v4237 = vsub.f32 %v4045, %v4173
        %v4238 = vsub.f32 %v4046, %v4174
        %v4239 = vsub.f32 %v4047, %v4175
        %v4240 = vsub.f32 %v4048, %v4176
        %v4241 = vsub.f32 %v4049, %v4177
        %v4242 = vsub.f32 %v4050, %v4178
        %v4243 = vsub.f32 %v4051, %v4179
        %v4244 = vsub.f32 %v4052, %v4180
        %v4245 = vsub.f32 %v4053, %v4181
        %v4246 = vsub.f32 %v4054, %v4182
        %v4247 = vsub.f32 %v4055, %v4183
        %v4248 = vsub.f32 %v4056, %v4184
        %v4249 = vsub.f32 %v4057, %v4185
        %v4250 = vsub.f32 %v4058, %v4186
        %v4251 = vsub.f32 %v4059, %v4187
        %v4252 = vsub.f32 %v4060, %v4188
        %v4253 = vsub.f32 %v4061, %v4189
        %v4254 = vsub.f32 %v4062, %v4190
        %v4255 = vsub.f32 %v4063, %v4191
        %v4256 = vsub.f32 %v4064, %v4192
        %v4257 = vsub.f32 %v4065, %v4193
        %v4258 = vsub.f32 %v4066, %v4194
        %v4259 = vsub.f32 %v4067, %v4195
        %v4260 = vsub.f32 %v4068, %v4196
        %v4261 = vsub.f32 %v4069, %v4197
        %v4262 = vsub.f32 %v4070, %v4198
        %v4263 = vsub.f32 %v4071, %v4199
        %v4264 = vsub.f32 %v4072, %v4200
        %v4265 = vsub.f32 %v4073, %v4201
        %v4266 = vsub.f32 %v4074, %v4202
        %v4267 = vsub.f32 %v4075, %v4203
        %v4268 = vsub.f32 %v4076, %v4204
        %v4269 = vsub.f32 %v4077, %v4205
        %v4270 = vsub.f32 %v4078, %v4206
        %v4271 = vsub.f32 %v4079, %v4207
        %v4272 = vsub.f32 %v4080, %v4208
        %v4273 = vsub.f32 %v4081, %v4209
        %v4274 = vsub.f32 %v4082, %v4210
        %v4275 = vsub.f32 %v4083, %v4211
        %v4276 = vsub.f32 %v4084, %v4212
        %v4277 = vsub.f32 %v4085, %v4213
        %v4278 = vsub.f32 %v4086, %v4214
        %v4279 = vmul.f32 %v4215, 0.003921569
        %v4280 = vmul.f32 %v4216, 0.003921569
        %v4281 = vmul.f32 %v4217, 0.003921569
        %v4282 = vmul.f32 %v4218, 0.003921569
        %v4283 = vmul.f32 %v4219, 0.003921569
        %v4284 = vmul.f32 %v4220, 0.003921569
        %v4285 = vmul.f32 %v4221, 0.003921569
        %v4286 = vmul.f32 %v4222, 0.003921569
        %v4287 = vmul.f32 %v4223, 0.003921569
        %v4288 = vmul.f32 %v4224, 0.003921569
        %v4289 = vmul.f32 %v4225, 0.003921569
        %v4290 = vmul.f32 %v4226, 0.003921569
        %v4291 = vmul.f32 %v4227, 0.003921569
        %v4292 = vmul.f32 %v4228, 0.003921569
        %v4293 = vmul.f32 %v4229, 0.003921569
        %v4294 = vmul.f32 %v4230, 0.003921569
        %v4295 = vmul.f32 %v4231, 0.003921569
        %v4296 = vmul.f32 %v4232, 0.003921569
        %v4297 = vmul.f32 %v4233, 0.003921569
        %v4298 = vmul.f32 %v4234, 0.003921569
        %v4299 = vmul.f32 %v4235, 0.003921569
        %v4300 = vmul.f32 %v4236, 0.003921569
        %v4301 = vmul.f32 %v4237, 0.003921569
        %v4302 = vmul.f32 %v4238, 0.003921569
        %v4303 = vmul.f32 %v4239, 0.003921569
        %v4304 = vmul.f32 %v4240, 0.003921569
        %v4305 = vmul.f32 %v4241, 0.003921569
        %v4306 = vmul.f32 %v4242, 0.003921569
        %v4307 = vmul.f32 %v4243, 0.003921569
        %v4308 = vmul.f32 %v4244, 0.003921569
        %v4309 = vmul.f32 %v4245, 0.003921569
        %v4310 = vmul.f32 %v4246, 0.003921569
        %v4311 = vmul.f32 %v4247, 0.003921569
        %v4312 = vmul.f32 %v4248, 0.003921569
        %v4313 = vmul.f32 %v4249, 0.003921569
        %v4314 = vmul.f32 %v4250, 0.003921569
        %v4315 = vmul.f32 %v4251, 0.003921569
        %v4316 = vmul.f32 %v4252, 0.003921569
        %v4317 = vmul.f32 %v4253, 0.003921569
        %v4318 = vmul.f32 %v4254, 0.003921569
        %v4319 = vmul.f32 %v4255, 0.003921569
        %v4320 = vmul.f32 %v4256, 0.003921569
        %v4321 = vmul.f32 %v4257, 0.003921569
        %v4322 = vmul.f32 %v4258, 0.003921569
        %v4323 = vmul.f32 %v4259, 0.003921569
        %v4324 = vmul.f32 %v4260, 0.003921569
        %v4325 = vmul.f32 %v4261, 0.003921569
        %v4326 = vmul.f32 %v4262, 0.003921569
        %v4327 = vmul.f32 %v4263, 0.003921569
        %v4328 = vmul.f32 %v4264, 0.003921569
        %v4329 = vmul.f32 %v4265, 0.003921569
        %v4330 = vmul.f32 %v4266, 0.003921569
        %v4331 = vmul.f32 %v4267, 0.003921569
        %v4332 = vmul.f32 %v4268, 0.003921569
        %v4333 = vmul.f32 %v4269, 0.003921569
        %v4334 = vmul.f32 %v4270, 0.003921569
        %v4335 = vmul.f32 %v4271, 0.003921569
        %v4336 = vmul.f32 %v4272, 0.003921569
        %v4337 = vmul.f32 %v4273, 0.003921569
        %v4338 = vmul.f32 %v4274, 0.003921569
        %v4339 = vmul.f32 %v4275, 0.003921569
        %v4340 = vmul.f32 %v4276, 0.003921569
        %v4341 = vmul.f32 %v4277, 0.003921569
        %v4342 = vmul.f32 %v4278, 0.003921569
        %v4343 = vmax.f32 %v4279, 0.0
        %v4344 = vmax.f32 %v4280, 0.0
        %v4345 = vmax.f32 %v4281, 0.0
        %v4346 = vmax.f32 %v4282, 0.0
        %v4347 = vmax.f32 %v4283, 0.0
        %v4348 = vmax.f32 %v4284, 0.0
        %v4349 = vmax.f32 %v4285, 0.0
        %v4350 = vmax.f32 %v4286, 0.0
        %v4351 = vmax.f32 %v4287, 0.0
        %v4352 = vmax.f32 %v4288, 0.0
        %v4353 = vmax.f32 %v4289, 0.0
        %v4354 = vmax.f32 %v4290, 0.0
        %v4355 = vmax.f32 %v4291, 0.0
        %v4356 = vmax.f32 %v4292, 0.0
        %v4357 = vmax.f32 %v4293, 0.0
        %v4358 = vmax.f32 %v4294, 0.0
        %v4359 = vmax.f32 %v4295, 0.0
        %v4360 = vmax.f32 %v4296, 0.0
        %v4361 = vmax.f32 %v4297, 0.0
        %v4362 = vmax.f32 %v4298, 0.0
        %v4363 = vmax.f32 %v4299, 0.0
        %v4364 = vmax.f32 %v4300, 0.0
        %v4365 = vmax.f32 %v4301, 0.0
        %v4366 = vmax.f32 %v4302, 0.0
        %v4367 = vmax.f32 %v4303, 0.0
        %v4368 = vmax.f32 %v4304, 0.0
        %v4369 = vmax.f32 %v4305, 0.0
        %v4370 = vmax.f32 %v4306, 0.0
        %v4371 = vmax.f32 %v4307, 0.0
        %v4372 = vmax.f32 %v4308, 0.0
        %v4373 = vmax.f32 %v4309, 0.0
        %v4374 = vmax.f32 %v4310, 0.0
        %v4375 = vmax.f32 %v4311, 0.0
        %v4376 = vmax.f32 %v4312, 0.0
        %v4377 = vmax.f32 %v4313, 0.0
        %v4378 = vmax.f32 %v4314, 0.0
        %v4379 = vmax.f32 %v4315, 0.0
        %v4380 = vmax.f32 %v4316, 0.0
        %v4381 = vmax.f32 %v4317, 0.0
        %v4382 = vmax.f32 %v4318, 0.0
        %v4383 = vmax.f32 %v4319, 0.0
        %v4384 = vmax.f32 %v4320, 0.0
        %v4385 = vmax.f32 %v4321, 0.0
        %v4386 = vmax.f32 %v4322, 0.0
        %v4387 = vmax.f32 %v4323, 0.0
        %v4388 = vmax.f32 %v4324, 0.0
        %v4389 = vmax.f32 %v4325, 0.0
        %v4390 = vmax.f32 %v4326, 0.0
        %v4391 = vmax.f32 %v4327, 0.0
        %v4392 = vmax.f32 %v4328, 0.0
        %v4393 = vmax.f32 %v4329, 0.0
        %v4394 = vmax.f32 %v4330, 0.0
        %v4395 = vmax.f32 %v4331, 0.0
        %v4396 = vmax.f32 %v4332, 0.0
        %v4397 = vmax.f32 %v4333, 0.0
        %v4398 = vmax.f32 %v4334, 0.0
        %v4399 = vmax.f32 %v4335, 0.0
        %v4400 = vmax.f32 %v4336, 0.0
        %v4401 = vmax.f32 %v4337, 0.0
        %v4402 = vmax.f32 %v4338, 0.0
        %v4403 = vmax.f32 %v4339, 0.0
        %v4404 = vmax.f32 %v4340, 0.0
        %v4405 = vmax.f32 %v4341, 0.0
        %v4406 = vmax.f32 %v4342, 0.0
        %v4407 = vadd.f32 %v4343, 1e-05
        %v4408 = vadd.f32 %v4344, 1e-05
        %v4409 = vadd.f32 %v4345, 1e-05
        %v4410 = vadd.f32 %v4346, 1e-05
        %v4411 = vadd.f32 %v4347, 1e-05
        %v4412 = vadd.f32 %v4348, 1e-05
        %v4413 = vadd.f32 %v4349, 1e-05
        %v4414 = vadd.f32 %v4350, 1e-05
        %v4415 = vadd.f32 %v4351, 1e-05
        %v4416 = vadd.f32 %v4352, 1e-05
        %v4417 = vadd.f32 %v4353, 1e-05
        %v4418 = vadd.f32 %v4354, 1e-05
        %v4419 = vadd.f32 %v4355, 1e-05
        %v4420 = vadd.f32 %v4356, 1e-05
        %v4421 = vadd.f32 %v4357, 1e-05
        %v4422 = vadd.f32 %v4358, 1e-05
        %v4423 = vadd.f32 %v4359, 1e-05
        %v4424 = vadd.f32 %v4360, 1e-05
        %v4425 = vadd.f32 %v4361, 1e-05
        %v4426 = vadd.f32 %v4362, 1e-05
        %v4427 = vadd.f32 %v4363, 1e-05
        %v4428 = vadd.f32 %v4364, 1e-05
        %v4429 = vadd.f32 %v4365, 1e-05
        %v4430 = vadd.f32 %v4366, 1e-05
        %v4431 = vadd.f32 %v4367, 1e-05
        %v4432 = vadd.f32 %v4368, 1e-05
        %v4433 = vadd.f32 %v4369, 1e-05
        %v4434 = vadd.f32 %v4370, 1e-05
        %v4435 = vadd.f32 %v4371, 1e-05
        %v4436 = vadd.f32 %v4372, 1e-05
        %v4437 = vadd.f32 %v4373, 1e-05
        %v4438 = vadd.f32 %v4374, 1e-05
        %v4439 = vadd.f32 %v4375, 1e-05
        %v4440 = vadd.f32 %v4376, 1e-05
        %v4441 = vadd.f32 %v4377, 1e-05
        %v4442 = vadd.f32 %v4378, 1e-05
        %v4443 = vadd.f32 %v4379, 1e-05
        %v4444 = vadd.f32 %v4380, 1e-05
        %v4445 = vadd.f32 %v4381, 1e-05
        %v4446 = vadd.f32 %v4382, 1e-05
        %v4447 = vadd.f32 %v4383, 1e-05
        %v4448 = vadd.f32 %v4384, 1e-05
        %v4449 = vadd.f32 %v4385, 1e-05
        %v4450 = vadd.f32 %v4386, 1e-05
        %v4451 = vadd.f32 %v4387, 1e-05
        %v4452 = vadd.f32 %v4388, 1e-05
        %v4453 = vadd.f32 %v4389, 1e-05
        %v4454 = vadd.f32 %v4390, 1e-05
        %v4455 = vadd.f32 %v4391, 1e-05
        %v4456 = vadd.f32 %v4392, 1e-05
        %v4457 = vadd.f32 %v4393, 1e-05
        %v4458 = vadd.f32 %v4394, 1e-05
        %v4459 = vadd.f32 %v4395, 1e-05
        %v4460 = vadd.f32 %v4396, 1e-05
        %v4461 = vadd.f32 %v4397, 1e-05
        %v4462 = vadd.f32 %v4398, 1e-05
        %v4463 = vadd.f32 %v4399, 1e-05
        %v4464 = vadd.f32 %v4400, 1e-05
        %v4465 = vadd.f32 %v4401, 1e-05
        %v4466 = vadd.f32 %v4402, 1e-05
        %v4467 = vadd.f32 %v4403, 1e-05
        %v4468 = vadd.f32 %v4404, 1e-05
        %v4469 = vadd.f32 %v4405, 1e-05
        %v4470 = vadd.f32 %v4406, 1e-05
        %v4471 = vrsqrt.pop %v4407
        %v4472 = vrsqrt.pop %v4408
        %v4473 = vrsqrt.pop %v4409
        %v4474 = vrsqrt.pop %v4410
        %v4475 = vrsqrt.pop %v4411
        %v4476 = vrsqrt.pop %v4412
        %v4477 = vrsqrt.pop %v4413
        %v4478 = vrsqrt.pop %v4414
        %v4479 = vrsqrt.pop %v4415
        %v4480 = vrsqrt.pop %v4416
        %v4481 = vrsqrt.pop %v4417
        %v4482 = vrsqrt.pop %v4418
        %v4483 = vrsqrt.pop %v4419
        %v4484 = vrsqrt.pop %v4420
        %v4485 = vrsqrt.pop %v4421
        %v4486 = vrsqrt.pop %v4422
        %v4487 = vrsqrt.pop %v4423
        %v4488 = vrsqrt.pop %v4424
        %v4489 = vrsqrt.pop %v4425
        %v4490 = vrsqrt.pop %v4426
        %v4491 = vrsqrt.pop %v4427
        %v4492 = vrsqrt.pop %v4428
        %v4493 = vrsqrt.pop %v4429
        %v4494 = vrsqrt.pop %v4430
        %v4495 = vrsqrt.pop %v4431
        %v4496 = vrsqrt.pop %v4432
        %v4497 = vrsqrt.pop %v4433
        %v4498 = vrsqrt.pop %v4434
        %v4499 = vrsqrt.pop %v4435
        %v4500 = vrsqrt.pop %v4436
        %v4501 = vrsqrt.pop %v4437
        %v4502 = vrsqrt.pop %v4438
        %v4503 = vrsqrt.pop %v4439
        %v4504 = vrsqrt.pop %v4440
        %v4505 = vrsqrt.pop %v4441
        %v4506 = vrsqrt.pop %v4442
        %v4507 = vrsqrt.pop %v4443
        %v4508 = vrsqrt.pop %v4444
        %v4509 = vrsqrt.pop %v4445
        %v4510 = vrsqrt.pop %v4446
        %v4511 = vrsqrt.pop %v4447
        %v4512 = vrsqrt.pop %v4448
        %v4513 = vrsqrt.pop %v4449
        %v4514 = vrsqrt.pop %v4450
        %v4515 = vrsqrt.pop %v4451
        %v4516 = vrsqrt.pop %v4452
        %v4517 = vrsqrt.pop %v4453
        %v4518 = vrsqrt.pop %v4454
        %v4519 = vrsqrt.pop %v4455
        %v4520 = vrsqrt.pop %v4456
        %v4521 = vrsqrt.pop %v4457
        %v4522 = vrsqrt.pop %v4458
        %v4523 = vrsqrt.pop %v4459
        %v4524 = vrsqrt.pop %v4460
        %v4525 = vrsqrt.pop %v4461
        %v4526 = vrsqrt.pop %v4462
        %v4527 = vrsqrt.pop %v4463
        %v4528 = vrsqrt.pop %v4464
        %v4529 = vrsqrt.pop %v4465
        %v4530 = vrsqrt.pop %v4466
        %v4531 = vrsqrt.pop %v4467
        %v4532 = vrsqrt.pop %v4468
        %v4533 = vrsqrt.pop %v4469
        %v4534 = vrsqrt.pop %v4470
        %v4535 = vld [vmem:[%s354] sm:$0xff]
        %v4536 = vld [vmem:[%s354 + $0x8] sm:$0xff]
        %v4537 = vld [vmem:[%s354 + $0x10] sm:$0xff]
        %v4538 = vld [vmem:[%s354 + $0x18] sm:$0xff]
        %v4539 = vld [vmem:[%s354 + $0x20] sm:$0xff]
        %v4540 = vld [vmem:[%s354 + $0x28] sm:$0xff]
        %v4541 = vld [vmem:[%s354 + $0x30] sm:$0xff]
        %v4542 = vld [vmem:[%s354 + $0x38] sm:$0xff]
        %v4543 = vld [vmem:[%s354 + $0x40] sm:$0xff]
        %v4544 = vld [vmem:[%s354 + $0x48] sm:$0xff]
        %v4545 = vld [vmem:[%s354 + $0x50] sm:$0xff]
        %v4546 = vld [vmem:[%s354 + $0x58] sm:$0xff]
        %v4547 = vld [vmem:[%s354 + $0x60] sm:$0xff]
        %v4548 = vld [vmem:[%s354 + $0x68] sm:$0xff]
        %v4549 = vld [vmem:[%s354 + $0x70] sm:$0xff]
        %v4550 = vld [vmem:[%s354 + $0x78] sm:$0xff]
        %v4551 = vld [vmem:[%s354 + $0x80] sm:$0xff]
        %v4552 = vld [vmem:[%s354 + $0x88] sm:$0xff]
        %v4553 = vld [vmem:[%s354 + $0x90] sm:$0xff]
        %v4554 = vld [vmem:[%s354 + $0x98] sm:$0xff]
        %v4555 = vld [vmem:[%s354 + $0xa0] sm:$0xff]
        %v4556 = vld [vmem:[%s354 + $0xa8] sm:$0xff]
        %v4557 = vld [vmem:[%s354 + $0xb0] sm:$0xff]
        %v4558 = vld [vmem:[%s354 + $0xb8] sm:$0xff]
        %v4559 = vld [vmem:[%s354 + $0xc0] sm:$0xff]
        %v4560 = vld [vmem:[%s354 + $0xc8] sm:$0xff]
        %v4561 = vld [vmem:[%s354 + $0xd0] sm:$0xff]
        %v4562 = vld [vmem:[%s354 + $0xd8] sm:$0xff]
        %v4563 = vld [vmem:[%s354 + $0xe0] sm:$0xff]
        %v4564 = vld [vmem:[%s354 + $0xe8] sm:$0xff]
        %v4565 = vld [vmem:[%s354 + $0xf0] sm:$0xff]
        %v4566 = vld [vmem:[%s354 + $0xf8] sm:$0xff]
        %v4567 = vld [vmem:[%s354 + $0x100] sm:$0xff]
        %v4568 = vld [vmem:[%s354 + $0x108] sm:$0xff]
        %v4569 = vld [vmem:[%s354 + $0x110] sm:$0xff]
        %v4570 = vld [vmem:[%s354 + $0x118] sm:$0xff]
        %v4571 = vld [vmem:[%s354 + $0x120] sm:$0xff]
        %v4572 = vld [vmem:[%s354 + $0x128] sm:$0xff]
        %v4573 = vld [vmem:[%s354 + $0x130] sm:$0xff]
        %v4574 = vld [vmem:[%s354 + $0x138] sm:$0xff]
        %v4575 = vld [vmem:[%s354 + $0x140] sm:$0xff]
        %v4576 = vld [vmem:[%s354 + $0x148] sm:$0xff]
        %v4577 = vld [vmem:[%s354 + $0x150] sm:$0xff]
        %v4578 = vld [vmem:[%s354 + $0x158] sm:$0xff]
        %v4579 = vld [vmem:[%s354 + $0x160] sm:$0xff]
        %v4580 = vld [vmem:[%s354 + $0x168] sm:$0xff]
        %v4581 = vld [vmem:[%s354 + $0x170] sm:$0xff]
        %v4582 = vld [vmem:[%s354 + $0x178] sm:$0xff]
        %v4583 = vld [vmem:[%s354 + $0x180] sm:$0xff]
        %v4584 = vld [vmem:[%s354 + $0x188] sm:$0xff]
        %v4585 = vld [vmem:[%s354 + $0x190] sm:$0xff]
        %v4586 = vld [vmem:[%s354 + $0x198] sm:$0xff]
        %v4587 = vld [vmem:[%s354 + $0x1a0] sm:$0xff]
        %v4588 = vld [vmem:[%s354 + $0x1a8] sm:$0xff]
        %v4589 = vld [vmem:[%s354 + $0x1b0] sm:$0xff]
        %v4590 = vld [vmem:[%s354 + $0x1b8] sm:$0xff]
        %v4591 = vld [vmem:[%s354 + $0x1c0] sm:$0xff]
        %v4592 = vld [vmem:[%s354 + $0x1c8] sm:$0xff]
        %v4593 = vld [vmem:[%s354 + $0x1d0] sm:$0xff]
        %v4594 = vld [vmem:[%s354 + $0x1d8] sm:$0xff]
        %v4595 = vld [vmem:[%s354 + $0x1e0] sm:$0xff]
        %v4596 = vld [vmem:[%s354 + $0x1e8] sm:$0xff]
        %v4597 = vld [vmem:[%s354 + $0x1f0] sm:$0xff]
        %v4598 = vld [vmem:[%s354 + $0x1f8] sm:$0xff]
        %v4599 = vmul.f32 %v4535, %v4471
        %v4600 = vmul.f32 %v4536, %v4472
        %v4601 = vmul.f32 %v4537, %v4473
        %v4602 = vmul.f32 %v4538, %v4474
        %v4603 = vmul.f32 %v4539, %v4475
        %v4604 = vmul.f32 %v4540, %v4476
        %v4605 = vmul.f32 %v4541, %v4477
        %v4606 = vmul.f32 %v4542, %v4478
        %v4607 = vmul.f32 %v4543, %v4479
        %v4608 = vmul.f32 %v4544, %v4480
        %v4609 = vmul.f32 %v4545, %v4481
        %v4610 = vmul.f32 %v4546, %v4482
        %v4611 = vmul.f32 %v4547, %v4483
        %v4612 = vmul.f32 %v4548, %v4484
        %v4613 = vmul.f32 %v4549, %v4485
        %v4614 = vmul.f32 %v4550, %v4486
        %v4615 = vmul.f32 %v4551, %v4487
        %v4616 = vmul.f32 %v4552, %v4488
        %v4617 = vmul.f32 %v4553, %v4489
        %v4618 = vmul.f32 %v4554, %v4490
        %v4619 = vmul.f32 %v4555, %v4491
        %v4620 = vmul.f32 %v4556, %v4492
        %v4621 = vmul.f32 %v4557, %v4493
        %v4622 = vmul.f32 %v4558, %v4494
        %v4623 = vmul.f32 %v4559, %v4495
        %v4624 = vmul.f32 %v4560, %v4496
        %v4625 = vmul.f32 %v4561, %v4497
        %v4626 = vmul.f32 %v4562, %v4498
        %v4627 = vmul.f32 %v4563, %v4499
        %v4628 = vmul.f32 %v4564, %v4500
        %v4629 = vmul.f32 %v4565, %v4501
        %v4630 = vmul.f32 %v4566, %v4502
        %v4631 = vmul.f32 %v4567, %v4503
        %v4632 = vmul.f32 %v4568, %v4504
        %v4633 = vmul.f32 %v4569, %v4505
        %v4634 = vmul.f32 %v4570, %v4506
        %v4635 = vmul.f32 %v4571, %v4507
        %v4636 = vmul.f32 %v4572, %v4508
        %v4637 = vmul.f32 %v4573, %v4509
        %v4638 = vmul.f32 %v4574, %v4510
        %v4639 = vmul.f32 %v4575, %v4511
        %v4640 = vmul.f32 %v4576, %v4512
        %v4641 = vmul.f32 %v4577, %v4513
        %v4642 = vmul.f32 %v4578, %v4514
        %v4643 = vmul.f32 %v4579, %v4515
        %v4644 = vmul.f32 %v4580, %v4516
        %v4645 = vmul.f32 %v4581, %v4517
        %v4646 = vmul.f32 %v4582, %v4518
        %v4647 = vmul.f32 %v4583, %v4519
        %v4648 = vmul.f32 %v4584, %v4520
        %v4649 = vmul.f32 %v4585, %v4521
        %v4650 = vmul.f32 %v4586, %v4522
        %v4651 = vmul.f32 %v4587, %v4523
        %v4652 = vmul.f32 %v4588, %v4524
        %v4653 = vmul.f32 %v4589, %v4525
        %v4654 = vmul.f32 %v4590, %v4526
        %v4655 = vmul.f32 %v4591, %v4527
        %v4656 = vmul.f32 %v4592, %v4528
        %v4657 = vmul.f32 %v4593, %v4529
        %v4658 = vmul.f32 %v4594, %v4530
        %v4659 = vmul.f32 %v4595, %v4531
        %v4660 = vmul.f32 %v4596, %v4532
        %v4661 = vmul.f32 %v4597, %v4533
        %v4662 = vmul.f32 %v4598, %v4534
        %v4663 = vld [vmem:[%s349] sm:$0xff]
        %v4664 = vld [vmem:[%s349 + $0x8] sm:$0xff]
        %v4665 = vld [vmem:[%s349 + $0x10] sm:$0xff]
        %v4666 = vld [vmem:[%s349 + $0x18] sm:$0xff]
        %v4667 = vld [vmem:[%s349 + $0x20] sm:$0xff]
        %v4668 = vld [vmem:[%s349 + $0x28] sm:$0xff]
        %v4669 = vld [vmem:[%s349 + $0x30] sm:$0xff]
        %v4670 = vld [vmem:[%s349 + $0x38] sm:$0xff]
        %v4671 = vld [vmem:[%s349 + $0x40] sm:$0xff]
        %v4672 = vld [vmem:[%s349 + $0x48] sm:$0xff]
        %v4673 = vld [vmem:[%s349 + $0x50] sm:$0xff]
        %v4674 = vld [vmem:[%s349 + $0x58] sm:$0xff]
        %v4675 = vld [vmem:[%s349 + $0x60] sm:$0xff]
        %v4676 = vld [vmem:[%s349 + $0x68] sm:$0xff]
        %v4677 = vld [vmem:[%s349 + $0x70] sm:$0xff]
        %v4678 = vld [vmem:[%s349 + $0x78] sm:$0xff]
        %v4679 = vld [vmem:[%s349 + $0x80] sm:$0xff]
        %v4680 = vld [vmem:[%s349 + $0x88] sm:$0xff]
        %v4681 = vld [vmem:[%s349 + $0x90] sm:$0xff]
        %v4682 = vld [vmem:[%s349 + $0x98] sm:$0xff]
        %v4683 = vld [vmem:[%s349 + $0xa0] sm:$0xff]
        %v4684 = vld [vmem:[%s349 + $0xa8] sm:$0xff]
        %v4685 = vld [vmem:[%s349 + $0xb0] sm:$0xff]
        %v4686 = vld [vmem:[%s349 + $0xb8] sm:$0xff]
        %v4687 = vld [vmem:[%s349 + $0xc0] sm:$0xff]
        %v4688 = vld [vmem:[%s349 + $0xc8] sm:$0xff]
        %v4689 = vld [vmem:[%s349 + $0xd0] sm:$0xff]
        %v4690 = vld [vmem:[%s349 + $0xd8] sm:$0xff]
        %v4691 = vld [vmem:[%s349 + $0xe0] sm:$0xff]
        %v4692 = vld [vmem:[%s349 + $0xe8] sm:$0xff]
        %v4693 = vld [vmem:[%s349 + $0xf0] sm:$0xff]
        %v4694 = vld [vmem:[%s349 + $0xf8] sm:$0xff]
        %v4695 = vld [vmem:[%s349 + $0x100] sm:$0xff]
        %v4696 = vld [vmem:[%s349 + $0x108] sm:$0xff]
        %v4697 = vld [vmem:[%s349 + $0x110] sm:$0xff]
        %v4698 = vld [vmem:[%s349 + $0x118] sm:$0xff]
        %v4699 = vld [vmem:[%s349 + $0x120] sm:$0xff]
        %v4700 = vld [vmem:[%s349 + $0x128] sm:$0xff]
        %v4701 = vld [vmem:[%s349 + $0x130] sm:$0xff]
        %v4702 = vld [vmem:[%s349 + $0x138] sm:$0xff]
        %v4703 = vld [vmem:[%s349 + $0x140] sm:$0xff]
        %v4704 = vld [vmem:[%s349 + $0x148] sm:$0xff]
        %v4705 = vld [vmem:[%s349 + $0x150] sm:$0xff]
        %v4706 = vld [vmem:[%s349 + $0x158] sm:$0xff]
        %v4707 = vld [vmem:[%s349 + $0x160] sm:$0xff]
        %v4708 = vld [vmem:[%s349 + $0x168] sm:$0xff]
        %v4709 = vld [vmem:[%s349 + $0x170] sm:$0xff]
        %v4710 = vld [vmem:[%s349 + $0x178] sm:$0xff]
        %v4711 = vld [vmem:[%s349 + $0x180] sm:$0xff]
        %v4712 = vld [vmem:[%s349 + $0x188] sm:$0xff]
        %v4713 = vld [vmem:[%s349 + $0x190] sm:$0xff]
        %v4714 = vld [vmem:[%s349 + $0x198] sm:$0xff]
        %v4715 = vld [vmem:[%s349 + $0x1a0] sm:$0xff]
        %v4716 = vld [vmem:[%s349 + $0x1a8] sm:$0xff]
        %v4717 = vld [vmem:[%s349 + $0x1b0] sm:$0xff]
        %v4718 = vld [vmem:[%s349 + $0x1b8] sm:$0xff]
        %v4719 = vld [vmem:[%s349 + $0x1c0] sm:$0xff]
        %v4720 = vld [vmem:[%s349 + $0x1c8] sm:$0xff]
        %v4721 = vld [vmem:[%s349 + $0x1d0] sm:$0xff]
        %v4722 = vld [vmem:[%s349 + $0x1d8] sm:$0xff]
        %v4723 = vld [vmem:[%s349 + $0x1e0] sm:$0xff]
        %v4724 = vld [vmem:[%s349 + $0x1e8] sm:$0xff]
        %v4725 = vld [vmem:[%s349 + $0x1f0] sm:$0xff]
        %v4726 = vld [vmem:[%s349 + $0x1f8] sm:$0xff]
        %v4727 = vmul.f32 %v3959, %v4599
        %v4728 = vmul.f32 %v3960, %v4600
        %v4729 = vmul.f32 %v3961, %v4601
        %v4730 = vmul.f32 %v3962, %v4602
        %v4731 = vmul.f32 %v3963, %v4603
        %v4732 = vmul.f32 %v3964, %v4604
        %v4733 = vmul.f32 %v3965, %v4605
        %v4734 = vmul.f32 %v3966, %v4606
        %v4735 = vmul.f32 %v3967, %v4607
        %v4736 = vmul.f32 %v3968, %v4608
        %v4737 = vmul.f32 %v3969, %v4609
        %v4738 = vmul.f32 %v3970, %v4610
        %v4739 = vmul.f32 %v3971, %v4611
        %v4740 = vmul.f32 %v3972, %v4612
        %v4741 = vmul.f32 %v3973, %v4613
        %v4742 = vmul.f32 %v3974, %v4614
        %v4743 = vmul.f32 %v3975, %v4615
        %v4744 = vmul.f32 %v3976, %v4616
        %v4745 = vmul.f32 %v3977, %v4617
        %v4746 = vmul.f32 %v3978, %v4618
        %v4747 = vmul.f32 %v3979, %v4619
        %v4748 = vmul.f32 %v3980, %v4620
        %v4749 = vmul.f32 %v3981, %v4621
        %v4750 = vmul.f32 %v3982, %v4622
        %v4751 = vmul.f32 %v3983, %v4623
        %v4752 = vmul.f32 %v3984, %v4624
        %v4753 = vmul.f32 %v3985, %v4625
        %v4754 = vmul.f32 %v3986, %v4626
        %v4755 = vmul.f32 %v3987, %v4627
        %v4756 = vmul.f32 %v3988, %v4628
        %v4757 = vmul.f32 %v3989, %v4629
        %v4758 = vmul.f32 %v3990, %v4630
        %v4759 = vmul.f32 %v3991, %v4631
        %v4760 = vmul.f32 %v3992, %v4632
        %v4761 = vmul.f32 %v3993, %v4633
        %v4762 = vmul.f32 %v3994, %v4634
        %v4763 = vmul.f32 %v3995, %v4635
        %v4764 = vmul.f32 %v3996, %v4636
        %v4765 = vmul.f32 %v3997, %v4637
        %v4766 = vmul.f32 %v3998, %v4638
        %v4767 = vmul.f32 %v3999, %v4639
        %v4768 = vmul.f32 %v4000, %v4640
        %v4769 = vmul.f32 %v4001, %v4641
        %v4770 = vmul.f32 %v4002, %v4642
        %v4771 = vmul.f32 %v4003, %v4643
        %v4772 = vmul.f32 %v4004, %v4644
        %v4773 = vmul.f32 %v4005, %v4645
        %v4774 = vmul.f32 %v4006, %v4646
        %v4775 = vmul.f32 %v4007, %v4647
        %v4776 = vmul.f32 %v4008, %v4648
        %v4777 = vmul.f32 %v4009, %v4649
        %v4778 = vmul.f32 %v4010, %v4650
        %v4779 = vmul.f32 %v4011, %v4651
        %v4780 = vmul.f32 %v4012, %v4652
        %v4781 = vmul.f32 %v4013, %v4653
        %v4782 = vmul.f32 %v4014, %v4654
        %v4783 = vmul.f32 %v4015, %v4655
        %v4784 = vmul.f32 %v4016, %v4656
        %v4785 = vmul.f32 %v4017, %v4657
        %v4786 = vmul.f32 %v4018, %v4658
        %v4787 = vmul.f32 %v4019, %v4659
        %v4788 = vmul.f32 %v4020, %v4660
        %v4789 = vmul.f32 %v4021, %v4661
        %v4790 = vmul.f32 %v4022, %v4662
        %v4791 = vsub.f32 %v4663, %v4727
        %v4792 = vsub.f32 %v4664, %v4728
        %v4793 = vsub.f32 %v4665, %v4729
        %v4794 = vsub.f32 %v4666, %v4730
        %v4795 = vsub.f32 %v4667, %v4731
        %v4796 = vsub.f32 %v4668, %v4732
        %v4797 = vsub.f32 %v4669, %v4733
        %v4798 = vsub.f32 %v4670, %v4734
        %v4799 = vsub.f32 %v4671, %v4735
        %v4800 = vsub.f32 %v4672, %v4736
        %v4801 = vsub.f32 %v4673, %v4737
        %v4802 = vsub.f32 %v4674, %v4738
        %v4803 = vsub.f32 %v4675, %v4739
        %v4804 = vsub.f32 %v4676, %v4740
        %v4805 = vsub.f32 %v4677, %v4741
        %v4806 = vsub.f32 %v4678, %v4742
        %v4807 = vsub.f32 %v4679, %v4743
        %v4808 = vsub.f32 %v4680, %v4744
        %v4809 = vsub.f32 %v4681, %v4745
        %v4810 = vsub.f32 %v4682, %v4746
        %v4811 = vsub.f32 %v4683, %v4747
        %v4812 = vsub.f32 %v4684, %v4748
        %v4813 = vsub.f32 %v4685, %v4749
        %v4814 = vsub.f32 %v4686, %v4750
        %v4815 = vsub.f32 %v4687, %v4751
        %v4816 = vsub.f32 %v4688, %v4752
        %v4817 = vsub.f32 %v4689, %v4753
        %v4818 = vsub.f32 %v4690, %v4754
        %v4819 = vsub.f32 %v4691, %v4755
        %v4820 = vsub.f32 %v4692, %v4756
        %v4821 = vsub.f32 %v4693, %v4757
        %v4822 = vsub.f32 %v4694, %v4758
        %v4823 = vsub.f32 %v4695, %v4759
        %v4824 = vsub.f32 %v4696, %v4760
        %v4825 = vsub.f32 %v4697, %v4761
        %v4826 = vsub.f32 %v4698, %v4762
        %v4827 = vsub.f32 %v4699, %v4763
        %v4828 = vsub.f32 %v4700, %v4764
        %v4829 = vsub.f32 %v4701, %v4765
        %v4830 = vsub.f32 %v4702, %v4766
        %v4831 = vsub.f32 %v4703, %v4767
        %v4832 = vsub.f32 %v4704, %v4768
        %v4833 = vsub.f32 %v4705, %v4769
        %v4834 = vsub.f32 %v4706, %v4770
        %v4835 = vsub.f32 %v4707, %v4771
        %v4836 = vsub.f32 %v4708, %v4772
        %v4837 = vsub.f32 %v4709, %v4773
        %v4838 = vsub.f32 %v4710, %v4774
        %v4839 = vsub.f32 %v4711, %v4775
        %v4840 = vsub.f32 %v4712, %v4776
        %v4841 = vsub.f32 %v4713, %v4777
        %v4842 = vsub.f32 %v4714, %v4778
        %v4843 = vsub.f32 %v4715, %v4779
        %v4844 = vsub.f32 %v4716, %v4780
        %v4845 = vsub.f32 %v4717, %v4781
        %v4846 = vsub.f32 %v4718, %v4782
        %v4847 = vsub.f32 %v4719, %v4783
        %v4848 = vsub.f32 %v4720, %v4784
        %v4849 = vsub.f32 %v4721, %v4785
        %v4850 = vsub.f32 %v4722, %v4786
        %v4851 = vsub.f32 %v4723, %v4787
        %v4852 = vsub.f32 %v4724, %v4788
        %v4853 = vsub.f32 %v4725, %v4789
        %v4854 = vsub.f32 %v4726, %v4790
        %v4855 = vsub.f32 %v4599, 1.0
        %v4856 = vsub.f32 %v4600, 1.0
        %v4857 = vsub.f32 %v4601, 1.0
        %v4858 = vsub.f32 %v4602, 1.0
        %v4859 = vsub.f32 %v4603, 1.0
        %v4860 = vsub.f32 %v4604, 1.0
        %v4861 = vsub.f32 %v4605, 1.0
        %v4862 = vsub.f32 %v4606, 1.0
        %v4863 = vsub.f32 %v4607, 1.0
        %v4864 = vsub.f32 %v4608, 1.0
        %v4865 = vsub.f32 %v4609, 1.0
        %v4866 = vsub.f32 %v4610, 1.0
        %v4867 = vsub.f32 %v4611, 1.0
        %v4868 = vsub.f32 %v4612, 1.0
        %v4869 = vsub.f32 %v4613, 1.0
        %v4870 = vsub.f32 %v4614, 1.0
        %v4871 = vsub.f32 %v4615, 1.0
        %v4872 = vsub.f32 %v4616, 1.0
        %v4873 = vsub.f32 %v4617, 1.0
        %v4874 = vsub.f32 %v4618, 1.0
        %v4875 = vsub.f32 %v4619, 1.0
        %v4876 = vsub.f32 %v4620, 1.0
        %v4877 = vsub.f32 %v4621, 1.0
        %v4878 = vsub.f32 %v4622, 1.0
        %v4879 = vsub.f32 %v4623, 1.0
        %v4880 = vsub.f32 %v4624, 1.0
        %v4881 = vsub.f32 %v4625, 1.0
        %v4882 = vsub.f32 %v4626, 1.0
        %v4883 = vsub.f32 %v4627, 1.0
        %v4884 = vsub.f32 %v4628, 1.0
        %v4885 = vsub.f32 %v4629, 1.0
        %v4886 = vsub.f32 %v4630, 1.0
        %v4887 = vsub.f32 %v4631, 1.0
        %v4888 = vsub.f32 %v4632, 1.0
        %v4889 = vsub.f32 %v4633, 1.0
        %v4890 = vsub.f32 %v4634, 1.0
        %v4891 = vsub.f32 %v4635, 1.0
        %v4892 = vsub.f32 %v4636, 1.0
        %v4893 = vsub.f32 %v4637, 1.0
        %v4894 = vsub.f32 %v4638, 1.0
        %v4895 = vsub.f32 %v4639, 1.0
        %v4896 = vsub.f32 %v4640, 1.0
        %v4897 = vsub.f32 %v4641, 1.0
        %v4898 = vsub.f32 %v4642, 1.0
        %v4899 = vsub.f32 %v4643, 1.0
        %v4900 = vsub.f32 %v4644, 1.0
        %v4901 = vsub.f32 %v4645, 1.0
        %v4902 = vsub.f32 %v4646, 1.0
        %v4903 = vsub.f32 %v4647, 1.0
        %v4904 = vsub.f32 %v4648, 1.0
        %v4905 = vsub.f32 %v4649, 1.0
        %v4906 = vsub.f32 %v4650, 1.0
        %v4907 = vsub.f32 %v4651, 1.0
        %v4908 = vsub.f32 %v4652, 1.0
        %v4909 = vsub.f32 %v4653, 1.0
        %v4910 = vsub.f32 %v4654, 1.0
        %v4911 = vsub.f32 %v4655, 1.0
        %v4912 = vsub.f32 %v4656, 1.0
        %v4913 = vsub.f32 %v4657, 1.0
        %v4914 = vsub.f32 %v4658, 1.0
        %v4915 = vsub.f32 %v4659, 1.0
        %v4916 = vsub.f32 %v4660, 1.0
        %v4917 = vsub.f32 %v4661, 1.0
        %v4918 = vsub.f32 %v4662, 1.0
        %v4919 = vmul.f32 %v4855, 0.5
        %v4920 = vmul.f32 %v4856, 0.5
        %v4921 = vmul.f32 %v4857, 0.5
        %v4922 = vmul.f32 %v4858, 0.5
        %v4923 = vmul.f32 %v4859, 0.5
        %v4924 = vmul.f32 %v4860, 0.5
        %v4925 = vmul.f32 %v4861, 0.5
        %v4926 = vmul.f32 %v4862, 0.5
        %v4927 = vmul.f32 %v4863, 0.5
        %v4928 = vmul.f32 %v4864, 0.5
        %v4929 = vmul.f32 %v4865, 0.5
        %v4930 = vmul.f32 %v4866, 0.5
        %v4931 = vmul.f32 %v4867, 0.5
        %v4932 = vmul.f32 %v4868, 0.5
        %v4933 = vmul.f32 %v4869, 0.5
        %v4934 = vmul.f32 %v4870, 0.5
        %v4935 = vmul.f32 %v4871, 0.5
        %v4936 = vmul.f32 %v4872, 0.5
        %v4937 = vmul.f32 %v4873, 0.5
        %v4938 = vmul.f32 %v4874, 0.5
        %v4939 = vmul.f32 %v4875, 0.5
        %v4940 = vmul.f32 %v4876, 0.5
        %v4941 = vmul.f32 %v4877, 0.5
        %v4942 = vmul.f32 %v4878, 0.5
        %v4943 = vmul.f32 %v4879, 0.5
        %v4944 = vmul.f32 %v4880, 0.5
        %v4945 = vmul.f32 %v4881, 0.5
        %v4946 = vmul.f32 %v4882, 0.5
        %v4947 = vmul.f32 %v4883, 0.5
        %v4948 = vmul.f32 %v4884, 0.5
        %v4949 = vmul.f32 %v4885, 0.5
        %v4950 = vmul.f32 %v4886, 0.5
        %v4951 = vmul.f32 %v4887, 0.5
        %v4952 = vmul.f32 %v4888, 0.5
        %v4953 = vmul.f32 %v4889, 0.5
        %v4954 = vmul.f32 %v4890, 0.5
        %v4955 = vmul.f32 %v4891, 0.5
        %v4956 = vmul.f32 %v4892, 0.5
        %v4957 = vmul.f32 %v4893, 0.5
        %v4958 = vmul.f32 %v4894, 0.5
        %v4959 = vmul.f32 %v4895, 0.5
        %v4960 = vmul.f32 %v4896, 0.5
        %v4961 = vmul.f32 %v4897, 0.5
        %v4962 = vmul.f32 %v4898, 0.5
        %v4963 = vmul.f32 %v4899, 0.5
        %v4964 = vmul.f32 %v4900, 0.5
        %v4965 = vmul.f32 %v4901, 0.5
        %v4966 = vmul.f32 %v4902, 0.5
        %v4967 = vmul.f32 %v4903, 0.5
        %v4968 = vmul.f32 %v4904, 0.5
        %v4969 = vmul.f32 %v4905, 0.5
        %v4970 = vmul.f32 %v4906, 0.5
        %v4971 = vmul.f32 %v4907, 0.5
        %v4972 = vmul.f32 %v4908, 0.5
        %v4973 = vmul.f32 %v4909, 0.5
        %v4974 = vmul.f32 %v4910, 0.5
        %v4975 = vmul.f32 %v4911, 0.5
        %v4976 = vmul.f32 %v4912, 0.5
        %v4977 = vmul.f32 %v4913, 0.5
        %v4978 = vmul.f32 %v4914, 0.5
        %v4979 = vmul.f32 %v4915, 0.5
        %v4980 = vmul.f32 %v4916, 0.5
        %v4981 = vmul.f32 %v4917, 0.5
        %v4982 = vmul.f32 %v4918, 0.5
        %v4983 = vadd.f32 %v4919, 1.0
        %v4984 = vadd.f32 %v4920, 1.0
        %v4985 = vadd.f32 %v4921, 1.0
        %v4986 = vadd.f32 %v4922, 1.0
        %v4987 = vadd.f32 %v4923, 1.0
        %v4988 = vadd.f32 %v4924, 1.0
        %v4989 = vadd.f32 %v4925, 1.0
        %v4990 = vadd.f32 %v4926, 1.0
        %v4991 = vadd.f32 %v4927, 1.0
        %v4992 = vadd.f32 %v4928, 1.0
        %v4993 = vadd.f32 %v4929, 1.0
        %v4994 = vadd.f32 %v4930, 1.0
        %v4995 = vadd.f32 %v4931, 1.0
        %v4996 = vadd.f32 %v4932, 1.0
        %v4997 = vadd.f32 %v4933, 1.0
        %v4998 = vadd.f32 %v4934, 1.0
        %v4999 = vadd.f32 %v4935, 1.0
        %v5000 = vadd.f32 %v4936, 1.0
        %v5001 = vadd.f32 %v4937, 1.0
        %v5002 = vadd.f32 %v4938, 1.0
        %v5003 = vadd.f32 %v4939, 1.0
        %v5004 = vadd.f32 %v4940, 1.0
        %v5005 = vadd.f32 %v4941, 1.0
        %v5006 = vadd.f32 %v4942, 1.0
        %v5007 = vadd.f32 %v4943, 1.0
        %v5008 = vadd.f32 %v4944, 1.0
        %v5009 = vadd.f32 %v4945, 1.0
        %v5010 = vadd.f32 %v4946, 1.0
        %v5011 = vadd.f32 %v4947, 1.0
        %v5012 = vadd.f32 %v4948, 1.0
        %v5013 = vadd.f32 %v4949, 1.0
        %v5014 = vadd.f32 %v4950, 1.0
        %v5015 = vadd.f32 %v4951, 1.0
        %v5016 = vadd.f32 %v4952, 1.0
        %v5017 = vadd.f32 %v4953, 1.0
        %v5018 = vadd.f32 %v4954, 1.0
        %v5019 = vadd.f32 %v4955, 1.0
        %v5020 = vadd.f32 %v4956, 1.0
        %v5021 = vadd.f32 %v4957, 1.0
        %v5022 = vadd.f32 %v4958, 1.0
        %v5023 = vadd.f32 %v4959, 1.0
        %v5024 = vadd.f32 %v4960, 1.0
        %v5025 = vadd.f32 %v4961, 1.0
        %v5026 = vadd.f32 %v4962, 1.0
        %v5027 = vadd.f32 %v4963, 1.0
        %v5028 = vadd.f32 %v4964, 1.0
        %v5029 = vadd.f32 %v4965, 1.0
        %v5030 = vadd.f32 %v4966, 1.0
        %v5031 = vadd.f32 %v4967, 1.0
        %v5032 = vadd.f32 %v4968, 1.0
        %v5033 = vadd.f32 %v4969, 1.0
        %v5034 = vadd.f32 %v4970, 1.0
        %v5035 = vadd.f32 %v4971, 1.0
        %v5036 = vadd.f32 %v4972, 1.0
        %v5037 = vadd.f32 %v4973, 1.0
        %v5038 = vadd.f32 %v4974, 1.0
        %v5039 = vadd.f32 %v4975, 1.0
        %v5040 = vadd.f32 %v4976, 1.0
        %v5041 = vadd.f32 %v4977, 1.0
        %v5042 = vadd.f32 %v4978, 1.0
        %v5043 = vadd.f32 %v4979, 1.0
        %v5044 = vadd.f32 %v4980, 1.0
        %v5045 = vadd.f32 %v4981, 1.0
        %v5046 = vadd.f32 %v4982, 1.0
        %v5047 = vmul.f32 %v4791, 0.5
        %v5048 = vmul.f32 %v4792, 0.5
        %v5049 = vmul.f32 %v4793, 0.5
        %v5050 = vmul.f32 %v4794, 0.5
        %v5051 = vmul.f32 %v4795, 0.5
        %v5052 = vmul.f32 %v4796, 0.5
        %v5053 = vmul.f32 %v4797, 0.5
        %v5054 = vmul.f32 %v4798, 0.5
        %v5055 = vmul.f32 %v4799, 0.5
        %v5056 = vmul.f32 %v4800, 0.5
        %v5057 = vmul.f32 %v4801, 0.5
        %v5058 = vmul.f32 %v4802, 0.5
        %v5059 = vmul.f32 %v4803, 0.5
        %v5060 = vmul.f32 %v4804, 0.5
        %v5061 = vmul.f32 %v4805, 0.5
        %v5062 = vmul.f32 %v4806, 0.5
        %v5063 = vmul.f32 %v4807, 0.5
        %v5064 = vmul.f32 %v4808, 0.5
        %v5065 = vmul.f32 %v4809, 0.5
        %v5066 = vmul.f32 %v4810, 0.5
        %v5067 = vmul.f32 %v4811, 0.5
        %v5068 = vmul.f32 %v4812, 0.5
        %v5069 = vmul.f32 %v4813, 0.5
        %v5070 = vmul.f32 %v4814, 0.5
        %v5071 = vmul.f32 %v4815, 0.5
        %v5072 = vmul.f32 %v4816, 0.5
        %v5073 = vmul.f32 %v4817, 0.5
        %v5074 = vmul.f32 %v4818, 0.5
        %v5075 = vmul.f32 %v4819, 0.5
        %v5076 = vmul.f32 %v4820, 0.5
        %v5077 = vmul.f32 %v4821, 0.5
        %v5078 = vmul.f32 %v4822, 0.5
        %v5079 = vmul.f32 %v4823, 0.5
        %v5080 = vmul.f32 %v4824, 0.5
        %v5081 = vmul.f32 %v4825, 0.5
        %v5082 = vmul.f32 %v4826, 0.5
        %v5083 = vmul.f32 %v4827, 0.5
        %v5084 = vmul.f32 %v4828, 0.5
        %v5085 = vmul.f32 %v4829, 0.5
        %v5086 = vmul.f32 %v4830, 0.5
        %v5087 = vmul.f32 %v4831, 0.5
        %v5088 = vmul.f32 %v4832, 0.5
        %v5089 = vmul.f32 %v4833, 0.5
        %v5090 = vmul.f32 %v4834, 0.5
        %v5091 = vmul.f32 %v4835, 0.5
        %v5092 = vmul.f32 %v4836, 0.5
        %v5093 = vmul.f32 %v4837, 0.5
        %v5094 = vmul.f32 %v4838, 0.5
        %v5095 = vmul.f32 %v4839, 0.5
        %v5096 = vmul.f32 %v4840, 0.5
        %v5097 = vmul.f32 %v4841, 0.5
        %v5098 = vmul.f32 %v4842, 0.5
        %v5099 = vmul.f32 %v4843, 0.5
        %v5100 = vmul.f32 %v4844, 0.5
        %v5101 = vmul.f32 %v4845, 0.5
        %v5102 = vmul.f32 %v4846, 0.5
        %v5103 = vmul.f32 %v4847, 0.5
        %v5104 = vmul.f32 %v4848, 0.5
        %v5105 = vmul.f32 %v4849, 0.5
        %v5106 = vmul.f32 %v4850, 0.5
        %v5107 = vmul.f32 %v4851, 0.5
        %v5108 = vmul.f32 %v4852, 0.5
        %v5109 = vmul.f32 %v4853, 0.5
        %v5110 = vmul.f32 %v4854, 0.5
        %5112 = vset.pattern.permute.xlu0 0
        %5113 = vperm.xlu0 %5112, %v4983
        %v5114 = vpop.permute.xlu0 %5113
        %5117 = vset.pattern.permute.xlu0 0
        %5118 = vperm.xlu0 %5117, %v4984
        %v5119 = vpop.permute.xlu0 %5118
        %5122 = vset.pattern.permute.xlu0 0
        %5123 = vperm.xlu0 %5122, %v4985
        %v5124 = vpop.permute.xlu0 %5123
        %5127 = vset.pattern.permute.xlu0 0
        %5128 = vperm.xlu0 %5127, %v4986
        %v5129 = vpop.permute.xlu0 %5128
        %5132 = vset.pattern.permute.xlu0 0
        %5133 = vperm.xlu0 %5132, %v4987
        %v5134 = vpop.permute.xlu0 %5133
        %5137 = vset.pattern.permute.xlu0 0
        %5138 = vperm.xlu0 %5137, %v4988
        %v5139 = vpop.permute.xlu0 %5138
        %5142 = vset.pattern.permute.xlu0 0
        %5143 = vperm.xlu0 %5142, %v4989
        %v5144 = vpop.permute.xlu0 %5143
        %5147 = vset.pattern.permute.xlu0 0
        %5148 = vperm.xlu0 %5147, %v4990
        %v5149 = vpop.permute.xlu0 %5148
        %5152 = vset.pattern.permute.xlu0 0
        %5153 = vperm.xlu0 %5152, %v4991
        %v5154 = vpop.permute.xlu0 %5153
        %5157 = vset.pattern.permute.xlu0 0
        %5158 = vperm.xlu0 %5157, %v4992
        %v5159 = vpop.permute.xlu0 %5158
        %5162 = vset.pattern.permute.xlu0 0
        %5163 = vperm.xlu0 %5162, %v4993
        %v5164 = vpop.permute.xlu0 %5163
        %5167 = vset.pattern.permute.xlu0 0
        %5168 = vperm.xlu0 %5167, %v4994
        %v5169 = vpop.permute.xlu0 %5168
        %5172 = vset.pattern.permute.xlu0 0
        %5173 = vperm.xlu0 %5172, %v4995
        %v5174 = vpop.permute.xlu0 %5173
        %5177 = vset.pattern.permute.xlu0 0
        %5178 = vperm.xlu0 %5177, %v4996
        %v5179 = vpop.permute.xlu0 %5178
        %5182 = vset.pattern.permute.xlu0 0
        %5183 = vperm.xlu0 %5182, %v4997
        %v5184 = vpop.permute.xlu0 %5183
        %5187 = vset.pattern.permute.xlu0 0
        %5188 = vperm.xlu0 %5187, %v4998
        %v5189 = vpop.permute.xlu0 %5188
        %5192 = vset.pattern.permute.xlu0 0
        %5193 = vperm.xlu0 %5192, %v4999
        %v5194 = vpop.permute.xlu0 %5193
        %5197 = vset.pattern.permute.xlu0 0
        %5198 = vperm.xlu0 %5197, %v5000
        %v5199 = vpop.permute.xlu0 %5198
        %5202 = vset.pattern.permute.xlu0 0
        %5203 = vperm.xlu0 %5202, %v5001
        %v5204 = vpop.permute.xlu0 %5203
        %5207 = vset.pattern.permute.xlu0 0
        %5208 = vperm.xlu0 %5207, %v5002
        %v5209 = vpop.permute.xlu0 %5208
        %5212 = vset.pattern.permute.xlu0 0
        %5213 = vperm.xlu0 %5212, %v5003
        %v5214 = vpop.permute.xlu0 %5213
        %5217 = vset.pattern.permute.xlu0 0
        %5218 = vperm.xlu0 %5217, %v5004
        %v5219 = vpop.permute.xlu0 %5218
        %5222 = vset.pattern.permute.xlu0 0
        %5223 = vperm.xlu0 %5222, %v5005
        %v5224 = vpop.permute.xlu0 %5223
        %5227 = vset.pattern.permute.xlu0 0
        %5228 = vperm.xlu0 %5227, %v5006
        %v5229 = vpop.permute.xlu0 %5228
        %5232 = vset.pattern.permute.xlu0 0
        %5233 = vperm.xlu0 %5232, %v5007
        %v5234 = vpop.permute.xlu0 %5233
        %5237 = vset.pattern.permute.xlu0 0
        %5238 = vperm.xlu0 %5237, %v5008
        %v5239 = vpop.permute.xlu0 %5238
        %5242 = vset.pattern.permute.xlu0 0
        %5243 = vperm.xlu0 %5242, %v5009
        %v5244 = vpop.permute.xlu0 %5243
        %5247 = vset.pattern.permute.xlu0 0
        %5248 = vperm.xlu0 %5247, %v5010
        %v5249 = vpop.permute.xlu0 %5248
        %5252 = vset.pattern.permute.xlu0 0
        %5253 = vperm.xlu0 %5252, %v5011
        %v5254 = vpop.permute.xlu0 %5253
        %5257 = vset.pattern.permute.xlu0 0
        %5258 = vperm.xlu0 %5257, %v5012
        %v5259 = vpop.permute.xlu0 %5258
        %5262 = vset.pattern.permute.xlu0 0
        %5263 = vperm.xlu0 %5262, %v5013
        %v5264 = vpop.permute.xlu0 %5263
        %5267 = vset.pattern.permute.xlu0 0
        %5268 = vperm.xlu0 %5267, %v5014
        %v5269 = vpop.permute.xlu0 %5268
        %5272 = vset.pattern.permute.xlu0 0
        %5273 = vperm.xlu0 %5272, %v5015
        %v5274 = vpop.permute.xlu0 %5273
        %5277 = vset.pattern.permute.xlu0 0
        %5278 = vperm.xlu0 %5277, %v5016
        %v5279 = vpop.permute.xlu0 %5278
        %5282 = vset.pattern.permute.xlu0 0
        %5283 = vperm.xlu0 %5282, %v5017
        %v5284 = vpop.permute.xlu0 %5283
        %5287 = vset.pattern.permute.xlu0 0
        %5288 = vperm.xlu0 %5287, %v5018
        %v5289 = vpop.permute.xlu0 %5288
        %5292 = vset.pattern.permute.xlu0 0
        %5293 = vperm.xlu0 %5292, %v5019
        %v5294 = vpop.permute.xlu0 %5293
        %5297 = vset.pattern.permute.xlu0 0
        %5298 = vperm.xlu0 %5297, %v5020
        %v5299 = vpop.permute.xlu0 %5298
        %5302 = vset.pattern.permute.xlu0 0
        %5303 = vperm.xlu0 %5302, %v5021
        %v5304 = vpop.permute.xlu0 %5303
        %5307 = vset.pattern.permute.xlu0 0
        %5308 = vperm.xlu0 %5307, %v5022
        %v5309 = vpop.permute.xlu0 %5308
        %5312 = vset.pattern.permute.xlu0 0
        %5313 = vperm.xlu0 %5312, %v5023
        %v5314 = vpop.permute.xlu0 %5313
        %5317 = vset.pattern.permute.xlu0 0
        %5318 = vperm.xlu0 %5317, %v5024
        %v5319 = vpop.permute.xlu0 %5318
        %5322 = vset.pattern.permute.xlu0 0
        %5323 = vperm.xlu0 %5322, %v5025
        %v5324 = vpop.permute.xlu0 %5323
        %5327 = vset.pattern.permute.xlu0 0
        %5328 = vperm.xlu0 %5327, %v5026
        %v5329 = vpop.permute.xlu0 %5328
        %5332 = vset.pattern.permute.xlu0 0
        %5333 = vperm.xlu0 %5332, %v5027
        %v5334 = vpop.permute.xlu0 %5333
        %5337 = vset.pattern.permute.xlu0 0
        %5338 = vperm.xlu0 %5337, %v5028
        %v5339 = vpop.permute.xlu0 %5338
        %5342 = vset.pattern.permute.xlu0 0
        %5343 = vperm.xlu0 %5342, %v5029
        %v5344 = vpop.permute.xlu0 %5343
        %5347 = vset.pattern.permute.xlu0 0
        %5348 = vperm.xlu0 %5347, %v5030
        %v5349 = vpop.permute.xlu0 %5348
        %5352 = vset.pattern.permute.xlu0 0
        %5353 = vperm.xlu0 %5352, %v5031
        %v5354 = vpop.permute.xlu0 %5353
        %5357 = vset.pattern.permute.xlu0 0
        %5358 = vperm.xlu0 %5357, %v5032
        %v5359 = vpop.permute.xlu0 %5358
        %5362 = vset.pattern.permute.xlu0 0
        %5363 = vperm.xlu0 %5362, %v5033
        %v5364 = vpop.permute.xlu0 %5363
        %5367 = vset.pattern.permute.xlu0 0
        %5368 = vperm.xlu0 %5367, %v5034
        %v5369 = vpop.permute.xlu0 %5368
        %5372 = vset.pattern.permute.xlu0 0
        %5373 = vperm.xlu0 %5372, %v5035
        %v5374 = vpop.permute.xlu0 %5373
        %5377 = vset.pattern.permute.xlu0 0
        %5378 = vperm.xlu0 %5377, %v5036
        %v5379 = vpop.permute.xlu0 %5378
        %5382 = vset.pattern.permute.xlu0 0
        %5383 = vperm.xlu0 %5382, %v5037
        %v5384 = vpop.permute.xlu0 %5383
        %5387 = vset.pattern.permute.xlu0 0
        %5388 = vperm.xlu0 %5387, %v5038
        %v5389 = vpop.permute.xlu0 %5388
        %5392 = vset.pattern.permute.xlu0 0
        %5393 = vperm.xlu0 %5392, %v5039
        %v5394 = vpop.permute.xlu0 %5393
        %5397 = vset.pattern.permute.xlu0 0
        %5398 = vperm.xlu0 %5397, %v5040
        %v5399 = vpop.permute.xlu0 %5398
        %5402 = vset.pattern.permute.xlu0 0
        %5403 = vperm.xlu0 %5402, %v5041
        %v5404 = vpop.permute.xlu0 %5403
        %5407 = vset.pattern.permute.xlu0 0
        %5408 = vperm.xlu0 %5407, %v5042
        %v5409 = vpop.permute.xlu0 %5408
        %5412 = vset.pattern.permute.xlu0 0
        %5413 = vperm.xlu0 %5412, %v5043
        %v5414 = vpop.permute.xlu0 %5413
        %5417 = vset.pattern.permute.xlu0 0
        %5418 = vperm.xlu0 %5417, %v5044
        %v5419 = vpop.permute.xlu0 %5418
        %5422 = vset.pattern.permute.xlu0 0
        %5423 = vperm.xlu0 %5422, %v5045
        %v5424 = vpop.permute.xlu0 %5423
        %5427 = vset.pattern.permute.xlu0 0
        %5428 = vperm.xlu0 %5427, %v5046
        %v5429 = vpop.permute.xlu0 %5428
        %v5431 = vmul.f32 %v2862, %v5114
        %v5432 = vmul.f32 %v2863, %v5114
        %v5433 = vmul.f32 %v2864, %v5119
        %v5434 = vmul.f32 %v2865, %v5119
        %v5435 = vmul.f32 %v2866, %v5124
        %v5436 = vmul.f32 %v2867, %v5124
        %v5437 = vmul.f32 %v2868, %v5129
        %v5438 = vmul.f32 %v2869, %v5129
        %v5439 = vmul.f32 %v2870, %v5134
        %v5440 = vmul.f32 %v2871, %v5134
        %v5441 = vmul.f32 %v2872, %v5139
        %v5442 = vmul.f32 %v2873, %v5139
        %v5443 = vmul.f32 %v2874, %v5144
        %v5444 = vmul.f32 %v2875, %v5144
        %v5445 = vmul.f32 %v2876, %v5149
        %v5446 = vmul.f32 %v2877, %v5149
        %v5447 = vmul.f32 %v2878, %v5154
        %v5448 = vmul.f32 %v2879, %v5154
        %v5449 = vmul.f32 %v2880, %v5159
        %v5450 = vmul.f32 %v2881, %v5159
        %v5451 = vmul.f32 %v2882, %v5164
        %v5452 = vmul.f32 %v2883, %v5164
        %v5453 = vmul.f32 %v2884, %v5169
        %v5454 = vmul.f32 %v2885, %v5169
        %v5455 = vmul.f32 %v2886, %v5174
        %v5456 = vmul.f32 %v2887, %v5174
        %v5457 = vmul.f32 %v2888, %v5179
        %v5458 = vmul.f32 %v2889, %v5179
        %v5459 = vmul.f32 %v2890, %v5184
        %v5460 = vmul.f32 %v2891, %v5184
        %v5461 = vmul.f32 %v2892, %v5189
        %v5462 = vmul.f32 %v2893, %v5189
        %v5463 = vmul.f32 %v2894, %v5194
        %v5464 = vmul.f32 %v2895, %v5194
        %v5465 = vmul.f32 %v2896, %v5199
        %v5466 = vmul.f32 %v2897, %v5199
        %v5467 = vmul.f32 %v2898, %v5204
        %v5468 = vmul.f32 %v2899, %v5204
        %v5469 = vmul.f32 %v2900, %v5209
        %v5470 = vmul.f32 %v2901, %v5209
        %v5471 = vmul.f32 %v2902, %v5214
        %v5472 = vmul.f32 %v2903, %v5214
        %v5473 = vmul.f32 %v2904, %v5219
        %v5474 = vmul.f32 %v2905, %v5219
        %v5475 = vmul.f32 %v2906, %v5224
        %v5476 = vmul.f32 %v2907, %v5224
        %v5477 = vmul.f32 %v2908, %v5229
        %v5478 = vmul.f32 %v2909, %v5229
        %v5479 = vmul.f32 %v2910, %v5234
        %v5480 = vmul.f32 %v2911, %v5234
        %v5481 = vmul.f32 %v2912, %v5239
        %v5482 = vmul.f32 %v2913, %v5239
        %v5483 = vmul.f32 %v2914, %v5244
        %v5484 = vmul.f32 %v2915, %v5244
        %v5485 = vmul.f32 %v2916, %v5249
        %v5486 = vmul.f32 %v2917, %v5249
        %v5487 = vmul.f32 %v2918, %v5254
        %v5488 = vmul.f32 %v2919, %v5254
        %v5489 = vmul.f32 %v2920, %v5259
        %v5490 = vmul.f32 %v2921, %v5259
        %v5491 = vmul.f32 %v2922, %v5264
        %v5492 = vmul.f32 %v2923, %v5264
        %v5493 = vmul.f32 %v2924, %v5269
        %v5494 = vmul.f32 %v2925, %v5269
        %v5495 = vmul.f32 %v2926, %v5274
        %v5496 = vmul.f32 %v2927, %v5274
        %v5497 = vmul.f32 %v2928, %v5279
        %v5498 = vmul.f32 %v2929, %v5279
        %v5499 = vmul.f32 %v2930, %v5284
        %v5500 = vmul.f32 %v2931, %v5284
        %v5501 = vmul.f32 %v2932, %v5289
        %v5502 = vmul.f32 %v2933, %v5289
        %v5503 = vmul.f32 %v2934, %v5294
        %v5504 = vmul.f32 %v2935, %v5294
        %v5505 = vmul.f32 %v2936, %v5299
        %v5506 = vmul.f32 %v2937, %v5299
        %v5507 = vmul.f32 %v2938, %v5304
        %v5508 = vmul.f32 %v2939, %v5304
        %v5509 = vmul.f32 %v2940, %v5309
        %v5510 = vmul.f32 %v2941, %v5309
        %v5511 = vmul.f32 %v2942, %v5314
        %v5512 = vmul.f32 %v2943, %v5314
        %v5513 = vmul.f32 %v2944, %v5319
        %v5514 = vmul.f32 %v2945, %v5319
        %v5515 = vmul.f32 %v2946, %v5324
        %v5516 = vmul.f32 %v2947, %v5324
        %v5517 = vmul.f32 %v2948, %v5329
        %v5518 = vmul.f32 %v2949, %v5329
        %v5519 = vmul.f32 %v2950, %v5334
        %v5520 = vmul.f32 %v2951, %v5334
        %v5521 = vmul.f32 %v2952, %v5339
        %v5522 = vmul.f32 %v2953, %v5339
        %v5523 = vmul.f32 %v2954, %v5344
        %v5524 = vmul.f32 %v2955, %v5344
        %v5525 = vmul.f32 %v2956, %v5349
        %v5526 = vmul.f32 %v2957, %v5349
        %v5527 = vmul.f32 %v2958, %v5354
        %v5528 = vmul.f32 %v2959, %v5354
        %v5529 = vmul.f32 %v2960, %v5359
        %v5530 = vmul.f32 %v2961, %v5359
        %v5531 = vmul.f32 %v2962, %v5364
        %v5532 = vmul.f32 %v2963, %v5364
        %v5533 = vmul.f32 %v2964, %v5369
        %v5534 = vmul.f32 %v2965, %v5369
        %v5535 = vmul.f32 %v2966, %v5374
        %v5536 = vmul.f32 %v2967, %v5374
        %v5537 = vmul.f32 %v2968, %v5379
        %v5538 = vmul.f32 %v2969, %v5379
        %v5539 = vmul.f32 %v2970, %v5384
        %v5540 = vmul.f32 %v2971, %v5384
        %v5541 = vmul.f32 %v2972, %v5389
        %v5542 = vmul.f32 %v2973, %v5389
        %v5543 = vmul.f32 %v2974, %v5394
        %v5544 = vmul.f32 %v2975, %v5394
        %v5545 = vmul.f32 %v2976, %v5399
        %v5546 = vmul.f32 %v2977, %v5399
        %v5547 = vmul.f32 %v2978, %v5404
        %v5548 = vmul.f32 %v2979, %v5404
        %v5549 = vmul.f32 %v2980, %v5409
        %v5550 = vmul.f32 %v2981, %v5409
        %v5551 = vmul.f32 %v2982, %v5414
        %v5552 = vmul.f32 %v2983, %v5414
        %v5553 = vmul.f32 %v2984, %v5419
        %v5554 = vmul.f32 %v2985, %v5419
        %v5555 = vmul.f32 %v2986, %v5424
        %v5556 = vmul.f32 %v2987, %v5424
        %v5557 = vmul.f32 %v2988, %v5429
        %v5558 = vmul.f32 %v2989, %v5429
        %5560 = vset.pattern.permute.xlu0 0
        %5561 = vperm.xlu0 %5560, %v5047
        %v5562 = vpop.permute.xlu0 %5561
        %5565 = vset.pattern.permute.xlu0 0
        %5566 = vperm.xlu0 %5565, %v5048
        %v5567 = vpop.permute.xlu0 %5566
        %5570 = vset.pattern.permute.xlu0 0
        %5571 = vperm.xlu0 %5570, %v5049
        %v5572 = vpop.permute.xlu0 %5571
        %5575 = vset.pattern.permute.xlu0 0
        %5576 = vperm.xlu0 %5575, %v5050
        %v5577 = vpop.permute.xlu0 %5576
        %5580 = vset.pattern.permute.xlu0 0
        %5581 = vperm.xlu0 %5580, %v5051
        %v5582 = vpop.permute.xlu0 %5581
        %5585 = vset.pattern.permute.xlu0 0
        %5586 = vperm.xlu0 %5585, %v5052
        %v5587 = vpop.permute.xlu0 %5586
        %5590 = vset.pattern.permute.xlu0 0
        %5591 = vperm.xlu0 %5590, %v5053
        %v5592 = vpop.permute.xlu0 %5591
        %5595 = vset.pattern.permute.xlu0 0
        %5596 = vperm.xlu0 %5595, %v5054
        %v5597 = vpop.permute.xlu0 %5596
        %5600 = vset.pattern.permute.xlu0 0
        %5601 = vperm.xlu0 %5600, %v5055
        %v5602 = vpop.permute.xlu0 %5601
        %5605 = vset.pattern.permute.xlu0 0
        %5606 = vperm.xlu0 %5605, %v5056
        %v5607 = vpop.permute.xlu0 %5606
        %5610 = vset.pattern.permute.xlu0 0
        %5611 = vperm.xlu0 %5610, %v5057
        %v5612 = vpop.permute.xlu0 %5611
        %5615 = vset.pattern.permute.xlu0 0
        %5616 = vperm.xlu0 %5615, %v5058
        %v5617 = vpop.permute.xlu0 %5616
        %5620 = vset.pattern.permute.xlu0 0
        %5621 = vperm.xlu0 %5620, %v5059
        %v5622 = vpop.permute.xlu0 %5621
        %5625 = vset.pattern.permute.xlu0 0
        %5626 = vperm.xlu0 %5625, %v5060
        %v5627 = vpop.permute.xlu0 %5626
        %5630 = vset.pattern.permute.xlu0 0
        %5631 = vperm.xlu0 %5630, %v5061
        %v5632 = vpop.permute.xlu0 %5631
        %5635 = vset.pattern.permute.xlu0 0
        %5636 = vperm.xlu0 %5635, %v5062
        %v5637 = vpop.permute.xlu0 %5636
        %5640 = vset.pattern.permute.xlu0 0
        %5641 = vperm.xlu0 %5640, %v5063
        %v5642 = vpop.permute.xlu0 %5641
        %5645 = vset.pattern.permute.xlu0 0
        %5646 = vperm.xlu0 %5645, %v5064
        %v5647 = vpop.permute.xlu0 %5646
        %5650 = vset.pattern.permute.xlu0 0
        %5651 = vperm.xlu0 %5650, %v5065
        %v5652 = vpop.permute.xlu0 %5651
        %5655 = vset.pattern.permute.xlu0 0
        %5656 = vperm.xlu0 %5655, %v5066
        %v5657 = vpop.permute.xlu0 %5656
        %5660 = vset.pattern.permute.xlu0 0
        %5661 = vperm.xlu0 %5660, %v5067
        %v5662 = vpop.permute.xlu0 %5661
        %5665 = vset.pattern.permute.xlu0 0
        %5666 = vperm.xlu0 %5665, %v5068
        %v5667 = vpop.permute.xlu0 %5666
        %5670 = vset.pattern.permute.xlu0 0
        %5671 = vperm.xlu0 %5670, %v5069
        %v5672 = vpop.permute.xlu0 %5671
        %5675 = vset.pattern.permute.xlu0 0
        %5676 = vperm.xlu0 %5675, %v5070
        %v5677 = vpop.permute.xlu0 %5676
        %5680 = vset.pattern.permute.xlu0 0
        %5681 = vperm.xlu0 %5680, %v5071
        %v5682 = vpop.permute.xlu0 %5681
        %5685 = vset.pattern.permute.xlu0 0
        %5686 = vperm.xlu0 %5685, %v5072
        %v5687 = vpop.permute.xlu0 %5686
        %5690 = vset.pattern.permute.xlu0 0
        %5691 = vperm.xlu0 %5690, %v5073
        %v5692 = vpop.permute.xlu0 %5691
        %5695 = vset.pattern.permute.xlu0 0
        %5696 = vperm.xlu0 %5695, %v5074
        %v5697 = vpop.permute.xlu0 %5696
        %5700 = vset.pattern.permute.xlu0 0
        %5701 = vperm.xlu0 %5700, %v5075
        %v5702 = vpop.permute.xlu0 %5701
        %5705 = vset.pattern.permute.xlu0 0
        %5706 = vperm.xlu0 %5705, %v5076
        %v5707 = vpop.permute.xlu0 %5706
        %5710 = vset.pattern.permute.xlu0 0
        %5711 = vperm.xlu0 %5710, %v5077
        %v5712 = vpop.permute.xlu0 %5711
        %5715 = vset.pattern.permute.xlu0 0
        %5716 = vperm.xlu0 %5715, %v5078
        %v5717 = vpop.permute.xlu0 %5716
        %5720 = vset.pattern.permute.xlu0 0
        %5721 = vperm.xlu0 %5720, %v5079
        %v5722 = vpop.permute.xlu0 %5721
        %5725 = vset.pattern.permute.xlu0 0
        %5726 = vperm.xlu0 %5725, %v5080
        %v5727 = vpop.permute.xlu0 %5726
        %5730 = vset.pattern.permute.xlu0 0
        %5731 = vperm.xlu0 %5730, %v5081
        %v5732 = vpop.permute.xlu0 %5731
        %5735 = vset.pattern.permute.xlu0 0
        %5736 = vperm.xlu0 %5735, %v5082
        %v5737 = vpop.permute.xlu0 %5736
        %5740 = vset.pattern.permute.xlu0 0
        %5741 = vperm.xlu0 %5740, %v5083
        %v5742 = vpop.permute.xlu0 %5741
        %5745 = vset.pattern.permute.xlu0 0
        %5746 = vperm.xlu0 %5745, %v5084
        %v5747 = vpop.permute.xlu0 %5746
        %5750 = vset.pattern.permute.xlu0 0
        %5751 = vperm.xlu0 %5750, %v5085
        %v5752 = vpop.permute.xlu0 %5751
        %5755 = vset.pattern.permute.xlu0 0
        %5756 = vperm.xlu0 %5755, %v5086
        %v5757 = vpop.permute.xlu0 %5756
        %5760 = vset.pattern.permute.xlu0 0
        %5761 = vperm.xlu0 %5760, %v5087
        %v5762 = vpop.permute.xlu0 %5761
        %5765 = vset.pattern.permute.xlu0 0
        %5766 = vperm.xlu0 %5765, %v5088
        %v5767 = vpop.permute.xlu0 %5766
        %5770 = vset.pattern.permute.xlu0 0
        %5771 = vperm.xlu0 %5770, %v5089
        %v5772 = vpop.permute.xlu0 %5771
        %5775 = vset.pattern.permute.xlu0 0
        %5776 = vperm.xlu0 %5775, %v5090
        %v5777 = vpop.permute.xlu0 %5776
        %5780 = vset.pattern.permute.xlu0 0
        %5781 = vperm.xlu0 %5780, %v5091
        %v5782 = vpop.permute.xlu0 %5781
        %5785 = vset.pattern.permute.xlu0 0
        %5786 = vperm.xlu0 %5785, %v5092
        %v5787 = vpop.permute.xlu0 %5786
        %5790 = vset.pattern.permute.xlu0 0
        %5791 = vperm.xlu0 %5790, %v5093
        %v5792 = vpop.permute.xlu0 %5791
        %5795 = vset.pattern.permute.xlu0 0
        %5796 = vperm.xlu0 %5795, %v5094
        %v5797 = vpop.permute.xlu0 %5796
        %5800 = vset.pattern.permute.xlu0 0
        %5801 = vperm.xlu0 %5800, %v5095
        %v5802 = vpop.permute.xlu0 %5801
        %5805 = vset.pattern.permute.xlu0 0
        %5806 = vperm.xlu0 %5805, %v5096
        %v5807 = vpop.permute.xlu0 %5806
        %5810 = vset.pattern.permute.xlu0 0
        %5811 = vperm.xlu0 %5810, %v5097
        %v5812 = vpop.permute.xlu0 %5811
        %5815 = vset.pattern.permute.xlu0 0
        %5816 = vperm.xlu0 %5815, %v5098
        %v5817 = vpop.permute.xlu0 %5816
        %5820 = vset.pattern.permute.xlu0 0
        %5821 = vperm.xlu0 %5820, %v5099
        %v5822 = vpop.permute.xlu0 %5821
        %5825 = vset.pattern.permute.xlu0 0
        %5826 = vperm.xlu0 %5825, %v5100
        %v5827 = vpop.permute.xlu0 %5826
        %5830 = vset.pattern.permute.xlu0 0
        %5831 = vperm.xlu0 %5830, %v5101
        %v5832 = vpop.permute.xlu0 %5831
        %5835 = vset.pattern.permute.xlu0 0
        %5836 = vperm.xlu0 %5835, %v5102
        %v5837 = vpop.permute.xlu0 %5836
        %5840 = vset.pattern.permute.xlu0 0
        %5841 = vperm.xlu0 %5840, %v5103
        %v5842 = vpop.permute.xlu0 %5841
        %5845 = vset.pattern.permute.xlu0 0
        %5846 = vperm.xlu0 %5845, %v5104
        %v5847 = vpop.permute.xlu0 %5846
        %5850 = vset.pattern.permute.xlu0 0
        %5851 = vperm.xlu0 %5850, %v5105
        %v5852 = vpop.permute.xlu0 %5851
        %5855 = vset.pattern.permute.xlu0 0
        %5856 = vperm.xlu0 %5855, %v5106
        %v5857 = vpop.permute.xlu0 %5856
        %5860 = vset.pattern.permute.xlu0 0
        %5861 = vperm.xlu0 %5860, %v5107
        %v5862 = vpop.permute.xlu0 %5861
        %5865 = vset.pattern.permute.xlu0 0
        %5866 = vperm.xlu0 %5865, %v5108
        %v5867 = vpop.permute.xlu0 %5866
        %5870 = vset.pattern.permute.xlu0 0
        %5871 = vperm.xlu0 %5870, %v5109
        %v5872 = vpop.permute.xlu0 %5871
        %5875 = vset.pattern.permute.xlu0 0
        %5876 = vperm.xlu0 %5875, %v5110
        %v5877 = vpop.permute.xlu0 %5876
        %v5879 = vadd.f32 %v5431, %v5562
        %v5880 = vadd.f32 %v5432, %v5562
        %v5881 = vadd.f32 %v5433, %v5567
        %v5882 = vadd.f32 %v5434, %v5567
        %v5883 = vadd.f32 %v5435, %v5572
        %v5884 = vadd.f32 %v5436, %v5572
        %v5885 = vadd.f32 %v5437, %v5577
        %v5886 = vadd.f32 %v5438, %v5577
        %v5887 = vadd.f32 %v5439, %v5582
        %v5888 = vadd.f32 %v5440, %v5582
        %v5889 = vadd.f32 %v5441, %v5587
        %v5890 = vadd.f32 %v5442, %v5587
        %v5891 = vadd.f32 %v5443, %v5592
        %v5892 = vadd.f32 %v5444, %v5592
        %v5893 = vadd.f32 %v5445, %v5597
        %v5894 = vadd.f32 %v5446, %v5597
        %v5895 = vadd.f32 %v5447, %v5602
        %v5896 = vadd.f32 %v5448, %v5602
        %v5897 = vadd.f32 %v5449, %v5607
        %v5898 = vadd.f32 %v5450, %v5607
        %v5899 = vadd.f32 %v5451, %v5612
        %v5900 = vadd.f32 %v5452, %v5612
        %v5901 = vadd.f32 %v5453, %v5617
        %v5902 = vadd.f32 %v5454, %v5617
        %v5903 = vadd.f32 %v5455, %v5622
        %v5904 = vadd.f32 %v5456, %v5622
        %v5905 = vadd.f32 %v5457, %v5627
        %v5906 = vadd.f32 %v5458, %v5627
        %v5907 = vadd.f32 %v5459, %v5632
        %v5908 = vadd.f32 %v5460, %v5632
        %v5909 = vadd.f32 %v5461, %v5637
        %v5910 = vadd.f32 %v5462, %v5637
        %v5911 = vadd.f32 %v5463, %v5642
        %v5912 = vadd.f32 %v5464, %v5642
        %v5913 = vadd.f32 %v5465, %v5647
        %v5914 = vadd.f32 %v5466, %v5647
        %v5915 = vadd.f32 %v5467, %v5652
        %v5916 = vadd.f32 %v5468, %v5652
        %v5917 = vadd.f32 %v5469, %v5657
        %v5918 = vadd.f32 %v5470, %v5657
        %v5919 = vadd.f32 %v5471, %v5662
        %v5920 = vadd.f32 %v5472, %v5662
        %v5921 = vadd.f32 %v5473, %v5667
        %v5922 = vadd.f32 %v5474, %v5667
        %v5923 = vadd.f32 %v5475, %v5672
        %v5924 = vadd.f32 %v5476, %v5672
        %v5925 = vadd.f32 %v5477, %v5677
        %v5926 = vadd.f32 %v5478, %v5677
        %v5927 = vadd.f32 %v5479, %v5682
        %v5928 = vadd.f32 %v5480, %v5682
        %v5929 = vadd.f32 %v5481, %v5687
        %v5930 = vadd.f32 %v5482, %v5687
        %v5931 = vadd.f32 %v5483, %v5692
        %v5932 = vadd.f32 %v5484, %v5692
        %v5933 = vadd.f32 %v5485, %v5697
        %v5934 = vadd.f32 %v5486, %v5697
        %v5935 = vadd.f32 %v5487, %v5702
        %v5936 = vadd.f32 %v5488, %v5702
        %v5937 = vadd.f32 %v5489, %v5707
        %v5938 = vadd.f32 %v5490, %v5707
        %v5939 = vadd.f32 %v5491, %v5712
        %v5940 = vadd.f32 %v5492, %v5712
        %v5941 = vadd.f32 %v5493, %v5717
        %v5942 = vadd.f32 %v5494, %v5717
        %v5943 = vadd.f32 %v5495, %v5722
        %v5944 = vadd.f32 %v5496, %v5722
        %v5945 = vadd.f32 %v5497, %v5727
        %v5946 = vadd.f32 %v5498, %v5727
        %v5947 = vadd.f32 %v5499, %v5732
        %v5948 = vadd.f32 %v5500, %v5732
        %v5949 = vadd.f32 %v5501, %v5737
        %v5950 = vadd.f32 %v5502, %v5737
        %v5951 = vadd.f32 %v5503, %v5742
        %v5952 = vadd.f32 %v5504, %v5742
        %v5953 = vadd.f32 %v5505, %v5747
        %v5954 = vadd.f32 %v5506, %v5747
        %v5955 = vadd.f32 %v5507, %v5752
        %v5956 = vadd.f32 %v5508, %v5752
        %v5957 = vadd.f32 %v5509, %v5757
        %v5958 = vadd.f32 %v5510, %v5757
        %v5959 = vadd.f32 %v5511, %v5762
        %v5960 = vadd.f32 %v5512, %v5762
        %v5961 = vadd.f32 %v5513, %v5767
        %v5962 = vadd.f32 %v5514, %v5767
        %v5963 = vadd.f32 %v5515, %v5772
        %v5964 = vadd.f32 %v5516, %v5772
        %v5965 = vadd.f32 %v5517, %v5777
        %v5966 = vadd.f32 %v5518, %v5777
        %v5967 = vadd.f32 %v5519, %v5782
        %v5968 = vadd.f32 %v5520, %v5782
        %v5969 = vadd.f32 %v5521, %v5787
        %v5970 = vadd.f32 %v5522, %v5787
        %v5971 = vadd.f32 %v5523, %v5792
        %v5972 = vadd.f32 %v5524, %v5792
        %v5973 = vadd.f32 %v5525, %v5797
        %v5974 = vadd.f32 %v5526, %v5797
        %v5975 = vadd.f32 %v5527, %v5802
        %v5976 = vadd.f32 %v5528, %v5802
        %v5977 = vadd.f32 %v5529, %v5807
        %v5978 = vadd.f32 %v5530, %v5807
        %v5979 = vadd.f32 %v5531, %v5812
        %v5980 = vadd.f32 %v5532, %v5812
        %v5981 = vadd.f32 %v5533, %v5817
        %v5982 = vadd.f32 %v5534, %v5817
        %v5983 = vadd.f32 %v5535, %v5822
        %v5984 = vadd.f32 %v5536, %v5822
        %v5985 = vadd.f32 %v5537, %v5827
        %v5986 = vadd.f32 %v5538, %v5827
        %v5987 = vadd.f32 %v5539, %v5832
        %v5988 = vadd.f32 %v5540, %v5832
        %v5989 = vadd.f32 %v5541, %v5837
        %v5990 = vadd.f32 %v5542, %v5837
        %v5991 = vadd.f32 %v5543, %v5842
        %v5992 = vadd.f32 %v5544, %v5842
        %v5993 = vadd.f32 %v5545, %v5847
        %v5994 = vadd.f32 %v5546, %v5847
        %v5995 = vadd.f32 %v5547, %v5852
        %v5996 = vadd.f32 %v5548, %v5852
        %v5997 = vadd.f32 %v5549, %v5857
        %v5998 = vadd.f32 %v5550, %v5857
        %v5999 = vadd.f32 %v5551, %v5862
        %v6000 = vadd.f32 %v5552, %v5862
        %v6001 = vadd.f32 %v5553, %v5867
        %v6002 = vadd.f32 %v5554, %v5867
        %v6003 = vadd.f32 %v5555, %v5872
        %v6004 = vadd.f32 %v5556, %v5872
        %v6005 = vadd.f32 %v5557, %v5877
        %v6006 = vadd.f32 %v5558, %v5877
        %v6007 = vld [vmem:[%s5] sm:$0xff]
        %v6008 = vld [vmem:[%s5 + $0x8] sm:$0xff]
        %v6009 = vld [vmem:[%s5 + $0x10] sm:$0xff]
        %v6010 = vld [vmem:[%s5 + $0x18] sm:$0xff]
        %v6011 = vld [vmem:[%s6] sm:$0xff]
        %6013 = vset.pattern.permute.xlu0 0
        %6014 = vperm.xlu0 %6013, %v6011
        %v6015 = vpop.permute.xlu0 %6014
        %6017 = vmatprep.subr.mxu0 %v5880
        %6018 = vmatpush1.msra.mxu0 %v5879
        %6019 = vmatprep.subr.mxu0 %v5882
        %6020 = vmatpush1.msra.mxu0 %v5881
        %6021 = vmatprep.subr.mxu0 %v5884
        %6022 = vmatpush1.msra.mxu0 %v5883
        %6023 = vmatprep.subr.mxu0 %v5886
        %6024 = vmatpush1.msra.mxu0 %v5885
        %6025 = vmatprep.subr.mxu0 %v5888
        %6026 = vmatpush1.msra.mxu0 %v5887
        %6027 = vmatprep.subr.mxu0 %v5890
        %6028 = vmatpush1.msra.mxu0 %v5889
        %6029 = vmatprep.subr.mxu0 %v5892
        %6030 = vmatpush1.msra.mxu0 %v5891
        %6031 = vmatprep.subr.mxu0 %v5894
        %6032 = vmatpush1.msra.mxu0 %v5893
        %6033 = vmatprep.subr.mxu0 %v5896
        %6034 = vmatpush1.msra.mxu0 %v5895
        %6035 = vmatprep.subr.mxu0 %v5898
        %6036 = vmatpush1.msra.mxu0 %v5897
        %6037 = vmatprep.subr.mxu0 %v5900
        %6038 = vmatpush1.msra.mxu0 %v5899
        %6039 = vmatprep.subr.mxu0 %v5902
        %6040 = vmatpush1.msra.mxu0 %v5901
        %6041 = vmatprep.subr.mxu0 %v5904
        %6042 = vmatpush1.msra.mxu0 %v5903
        %6043 = vmatprep.subr.mxu0 %v5906
        %6044 = vmatpush1.msra.mxu0 %v5905
        %6045 = vmatprep.subr.mxu0 %v5908
        %6046 = vmatpush1.msra.mxu0 %v5907
        %6047 = vmatprep.subr.mxu0 %v5910
        %6048 = vmatpush1.msra.mxu0 %v5909
        %6049 = vmatprep.subr.mxu0 %v5912
        %6050 = vmatpush1.msra.mxu0 %v5911
        %6051 = vmatprep.subr.mxu0 %v5914
        %6052 = vmatpush1.msra.mxu0 %v5913
        %6053 = vmatprep.subr.mxu0 %v5916
        %6054 = vmatpush1.msra.mxu0 %v5915
        %6055 = vmatprep.subr.mxu0 %v5918
        %6056 = vmatpush1.msra.mxu0 %v5917
        %6057 = vmatprep.subr.mxu0 %v5920
        %6058 = vmatpush1.msra.mxu0 %v5919
        %6059 = vmatprep.subr.mxu0 %v5922
        %6060 = vmatpush1.msra.mxu0 %v5921
        %6061 = vmatprep.subr.mxu0 %v5924
        %6062 = vmatpush1.msra.mxu0 %v5923
        %6063 = vmatprep.subr.mxu0 %v5926
        %6064 = vmatpush1.msra.mxu0 %v5925
        %6065 = vmatprep.subr.mxu0 %v5928
        %6066 = vmatpush1.msra.mxu0 %v5927
        %6067 = vmatprep.subr.mxu0 %v5930
        %6068 = vmatpush1.msra.mxu0 %v5929
        %6069 = vmatprep.subr.mxu0 %v5932
        %6070 = vmatpush1.msra.mxu0 %v5931
        %6071 = vmatprep.subr.mxu0 %v5934
        %6072 = vmatpush1.msra.mxu0 %v5933
        %6073 = vmatprep.subr.mxu0 %v5936
        %6074 = vmatpush1.msra.mxu0 %v5935
        %6075 = vmatprep.subr.mxu0 %v5938
        %6076 = vmatpush1.msra.mxu0 %v5937
        %6077 = vmatprep.subr.mxu0 %v5940
        %6078 = vmatpush1.msra.mxu0 %v5939
        %6079 = vmatprep.subr.mxu0 %v5942
        %6080 = vmatpush1.msra.mxu0 %v5941
        %6081 = vmatprep.mubr.f32.mxu0 %v6008
        %6082 = vmatmul.mubr.f32.gmra.mrb[0].mxu0 %v6007
        %v6083 = vpop.f32.mrb[0].mxu0
        %v6084 = vadd.f32 %v6015, %v6083
        %v6085 = vpop.f32.mrb[0].mxu0
        %v6086 = vadd.f32 %v6015, %v6085
        %6087 = vdwg.mxu0
        %6088 = vmatprep.subr.mxu0 %v5944
        %6089 = vmatpush1.msra.mxu0 %v5943
        %6090 = vmatprep.subr.mxu0 %v5946
        %6091 = vmatpush1.msra.mxu0 %v5945
        %6092 = vmatprep.subr.mxu0 %v5948
        %6093 = vmatpush1.msra.mxu0 %v5947
        %6094 = vmatprep.subr.mxu0 %v5950
        %6095 = vmatpush1.msra.mxu0 %v5949
        %6096 = vmatprep.subr.mxu0 %v5952
        %6097 = vmatpush1.msra.mxu0 %v5951
        %6098 = vmatprep.subr.mxu0 %v5954
        %6099 = vmatpush1.msra.mxu0 %v5953
        %6100 = vmatprep.subr.mxu0 %v5956
        %6101 = vmatpush1.msra.mxu0 %v5955
        %6102 = vmatprep.subr.mxu0 %v5958
        %6103 = vmatpush1.msra.mxu0 %v5957
        %6104 = vmatprep.subr.mxu0 %v5960
        %6105 = vmatpush1.msra.mxu0 %v5959
        %6106 = vmatprep.subr.mxu0 %v5962
        %6107 = vmatpush1.msra.mxu0 %v5961
        %6108 = vmatprep.subr.mxu0 %v5964
        %6109 = vmatpush1.msra.mxu0 %v5963
        %6110 = vmatprep.subr.mxu0 %v5966
        %6111 = vmatpush1.msra.mxu0 %v5965
        %6112 = vmatprep.subr.mxu0 %v5968
        %6113 = vmatpush1.msra.mxu0 %v5967
        %6114 = vmatprep.subr.mxu0 %v5970
        %6115 = vmatpush1.msra.mxu0 %v5969
        %6116 = vmatprep.subr.mxu0 %v5972
        %6117 = vmatpush1.msra.mxu0 %v5971
        %6118 = vmatprep.subr.mxu0 %v5974
        %6119 = vmatpush1.msra.mxu0 %v5973
        %6120 = vmatprep.subr.mxu0 %v5976
        %6121 = vmatpush1.msra.mxu0 %v5975
        %6122 = vmatprep.subr.mxu0 %v5978
        %6123 = vmatpush1.msra.mxu0 %v5977
        %6124 = vmatprep.subr.mxu0 %v5980
        %6125 = vmatpush1.msra.mxu0 %v5979
        %6126 = vmatprep.subr.mxu0 %v5982
        %6127 = vmatpush1.msra.mxu0 %v5981
        %6128 = vmatprep.subr.mxu0 %v5984
        %6129 = vmatpush1.msra.mxu0 %v5983
        %6130 = vmatprep.subr.mxu0 %v5986
        %6131 = vmatpush1.msra.mxu0 %v5985
        %6132 = vmatprep.subr.mxu0 %v5988
        %6133 = vmatpush1.msra.mxu0 %v5987
        %6134 = vmatprep.subr.mxu0 %v5990
        %6135 = vmatpush1.msra.mxu0 %v5989
        %6136 = vmatprep.subr.mxu0 %v5992
        %6137 = vmatpush1.msra.mxu0 %v5991
        %6138 = vmatprep.subr.mxu0 %v5994
        %6139 = vmatpush1.msra.mxu0 %v5993
        %6140 = vmatprep.subr.mxu0 %v5996
        %6141 = vmatpush1.msra.mxu0 %v5995
        %6142 = vmatprep.subr.mxu0 %v5998
        %6143 = vmatpush1.msra.mxu0 %v5997
        %6144 = vmatprep.subr.mxu0 %v6000
        %6145 = vmatpush1.msra.mxu0 %v5999
        %6146 = vmatprep.subr.mxu0 %v6002
        %6147 = vmatpush1.msra.mxu0 %v6001
        %6148 = vmatprep.subr.mxu0 %v6004
        %6149 = vmatpush1.msra.mxu0 %v6003
        %6150 = vmatprep.subr.mxu0 %v6006
        %6151 = vmatpush1.msra.mxu0 %v6005
        %6152 = vmatprep.mubr.f32.mxu0 %v6010
        %6153 = vmatmul.mubr.f32.gmra.mrb[0].mxu0 %v6009
        %v6154 = vpop.f32.mrb[0].mxu0
        %v6155 = vadd.f32 %v6084, %v6154
        %v6156 = vpop.f32.mrb[0].mxu0
        %v6157 = vadd.f32 %v6086, %v6156
        %6158 = vdwg.mxu0
        %v6161 = vcombine.low %v6155, %v6157
        %6163 = vst [vmem:[%s363] sm:$0x77] %v6161
      $region60: #{tpu_custom_call.1} parent=47 // pred_fallthru
        _
      %s6164 = smul.u32 2, %s25
      %p6165 = scmp.lt.s32.totalorder %s23, 1
      %s6166 = scalar_select %p6165, %s23, 1
      %p6167 = scmp.lt.s32.totalorder %s6164, 1
      %s6168 = scalar_select %p6167, %s6164, 1
      %s6169 = smul.addr %s6166, 2
      %s6170 = sadd.s32 %s6168, %s6169
      %s6171 = smul.addr %s6170, 4
      %s6172 = scalar_lea.vmem %s7, %s6171
      // Predicated region
      $region61: #{tpu_custom_call.1} parent=47 // pred_check
        %p6173 = pneg %p221
      $region62: #{tpu_custom_call.1} parent=47 // pred_check_branch
        %6175 = sbr.rel (%p6173) target = $region64
      $region63: #{tpu_custom_call.1} parent=47 // pred_region
        %s6176 = smul.u32 2, %s25
      $region64: #{tpu_custom_call.1} parent=47 // pred_fallthru
        _
    $region48: #{tpu_custom_call.1} parent=5 // pred_fallthru
      _
    %p6177 = scmp.le.s32.totalorder 2, %s13
    // Predicated region
    $region65: #{tpu_custom_call.1} parent=5 // pred_check
      %p6178 = pneg %p6177
    $region66: #{tpu_custom_call.1} parent=5 // pred_check_branch
      %6180 = sbr.rel (%p6178) target = $region68
    $region67: #{tpu_custom_call.1} parent=5 // pred_region
      %s6181 = ssub.s32 %s13, 2
      // Predicated region
      $region69: #{tpu_custom_call.1} parent=67 // pred_check
        %p6182 = pneg %p227
      $region70: #{tpu_custom_call.1} parent=67 // pred_check_branch
        %6184 = sbr.rel (%p6182) target = $region72
      $region71: #{tpu_custom_call.1} parent=67 // pred_region
        %s6185 = smul.u32 2, %s28
        %p6186 = scmp.lt.s32.totalorder %s26, 1
        %s6187 = scalar_select %p6186, %s26, 1
        %p6188 = scmp.lt.s32.totalorder %s6185, 1
        %s6189 = scalar_select %p6188, %s6185, 1
        %s6190 = smul.addr %s6187, 2
        %s6191 = sadd.s32 %s6189, %s6190
        %s6192 = smul.addr %s6191, 4
        %s6193 = scalar_lea.vmem %s7, %s6192
      $region72: #{tpu_custom_call.1} parent=67 // pred_fallthru
        _
    $region68: #{tpu_custom_call.1} parent=5 // pred_fallthru
      _
  $region6: #{tpu_custom_call.1} parent=0 // loop_footer
    %s17 = sadd.s32 1, %s13
  $region7: #{tpu_custom_call.1} parent=0 // loop_footer_branch
    %12 = sbr.rel target = $region3
  $region8: #{tpu_custom_call.1} parent=0 // loop_exit
    _

</llo_original>
